<compile_context>
chip_gen: v7x
topology: tpu7x:2x2x1
jax: 0.10.0
libtpu: 0.0.40
codegen_flags: <defaults>
</compile_context>

<pallas_src>
import jax
import jax.numpy as jnp
import numpy as np
from jax import lax
from jax.experimental import pallas as pl
from jax.experimental.pallas import tpu as pltpu

LANE = 128
SUBLANE = 8


def _round_up(x, m):
    return (x + m - 1) // m * m


def _nbytes(a):
    return int(a.size) * a.dtype.itemsize


# ----------------------------------------------------------------------------
# Fused SkipRec kernel: all residual blocks + (V-tiled) final linear.
# grid = (batch_tiles, vocab_tiles); the layer stack runs only at v-tile 0 and
# the (TB, max_pad+L, C_pad) activation scratch is reused for all v tiles.
# ----------------------------------------------------------------------------
def make_skiprec_kernel(Lp, C, C_pad, KC, TV, K, dilations, max_pad, TB):
    eps = 1e-8
    NL = len(dilations)
    inv_c = 1.0 / C
    M = TB * Lp

    def kernel(gate_sref, act_sref, rez_sref,             # SMEM (scalar prefetch)
               x_ref, w1_ref, b1_ref, g1_ref, be1_ref,
               w2_ref, b2_ref, g2_ref, be2_ref,
               wf_ref, bf_ref,                            # VMEM inputs
               o_ref,                                     # VMEM output (TB,Lp,TV)
               buf):                                      # scratch (TB,max_pad+Lp,C_pad)
        b = pl.program_id(0)

        def causal_conv(w_stacked, bias, d):
            # y[t] = bias + sum_j x[t-(K-1-j)*d] @ W_j folded into ONE wide
            # (M, KC) @ (KC, C_pad) bf16 MXU matmul; taps are static slices of
            # the zero-padded scratch (lane-aligned concat).
            taps = [buf[:, max_pad - (K - 1 - j) * d:
                          max_pad - (K - 1 - j) * d + Lp, :] for j in range(K)]
            xc = jnp.concatenate(taps, axis=-1)           # (TB, Lp, KC)
            xc = xc.reshape(M, KC).astype(jnp.bfloat16)
            y = jnp.dot(xc, w_stacked, preferred_element_type=jnp.float32)
            return y.reshape(TB, Lp, C_pad) + bias

        def ln_relu(h, g, bb):
            # LayerNorm over the C real lanes (pad lanes of h are exactly 0,
            # gamma/beta are zero-padded, so no lane mask is needed) + ReLU.
            mu = jnp.sum(h, axis=-1, keepdims=True) * inv_c
            ex2 = jnp.sum(h * h, axis=-1, keepdims=True) * inv_c
            var = ex2 - mu * mu
            return jnp.maximum((h - mu) * lax.rsqrt(var + eps) * g + bb, 0.0)

        @pl.when(pl.program_id(1) == 0)
        def _run_layers():
            # Zero the causal-padding rows once per batch tile (megacore-safe:
            # every core hits v==0 for each of its batch tiles).
            buf[:, 0:max_pad, :] = jnp.zeros((TB, max_pad, C_pad), jnp.float32)
            buf[:, max_pad:max_pad + Lp, :] = x_ref[...]

            for lid in range(NL):                 # NL is small & static: unroll
                d = dilations[lid]
                # Whole-tile skip test from SMEM gate bits.
                gate_any = gate_sref[b * TB, lid]
                for t in range(1, TB):
                    gate_any = gate_any + gate_sref[b * TB + t, lid]

                @pl.when(gate_any > 0)
                def _(lid=lid, d=d):
                    x = buf[:, max_pad:max_pad + Lp, :]       # residual input
                    h1 = ln_relu(causal_conv(w1_ref[lid], b1_ref[lid], d),
                                 g1_ref[lid], be1_ref[lid])
                    buf[:, max_pad:max_pad + Lp, :] = h1      # stage for conv2
                    h2 = ln_relu(causal_conv(w2_ref[lid], b2_ref[lid], 2 * d),
                                 g2_ref[lid], be2_ref[lid])
                    rez = rez_sref[lid]                        # SMEM scalar
                    # blend: out*a + x*(1-a) with out = h2*rez + x
                    #      == x + (a*rez)*h2   (exact; ==x when a==0)
                    for t in range(TB):
                        a = act_sref[b * TB + t, lid]
                        buf[t, max_pad:max_pad + Lp, :] = (
                            x[t] + (a * rez) * h2[t])

        # Final linear on this vocab tile, lane-dense output.
        acts = buf[:, max_pad:max_pad + Lp, :].reshape(M, C_pad)
        logits = jnp.dot(acts.astype(jnp.bfloat16), wf_ref[...],
                         preferred_element_type=jnp.float32) + bf_ref[...]
        o_ref[...] = logits.reshape(TB, Lp, TV)

    return kernel


# ----------------------------------------------------------------------------
# Host-side packing: pad channels/vocab to 128 lanes, stack conv weights as
# (K*C_pad, C_pad) in bf16, stack all layers along a leading axis.  All padded
# lanes/rows are zero BY CONSTRUCTION (the padded-lane LayerNorm / matmul
# scheme relies on this).
# ----------------------------------------------------------------------------
def build_fused_params(params):
    C = params["C"]
    K = params["kernel_size"]
    dil = params["dilations"]
    V = params["final_w"].shape[1]
    C_pad = _round_up(C, LANE)
    V_pad = _round_up(V, LANE)
    TV = min(V_pad, 2048)                       # vocab tile (lane-dense)
    V_pad = _round_up(V_pad, TV)
    # Per-tap lane stride.  When C % 128 == 0 the packing is tight (no
    # contraction waste).  For C % 128 != 0 each tap is padded to C_pad lanes;
    # a pltpu.roll-based tight pack to K*C lanes would cut conv MXU work ~K x.
    KC = K * C_pad
    max_pad = _round_up(max((K - 1) * 2 * d for d in dil), SUBLANE)

    def pad_vec(v):                                   # (1, C) -> (1, C_pad)
        return jnp.zeros((1, C_pad), jnp.float32).at[:, :C].set(v)

    def stack_conv_w(w):                              # (K, C, C) -> (KC, C_pad) bf16
        out = jnp.zeros((KC, C_pad), jnp.float32)
        for j in range(K):
            out = out.at[j * C_pad:j * C_pad + C, :C].set(w[j])
        return out.astype(jnp.bfloat16)

    blocks = params["blocks"]
    emb = jnp.zeros((params["emb"].shape[0], C_pad), jnp.float32)
    emb = emb.at[:, :C].set(params["emb"])
    return dict(
        C_pad=C_pad, V_pad=V_pad, TV=TV, KC=KC, max_pad=max_pad,
        emb=emb,
        w1=jnp.stack([stack_conv_w(p["w1"]) for p in blocks]),
        b1=jnp.stack([pad_vec(p["b1"]) for p in blocks]),
        g1=jnp.stack([pad_vec(p["g1"]) for p in blocks]),
        be1=jnp.stack([pad_vec(p["be1"]) for p in blocks]),
        w2=jnp.stack([stack_conv_w(p["w2"]) for p in blocks]),
        b2=jnp.stack([pad_vec(p["b2"]) for p in blocks]),
        g2=jnp.stack([pad_vec(p["g2"]) for p in blocks]),
        be2=jnp.stack([pad_vec(p["be2"]) for p in blocks]),
        rez=jnp.concatenate([p["rez"].reshape(1) for p in blocks]
                            ).astype(jnp.float32),                 # (NL,)
        final_w=jnp.zeros((C_pad, V_pad), jnp.float32)
                  .at[:C, :V].set(params["final_w"]).astype(jnp.bfloat16),
        final_b=jnp.zeros((1, V_pad), jnp.float32)
                  .at[:, :V].set(params["final_b"]),
    )


# ----------------------------------------------------------------------------
# SkipRec.forward  (one fused pallas_call).  Returns (B, L, V_pad) logits with
# the vocab padded to V_pad lanes; slice/mask the pad columns in the consumer.
# ----------------------------------------------------------------------------
def skiprec_forward(item_seq, policy_action, params, *, batch_tile=None):
    fp = params["fused"]
    C, K = params["C"], params["kernel_size"]
    dil = params["dilations"]
    NL = len(dil)
    C_pad, V_pad, TV, KC, max_pad = (fp["C_pad"], fp["V_pad"], fp["TV"],
                                     fp["KC"], fp["max_pad"])

    # embedding lookup is glue (gather), kept in plain JAX
    x = fp["emb"][item_seq]                              # (B, L, C_pad) f32
    B, L, _ = x.shape
    Lp = _round_up(L, SUBLANE)

    # Batch tile: fill the MXU (M = TB*Lp) but keep >= 2 parallel grid steps
    # when B >= 2 so both v7x TensorCores get work.
    if batch_tile is None:
        batch_tile = max(1, min(8, B // 2)) if B >= 2 else 1
    TB = batch_tile
    B_pad = _round_up(B, TB)

    if (B_pad, Lp) != (B, L):
        x = jnp.pad(x, ((0, B_pad - B), (0, Lp - L), (0, 0)))
    pol = policy_action.astype(jnp.float32)
    if B_pad != B:
        pol = jnp.pad(pol, ((0, B_pad - B), (0, 0)))
    gate = (pol != 0).astype(jnp.int32)                  # SMEM gate bits

    kernel = make_skiprec_kernel(Lp, C, C_pad, KC, TV, K, dil, max_pad, TB)

    grid = (B_pad // TB, V_pad // TV)

    # index_maps receive (b, v, gate_ref, act_ref, rez_ref)
    x_map = lambda b, v, g, a, r: (b, 0, 0)
    w_map = lambda b, v, g, a, r: (0, 0, 0)
    f_map = lambda b, v, g, a, r: (0, v)
    o_map = lambda b, v, g, a, r: (b, 0, v)
    param_spec = pl.BlockSpec((NL, 1, C_pad), w_map)

    grid_spec = pltpu.PrefetchScalarGridSpec(
        num_scalar_prefetch=3,
        grid=grid,
        in_specs=[
            pl.BlockSpec((TB, Lp, C_pad), x_map),        # x (f32)
            pl.BlockSpec((NL, KC, C_pad), w_map),        # conv1 W (bf16)
            param_spec, param_spec, param_spec,          # conv1 b, ln1 g, ln1 b
            pl.BlockSpec((NL, KC, C_pad), w_map),        # conv2 W (bf16)
            param_spec, param_spec, param_spec,          # conv2 b, ln2 g, ln2 b
            pl.BlockSpec((C_pad, TV), f_map),            # final W tile (bf16)
            pl.BlockSpec((1, TV), f_map),                # final b tile
        ],
        out_specs=pl.BlockSpec((TB, Lp, TV), o_map),
        scratch_shapes=[pltpu.VMEM((TB, max_pad + Lp, C_pad), jnp.float32)],
    )

    # VMEM budget (double-buffered pipelined blocks + resident weight stacks +
    # scratch) and an advisory cost estimate for the XLA scheduler.
    stack_bytes = sum(_nbytes(fp[k]) for k in
                      ("w1", "b1", "g1", "be1", "w2", "b2", "g2", "be2"))
    blk_bytes = (2 * TB * Lp * C_pad * 4           # x block
                 + 2 * TB * Lp * TV * 4            # out block
                 + 2 * (C_pad * TV * 2 + TV * 4)   # final W/b tiles
                 + 2 * stack_bytes                 # layer param stacks
                 + TB * (max_pad + Lp) * C_pad * 4)
    vmem_limit = int(min(64 * 1024 * 1024, max(32 * 1024 * 1024, 2 * blk_bytes)))

    flops = 2 * B_pad * Lp * (NL * 2 * KC * C_pad + C_pad * V_pad)
    transcendentals = B_pad * NL * 2 * Lp
    bytes_accessed = (_nbytes(x) + stack_bytes + _nbytes(fp["final_w"])
                      + _nbytes(fp["final_b"]) + B_pad * Lp * V_pad * 4
                      + _nbytes(gate) + _nbytes(pol) + _nbytes(fp["rez"]))

    out = pl.pallas_call(
        kernel,
        out_shape=jax.ShapeDtypeStruct((B_pad, Lp, V_pad), jnp.float32),
        grid_spec=grid_spec,
        compiler_params=pltpu.CompilerParams(
            dimension_semantics=("parallel", "arbitrary"),
            vmem_limit_bytes=vmem_limit),
        cost_estimate=pl.CostEstimate(
            flops=int(flops), transcendentals=int(transcendentals),
            bytes_accessed=int(bytes_accessed)),
    )(gate, pol, fp["rez"], x,
      fp["w1"], fp["b1"], fp["g1"], fp["be1"],
      fp["w2"], fp["b2"], fp["g2"], fp["be2"],
      fp["final_w"], fp["final_b"])

    # Drop batch/length padding only; keep V_pad (consumer slices/masks it).
    return out[:B, :L, :]


# ----------------------------------------------------------------------------
# Independent pure-JAX f32 reference (lax.conv_general_dilated) for checking
# ----------------------------------------------------------------------------
def skiprec_reference(item_seq, policy_action, params):
    K = params["kernel_size"]
    x = params["emb"][item_seq]

    def conv(inp, w, b, dil):
        wl = jnp.transpose(w, (2, 1, 0))                  # (Cout, Cin, K)
        y = lax.conv_general_dilated(
            jnp.transpose(inp, (0, 2, 1)), wl, (1,),
            [((K - 1) * dil, 0)], rhs_dilation=(dil,),
            dimension_numbers=("NCH", "OIH", "NCH"))
        return jnp.transpose(y, (0, 2, 1)) + b

    def ln_relu(h, g, bb):
        mu = h.mean(-1, keepdims=True)
        var = ((h - mu) ** 2).mean(-1, keepdims=True)
        return jnp.maximum((h - mu) / jnp.sqrt(var + 1e-8) * g + bb, 0.0)

    for lid, (p, d) in enumerate(zip(params["blocks"], params["dilations"])):
        a = policy_action[:, lid].reshape(-1, 1, 1).astype(jnp.float32)
        h1 = ln_relu(conv(x, p["w1"], p["b1"], d), p["g1"], p["be1"])
        h2 = ln_relu(conv(h1, p["w2"], p["b2"], 2 * d), p["g2"], p["be2"])
        out = h2 * p["rez"][0, 0] + x
        x = out * a + x * (1.0 - a)
    return x @ params["final_w"] + params["final_b"]


# ----------------------------------------------------------------------------
# Deterministic synthetic parameter init (shapes follow the PyTorch __init__)
# ----------------------------------------------------------------------------
def init_params(key, C, K, V, dilations, pad_token):
    ks = iter(jax.random.split(key, 4 + 4 * len(dilations)))
    emb = jax.random.uniform(next(ks), (V, C), jnp.float32, -0.1, 0.1)
    emb = emb.at[pad_token].set(0.0)                      # padding_idx row
    blocks = []
    for _ in dilations:
        blocks.append(dict(
            w1=jax.random.normal(next(ks), (K, C, C), jnp.float32)
               * (1.0 / (C * K) ** 0.5),
            b1=jax.random.normal(next(ks), (1, C), jnp.float32) * 0.01,
            g1=jnp.ones((1, C), jnp.float32),
            be1=jnp.zeros((1, C), jnp.float32),
            w2=jax.random.normal(next(ks), (K, C, C), jnp.float32)
               * (1.0 / (C * K) ** 0.5),
            b2=jax.random.normal(next(ks), (1, C), jnp.float32) * 0.01,
            g2=jnp.ones((1, C), jnp.float32),
            be2=jnp.zeros((1, C), jnp.float32),
            rez=jnp.ones((1, 1), jnp.float32),            # nn.Parameter([1])
        ))
    final_w = jax.random.normal(next(ks), (C, V), jnp.float32) * (1.0 / C ** 0.5)
    final_b = jnp.full((1, V), 0.1, jnp.float32)
    return dict(emb=emb, blocks=blocks, dilations=list(dilations),
                kernel_size=K, C=C, final_w=final_w, final_b=final_b)


if __name__ == "__main__":
    B, L, C, K = 8, 16, 32, 3           # batch, seq len, embedding_size, kernel
    num_items = 63
    V = num_items + 1
    pad_token = 0
    dilations = [1, 2]                  # args.dilations * block_num

    root = jax.random.PRNGKey(0)
    kp, kseq, kpol = jax.random.split(root, 3)
    params = init_params(kp, C, K, V, dilations, pad_token)
    params["fused"] = build_fused_params(params)

    item_seq = jax.random.randint(kseq, (B, L), 0, V, dtype=jnp.int32)
    policy_action = jax.random.bernoulli(
        kpol, 0.5, (B, len(dilations))).astype(jnp.float32)

    out = jax.block_until_ready(skiprec_forward(item_seq, policy_action, params))
    ref = jax.block_until_ready(skiprec_reference(item_seq, policy_action, params))
    # bf16 MXU operands vs. the pure-f32 reference -> a few-percent tolerance.
    np.testing.assert_allclose(np.asarray(out)[:, :, :V], np.asarray(ref),
                               rtol=5e-2, atol=5e-2)
    print("KERNEL_OK")
</pallas_src>

<mosaic_0001>
module attributes {stable_mosaic.version = 11 : i64} {
  func.func @kernel(%arg0: i32, %arg1: i32, %arg2: memref<8x2xi32, #tpu.memory_space<smem>>, %arg3: memref<8x2xf32, #tpu.memory_space<smem>>, %arg4: memref<2xf32, #tpu.memory_space<smem>>, %arg5: memref<4x16x128xf32, #tpu.memory_space<vmem>>, %arg6: memref<2x384x128xbf16, #tpu.memory_space<vmem>>, %arg7: memref<2x1x128xf32, #tpu.memory_space<vmem>>, %arg8: memref<2x1x128xf32, #tpu.memory_space<vmem>>, %arg9: memref<2x1x128xf32, #tpu.memory_space<vmem>>, %arg10: memref<2x384x128xbf16, #tpu.memory_space<vmem>>, %arg11: memref<2x1x128xf32, #tpu.memory_space<vmem>>, %arg12: memref<2x1x128xf32, #tpu.memory_space<vmem>>, %arg13: memref<2x1x128xf32, #tpu.memory_space<vmem>>, %arg14: memref<128x128xbf16, #tpu.memory_space<vmem>>, %arg15: memref<1x128xf32, #tpu.memory_space<vmem>>, %arg16: memref<4x16x128xf32, #tpu.memory_space<vmem>>, %arg17: memref<4x24x128xf32, #tpu.memory_space<vmem>>) attributes {dimension_semantics = [#tpu.dimension_semantics<parallel>, #tpu.dimension_semantics<arbitrary>], iteration_bounds = array<i64: 2, 1>, scalar_prefetch = 3 : i64, scratch_operands = 1 : i64, tpu.core_type = #tpu.core_type<tc>, window_params = [{transform_indices = @transform_0, window_bounds = array<i64: 4, 16, 128>}, {pipeline_mode = #tpu.pipeline_mode<synchronous>, transform_indices = @transform_1, window_bounds = array<i64: 2, 384, 128>}, {pipeline_mode = #tpu.pipeline_mode<synchronous>, transform_indices = @transform_2, window_bounds = array<i64: 2, 1, 128>}, {pipeline_mode = #tpu.pipeline_mode<synchronous>, transform_indices = @transform_3, window_bounds = array<i64: 2, 1, 128>}, {pipeline_mode = #tpu.pipeline_mode<synchronous>, transform_indices = @transform_4, window_bounds = array<i64: 2, 1, 128>}, {pipeline_mode = #tpu.pipeline_mode<synchronous>, transform_indices = @transform_5, window_bounds = array<i64: 2, 384, 128>}, {pipeline_mode = #tpu.pipeline_mode<synchronous>, transform_indices = @transform_6, window_bounds = array<i64: 2, 1, 128>}, {pipeline_mode = #tpu.pipeline_mode<synchronous>, transform_indices = @transform_7, window_bounds = array<i64: 2, 1, 128>}, {pipeline_mode = #tpu.pipeline_mode<synchronous>, transform_indices = @transform_8, window_bounds = array<i64: 2, 1, 128>}, {transform_indices = @transform_9, window_bounds = array<i64: 128, 128>}, {transform_indices = @transform_10, window_bounds = array<i64: 1, 128>}, {transform_indices = @transform_11, window_bounds = array<i64: 4, 16, 128>}]} {
    %c0_i32 = arith.constant 0 : i32
    %0 = arith.cmpi eq, %arg1, %c0_i32 : i32
    %1 = arith.extui %0 : i1 to i32
    %c0_i32_0 = arith.constant 0 : i32
    %2 = arith.cmpi ne, %1, %c0_i32_0 : i32
    scf.if %2 {
      %cst_9 = arith.constant 0.000000e+00 : f32
      %13 = vector.broadcast %cst_9 : f32 to vector<4x8x128xf32>
      %c0_10 = arith.constant 0 : index
      %c0_11 = arith.constant 0 : index
      %c0_12 = arith.constant 0 : index
      %14 = vector.load %arg17[%c0_10, %c0_11, %c0_12] : memref<4x24x128xf32, #tpu.memory_space<vmem>>, vector<4x8x128xf32>
      tpu.vector_store %arg17[%c0_10, %c0_11, %c0_12], %13 {strides = array<i32>} : memref<4x24x128xf32, #tpu.memory_space<vmem>>, vector<4x8x128xf32>,
      %c0_13 = arith.constant 0 : index
      %c0_14 = arith.constant 0 : index
      %c0_15 = arith.constant 0 : index
      %15 = vector.load %arg5[%c0_13, %c0_14, %c0_15] : memref<4x16x128xf32, #tpu.memory_space<vmem>>, vector<4x16x128xf32>
      %c0_16 = arith.constant 0 : index
      %c8_17 = arith.constant 8 : index
      %c0_18 = arith.constant 0 : index
      %16 = vector.load %arg17[%c0_16, %c8_17, %c0_18] : memref<4x24x128xf32, #tpu.memory_space<vmem>>, vector<4x16x128xf32>
      tpu.vector_store %arg17[%c0_16, %c8_17, %c0_18], %15 {strides = array<i32>} : memref<4x24x128xf32, #tpu.memory_space<vmem>>, vector<4x16x128xf32>,
      %c4_i32 = arith.constant 4 : i32
      %17 = arith.muli %arg0, %c4_i32 : i32
      %18 = arith.index_cast %17 : i32 to index
      %c0_19 = arith.constant 0 : index
      %19 = memref.load %arg2[%18, %c0_19] : memref<8x2xi32, #tpu.memory_space<smem>>
      %c4_i32_20 = arith.constant 4 : i32
      %20 = arith.muli %arg0, %c4_i32_20 : i32
      %c1_i32 = arith.constant 1 : i32
      %21 = arith.addi %20, %c1_i32 : i32
      %22 = arith.index_cast %21 : i32 to index
      %c0_21 = arith.constant 0 : index
      %23 = memref.load %arg2[%22, %c0_21] : memref<8x2xi32, #tpu.memory_space<smem>>
      %24 = arith.addi %19, %23 : i32
      %c4_i32_22 = arith.constant 4 : i32
      %25 = arith.muli %arg0, %c4_i32_22 : i32
      %c2_i32 = arith.constant 2 : i32
      %26 = arith.addi %25, %c2_i32 : i32
      %27 = arith.index_cast %26 : i32 to index
      %c0_23 = arith.constant 0 : index
      %28 = memref.load %arg2[%27, %c0_23] : memref<8x2xi32, #tpu.memory_space<smem>>
      %29 = arith.addi %24, %28 : i32
      %c4_i32_24 = arith.constant 4 : i32
      %30 = arith.muli %arg0, %c4_i32_24 : i32
      %c3_i32 = arith.constant 3 : i32
      %31 = arith.addi %30, %c3_i32 : i32
      %32 = arith.index_cast %31 : i32 to index
      %c0_25 = arith.constant 0 : index
      %33 = memref.load %arg2[%32, %c0_25] : memref<8x2xi32, #tpu.memory_space<smem>>
      %34 = arith.addi %29, %33 : i32
      %c0_i32_26 = arith.constant 0 : i32
      %35 = arith.cmpi sgt, %34, %c0_i32_26 : i32
      %36 = arith.extui %35 : i1 to i32
      %c0_i32_27 = arith.constant 0 : i32
      %37 = arith.cmpi ne, %36, %c0_i32_27 : i32
      scf.if %37 {
        %c0_40 = arith.constant 0 : index
        %c8_41 = arith.constant 8 : index
        %c0_42 = arith.constant 0 : index
        %59 = vector.load %arg17[%c0_40, %c8_41, %c0_42] : memref<4x24x128xf32, #tpu.memory_space<vmem>>, vector<4x16x128xf32>
        %c0_43 = arith.constant 0 : index
        %c0_44 = arith.constant 0 : index
        %c0_45 = arith.constant 0 : index
        %60 = vector.load %arg6[%c0_43, %c0_44, %c0_45] : memref<2x384x128xbf16, #tpu.memory_space<vmem>>, vector<1x384x128xbf16>
        %61 = vector.shape_cast %60 : vector<1x384x128xbf16> to vector<384x128xbf16>
        %c0_46 = arith.constant 0 : index
        %c0_47 = arith.constant 0 : index
        %c0_48 = arith.constant 0 : index
        %62 = vector.load %arg7[%c0_46, %c0_47, %c0_48] : memref<2x1x128xf32, #tpu.memory_space<vmem>>, vector<1x1x128xf32>
        %63 = vector.shape_cast %62 : vector<1x1x128xf32> to vector<1x128xf32>
        %c0_49 = arith.constant 0 : index
        %c6 = arith.constant 6 : index
        %c0_50 = arith.constant 0 : index
        %64 = vector.load %arg17[%c0_49, %c6, %c0_50] : memref<4x24x128xf32, #tpu.memory_space<vmem>>, vector<4x16x128xf32>
        %c0_51 = arith.constant 0 : index
        %c7 = arith.constant 7 : index
        %c0_52 = arith.constant 0 : index
        %65 = vector.load %arg17[%c0_51, %c7, %c0_52] : memref<4x24x128xf32, #tpu.memory_space<vmem>>, vector<4x16x128xf32>
        %c0_53 = arith.constant 0 : index
        %c8_54 = arith.constant 8 : index
        %c0_55 = arith.constant 0 : index
        %66 = vector.load %arg17[%c0_53, %c8_54, %c0_55] : memref<4x24x128xf32, #tpu.memory_space<vmem>>, vector<4x16x128xf32>
        %67 = tpu.concatenate %64, %65, %66 in 2 : vector<4x16x128xf32>, vector<4x16x128xf32>, vector<4x16x128xf32> -> vector<4x16x384xf32>
        %68 = vector.shape_cast %67 : vector<4x16x384xf32> to vector<64x384xf32>
        %69 = arith.truncf %68 : vector<64x384xf32> to vector<64x384xbf16>
        %cst_56 = arith.constant dense<0.000000e+00> : vector<64x128xf32>
        %70 = tpu.matmul %69, %61, %cst_56 {dimension_numbers = #tpu.dot_dimension_numbers<[1], [0], [0], [1], [0, 0, 1, 1], [], []>} : vector<64x384xbf16>, vector<384x128xbf16>, vector<64x128xf32> -> vector<64x128xf32>
        %71 = vector.shape_cast %70 : vector<64x128xf32> to vector<4x16x128xf32>
        %72 = vector.shape_cast %63 : vector<1x128xf32> to vector<1x1x128xf32>
        %73 = vector.broadcast %72 : vector<1x1x128xf32> to vector<4x16x128xf32>
        %74 = arith.addf %71, %73 : vector<4x16x128xf32>
        %c0_57 = arith.constant 0 : index
        %c0_58 = arith.constant 0 : index
        %c0_59 = arith.constant 0 : index
        %75 = vector.load %arg8[%c0_57, %c0_58, %c0_59] : memref<2x1x128xf32, #tpu.memory_space<vmem>>, vector<1x1x128xf32>
        %76 = vector.shape_cast %75 : vector<1x1x128xf32> to vector<1x128xf32>
        %c0_60 = arith.constant 0 : index
        %c0_61 = arith.constant 0 : index
        %c0_62 = arith.constant 0 : index
        %77 = vector.load %arg9[%c0_60, %c0_61, %c0_62] : memref<2x1x128xf32, #tpu.memory_space<vmem>>, vector<1x1x128xf32>
        %78 = vector.shape_cast %77 : vector<1x1x128xf32> to vector<1x128xf32>
        %cst_63 = arith.constant dense<0.000000e+00> : vector<4x16xf32>
        %79 = vector.multi_reduction <add>, %74, %cst_63 [2] : vector<4x16x128xf32> to vector<4x16xf32>
        %80 = vector.shape_cast %79 : vector<4x16xf32> to vector<4x16x1xf32>
        %cst_64 = arith.constant 3.125000e-02 : f32
        %81 = vector.broadcast %cst_64 : f32 to vector<4x16x1xf32>
        %82 = arith.mulf %80, %81 : vector<4x16x1xf32>
        %83 = arith.mulf %74, %74 : vector<4x16x128xf32>
        %cst_65 = arith.constant dense<0.000000e+00> : vector<4x16xf32>
        %84 = vector.multi_reduction <add>, %83, %cst_65 [2] : vector<4x16x128xf32> to vector<4x16xf32>
        %85 = vector.shape_cast %84 : vector<4x16xf32> to vector<4x16x1xf32>
        %cst_66 = arith.constant 3.125000e-02 : f32
        %86 = vector.broadcast %cst_66 : f32 to vector<4x16x1xf32>
        %87 = arith.mulf %85, %86 : vector<4x16x1xf32>
        %88 = arith.mulf %82, %82 : vector<4x16x1xf32>
        %89 = arith.subf %87, %88 : vector<4x16x1xf32>
        %90 = vector.broadcast %82 : vector<4x16x1xf32> to vector<4x16x128xf32>
        %91 = arith.subf %74, %90 : vector<4x16x128xf32>
        %cst_67 = arith.constant 9.99999993E-9 : f32
        %92 = vector.broadcast %cst_67 : f32 to vector<4x16x1xf32>
        %93 = arith.addf %89, %92 : vector<4x16x1xf32>
        %94 = math.rsqrt %93 : vector<4x16x1xf32>
        %95 = vector.broadcast %94 : vector<4x16x1xf32> to vector<4x16x128xf32>
        %96 = arith.mulf %91, %95 : vector<4x16x128xf32>
        %97 = vector.shape_cast %76 : vector<1x128xf32> to vector<1x1x128xf32>
        %98 = vector.broadcast %97 : vector<1x1x128xf32> to vector<4x16x128xf32>
        %99 = arith.mulf %96, %98 : vector<4x16x128xf32>
        %100 = vector.shape_cast %78 : vector<1x128xf32> to vector<1x1x128xf32>
        %101 = vector.broadcast %100 : vector<1x1x128xf32> to vector<4x16x128xf32>
        %102 = arith.addf %99, %101 : vector<4x16x128xf32>
        %cst_68 = arith.constant 0.000000e+00 : f32
        %103 = vector.broadcast %cst_68 : f32 to vector<4x16x128xf32>
        %104 = arith.maximumf %102, %103 : vector<4x16x128xf32>
        %c0_69 = arith.constant 0 : index
        %c8_70 = arith.constant 8 : index
        %c0_71 = arith.constant 0 : index
        %105 = vector.load %arg17[%c0_69, %c8_70, %c0_71] : memref<4x24x128xf32, #tpu.memory_space<vmem>>, vector<4x16x128xf32>
        tpu.vector_store %arg17[%c0_69, %c8_70, %c0_71], %104 {strides = array<i32>} : memref<4x24x128xf32, #tpu.memory_space<vmem>>, vector<4x16x128xf32>,
        %c0_72 = arith.constant 0 : index
        %c0_73 = arith.constant 0 : index
        %c0_74 = arith.constant 0 : index
        %106 = vector.load %arg10[%c0_72, %c0_73, %c0_74] : memref<2x384x128xbf16, #tpu.memory_space<vmem>>, vector<1x384x128xbf16>
        %107 = vector.shape_cast %106 : vector<1x384x128xbf16> to vector<384x128xbf16>
        %c0_75 = arith.constant 0 : index
        %c0_76 = arith.constant 0 : index
        %c0_77 = arith.constant 0 : index
        %108 = vector.load %arg11[%c0_75, %c0_76, %c0_77] : memref<2x1x128xf32, #tpu.memory_space<vmem>>, vector<1x1x128xf32>
        %109 = vector.shape_cast %108 : vector<1x1x128xf32> to vector<1x128xf32>
        %c0_78 = arith.constant 0 : index
        %c4 = arith.constant 4 : index
        %c0_79 = arith.constant 0 : index
        %110 = vector.load %arg17[%c0_78, %c4, %c0_79] : memref<4x24x128xf32, #tpu.memory_space<vmem>>, vector<4x16x128xf32>
        %c0_80 = arith.constant 0 : index
        %c6_81 = arith.constant 6 : index
        %c0_82 = arith.constant 0 : index
        %111 = vector.load %arg17[%c0_80, %c6_81, %c0_82] : memref<4x24x128xf32, #tpu.memory_space<vmem>>, vector<4x16x128xf32>
        %c0_83 = arith.constant 0 : index
        %c8_84 = arith.constant 8 : index
        %c0_85 = arith.constant 0 : index
        %112 = vector.load %arg17[%c0_83, %c8_84, %c0_85] : memref<4x24x128xf32, #tpu.memory_space<vmem>>, vector<4x16x128xf32>
        %113 = tpu.concatenate %110, %111, %112 in 2 : vector<4x16x128xf32>, vector<4x16x128xf32>, vector<4x16x128xf32> -> vector<4x16x384xf32>
        %114 = vector.shape_cast %113 : vector<4x16x384xf32> to vector<64x384xf32>
        %115 = arith.truncf %114 : vector<64x384xf32> to vector<64x384xbf16>
        %cst_86 = arith.constant dense<0.000000e+00> : vector<64x128xf32>
        %116 = tpu.matmul %115, %107, %cst_86 {dimension_numbers = #tpu.dot_dimension_numbers<[1], [0], [0], [1], [0, 0, 1, 1], [], []>} : vector<64x384xbf16>, vector<384x128xbf16>, vector<64x128xf32> -> vector<64x128xf32>
        %117 = vector.shape_cast %116 : vector<64x128xf32> to vector<4x16x128xf32>
        %118 = vector.shape_cast %109 : vector<1x128xf32> to vector<1x1x128xf32>
        %119 = vector.broadcast %118 : vector<1x1x128xf32> to vector<4x16x128xf32>
        %120 = arith.addf %117, %119 : vector<4x16x128xf32>
        %c0_87 = arith.constant 0 : index
        %c0_88 = arith.constant 0 : index
        %c0_89 = arith.constant 0 : index
        %121 = vector.load %arg12[%c0_87, %c0_88, %c0_89] : memref<2x1x128xf32, #tpu.memory_space<vmem>>, vector<1x1x128xf32>
        %122 = vector.shape_cast %121 : vector<1x1x128xf32> to vector<1x128xf32>
        %c0_90 = arith.constant 0 : index
        %c0_91 = arith.constant 0 : index
        %c0_92 = arith.constant 0 : index
        %123 = vector.load %arg13[%c0_90, %c0_91, %c0_92] : memref<2x1x128xf32, #tpu.memory_space<vmem>>, vector<1x1x128xf32>
        %124 = vector.shape_cast %123 : vector<1x1x128xf32> to vector<1x128xf32>
        %cst_93 = arith.constant dense<0.000000e+00> : vector<4x16xf32>
        %125 = vector.multi_reduction <add>, %120, %cst_93 [2] : vector<4x16x128xf32> to vector<4x16xf32>
        %126 = vector.shape_cast %125 : vector<4x16xf32> to vector<4x16x1xf32>
        %cst_94 = arith.constant 3.125000e-02 : f32
        %127 = vector.broadcast %cst_94 : f32 to vector<4x16x1xf32>
        %128 = arith.mulf %126, %127 : vector<4x16x1xf32>
        %129 = arith.mulf %120, %120 : vector<4x16x128xf32>
        %cst_95 = arith.constant dense<0.000000e+00> : vector<4x16xf32>
        %130 = vector.multi_reduction <add>, %129, %cst_95 [2] : vector<4x16x128xf32> to vector<4x16xf32>
        %131 = vector.shape_cast %130 : vector<4x16xf32> to vector<4x16x1xf32>
        %cst_96 = arith.constant 3.125000e-02 : f32
        %132 = vector.broadcast %cst_96 : f32 to vector<4x16x1xf32>
        %133 = arith.mulf %131, %132 : vector<4x16x1xf32>
        %134 = arith.mulf %128, %128 : vector<4x16x1xf32>
        %135 = arith.subf %133, %134 : vector<4x16x1xf32>
        %136 = vector.broadcast %128 : vector<4x16x1xf32> to vector<4x16x128xf32>
        %137 = arith.subf %120, %136 : vector<4x16x128xf32>
        %cst_97 = arith.constant 9.99999993E-9 : f32
        %138 = vector.broadcast %cst_97 : f32 to vector<4x16x1xf32>
        %139 = arith.addf %135, %138 : vector<4x16x1xf32>
        %140 = math.rsqrt %139 : vector<4x16x1xf32>
        %141 = vector.broadcast %140 : vector<4x16x1xf32> to vector<4x16x128xf32>
        %142 = arith.mulf %137, %141 : vector<4x16x128xf32>
        %143 = vector.shape_cast %122 : vector<1x128xf32> to vector<1x1x128xf32>
        %144 = vector.broadcast %143 : vector<1x1x128xf32> to vector<4x16x128xf32>
        %145 = arith.mulf %142, %144 : vector<4x16x128xf32>
        %146 = vector.shape_cast %124 : vector<1x128xf32> to vector<1x1x128xf32>
        %147 = vector.broadcast %146 : vector<1x1x128xf32> to vector<4x16x128xf32>
        %148 = arith.addf %145, %147 : vector<4x16x128xf32>
        %cst_98 = arith.constant 0.000000e+00 : f32
        %149 = vector.broadcast %cst_98 : f32 to vector<4x16x128xf32>
        %150 = arith.maximumf %148, %149 : vector<4x16x128xf32>
        %c0_99 = arith.constant 0 : index
        %151 = memref.load %arg4[%c0_99] : memref<2xf32, #tpu.memory_space<smem>>
        %c4_i32_100 = arith.constant 4 : i32
        %152 = arith.muli %arg0, %c4_i32_100 : i32
        %c0_i32_101 = arith.constant 0 : i32
        %153 = arith.addi %152, %c0_i32_101 : i32
        %154 = arith.index_cast %153 : i32 to index
        %c0_102 = arith.constant 0 : index
        %155 = memref.load %arg3[%154, %c0_102] : memref<8x2xf32, #tpu.memory_space<smem>>
        %156 = vector.extract_strided_slice %59 {offsets = [0, 0, 0], sizes = [1, 16, 128], strides = [1, 1, 1]} : vector<4x16x128xf32> to vector<1x16x128xf32>
        %157 = vector.shape_cast %156 : vector<1x16x128xf32> to vector<16x128xf32>
        %158 = arith.mulf %155, %151 : f32
        %159 = vector.extract_strided_slice %150 {offsets = [0, 0, 0], sizes = [1, 16, 128], strides = [1, 1, 1]} : vector<4x16x128xf32> to vector<1x16x128xf32>
        %160 = vector.shape_cast %159 : vector<1x16x128xf32> to vector<16x128xf32>
        %161 = vector.broadcast %158 : f32 to vector<16x128xf32>
        %162 = arith.mulf %161, %160 : vector<16x128xf32>
        %163 = arith.addf %157, %162 : vector<16x128xf32>
        %c0_103 = arith.constant 0 : index
        %c8_104 = arith.constant 8 : index
        %c0_105 = arith.constant 0 : index
        %164 = vector.load %arg17[%c0_103, %c8_104, %c0_105] : memref<4x24x128xf32, #tpu.memory_space<vmem>>, vector<1x16x128xf32>
        %165 = vector.shape_cast %164 : vector<1x16x128xf32> to vector<16x128xf32>
        %166 = vector.shape_cast %163 : vector<16x128xf32> to vector<1x16x128xf32>
        tpu.vector_store %arg17[%c0_103, %c8_104, %c0_105], %166 {strides = array<i32>} : memref<4x24x128xf32, #tpu.memory_space<vmem>>, vector<1x16x128xf32>,
        %c4_i32_106 = arith.constant 4 : i32
        %167 = arith.muli %arg0, %c4_i32_106 : i32
        %c1_i32_107 = arith.constant 1 : i32
        %168 = arith.addi %167, %c1_i32_107 : i32
        %169 = arith.index_cast %168 : i32 to index
        %c0_108 = arith.constant 0 : index
        %170 = memref.load %arg3[%169, %c0_108] : memref<8x2xf32, #tpu.memory_space<smem>>
        %171 = vector.extract_strided_slice %59 {offsets = [1, 0, 0], sizes = [1, 16, 128], strides = [1, 1, 1]} : vector<4x16x128xf32> to vector<1x16x128xf32>
        %172 = vector.shape_cast %171 : vector<1x16x128xf32> to vector<16x128xf32>
        %173 = arith.mulf %170, %151 : f32
        %174 = vector.extract_strided_slice %150 {offsets = [1, 0, 0], sizes = [1, 16, 128], strides = [1, 1, 1]} : vector<4x16x128xf32> to vector<1x16x128xf32>
        %175 = vector.shape_cast %174 : vector<1x16x128xf32> to vector<16x128xf32>
        %176 = vector.broadcast %173 : f32 to vector<16x128xf32>
        %177 = arith.mulf %176, %175 : vector<16x128xf32>
        %178 = arith.addf %172, %177 : vector<16x128xf32>
        %c1_109 = arith.constant 1 : index
        %c8_110 = arith.constant 8 : index
        %c0_111 = arith.constant 0 : index
        %179 = vector.load %arg17[%c1_109, %c8_110, %c0_111] : memref<4x24x128xf32, #tpu.memory_space<vmem>>, vector<1x16x128xf32>
        %180 = vector.shape_cast %179 : vector<1x16x128xf32> to vector<16x128xf32>
        %181 = vector.shape_cast %178 : vector<16x128xf32> to vector<1x16x128xf32>
        tpu.vector_store %arg17[%c1_109, %c8_110, %c0_111], %181 {strides = array<i32>} : memref<4x24x128xf32, #tpu.memory_space<vmem>>, vector<1x16x128xf32>,
        %c4_i32_112 = arith.constant 4 : i32
        %182 = arith.muli %arg0, %c4_i32_112 : i32
        %c2_i32_113 = arith.constant 2 : i32
        %183 = arith.addi %182, %c2_i32_113 : i32
        %184 = arith.index_cast %183 : i32 to index
        %c0_114 = arith.constant 0 : index
        %185 = memref.load %arg3[%184, %c0_114] : memref<8x2xf32, #tpu.memory_space<smem>>
        %186 = vector.extract_strided_slice %59 {offsets = [2, 0, 0], sizes = [1, 16, 128], strides = [1, 1, 1]} : vector<4x16x128xf32> to vector<1x16x128xf32>
        %187 = vector.shape_cast %186 : vector<1x16x128xf32> to vector<16x128xf32>
        %188 = arith.mulf %185, %151 : f32
        %189 = vector.extract_strided_slice %150 {offsets = [2, 0, 0], sizes = [1, 16, 128], strides = [1, 1, 1]} : vector<4x16x128xf32> to vector<1x16x128xf32>
        %190 = vector.shape_cast %189 : vector<1x16x128xf32> to vector<16x128xf32>
        %191 = vector.broadcast %188 : f32 to vector<16x128xf32>
        %192 = arith.mulf %191, %190 : vector<16x128xf32>
        %193 = arith.addf %187, %192 : vector<16x128xf32>
        %c2 = arith.constant 2 : index
        %c8_115 = arith.constant 8 : index
        %c0_116 = arith.constant 0 : index
        %194 = vector.load %arg17[%c2, %c8_115, %c0_116] : memref<4x24x128xf32, #tpu.memory_space<vmem>>, vector<1x16x128xf32>
        %195 = vector.shape_cast %194 : vector<1x16x128xf32> to vector<16x128xf32>
        %196 = vector.shape_cast %193 : vector<16x128xf32> to vector<1x16x128xf32>
        tpu.vector_store %arg17[%c2, %c8_115, %c0_116], %196 {strides = array<i32>} : memref<4x24x128xf32, #tpu.memory_space<vmem>>, vector<1x16x128xf32>,
        %c4_i32_117 = arith.constant 4 : i32
        %197 = arith.muli %arg0, %c4_i32_117 : i32
        %c3_i32_118 = arith.constant 3 : i32
        %198 = arith.addi %197, %c3_i32_118 : i32
        %199 = arith.index_cast %198 : i32 to index
        %c0_119 = arith.constant 0 : index
        %200 = memref.load %arg3[%199, %c0_119] : memref<8x2xf32, #tpu.memory_space<smem>>
        %201 = vector.extract_strided_slice %59 {offsets = [3, 0, 0], sizes = [1, 16, 128], strides = [1, 1, 1]} : vector<4x16x128xf32> to vector<1x16x128xf32>
        %202 = vector.shape_cast %201 : vector<1x16x128xf32> to vector<16x128xf32>
        %203 = arith.mulf %200, %151 : f32
        %204 = vector.extract_strided_slice %150 {offsets = [3, 0, 0], sizes = [1, 16, 128], strides = [1, 1, 1]} : vector<4x16x128xf32> to vector<1x16x128xf32>
        %205 = vector.shape_cast %204 : vector<1x16x128xf32> to vector<16x128xf32>
        %206 = vector.broadcast %203 : f32 to vector<16x128xf32>
        %207 = arith.mulf %206, %205 : vector<16x128xf32>
        %208 = arith.addf %202, %207 : vector<16x128xf32>
        %c3 = arith.constant 3 : index
        %c8_120 = arith.constant 8 : index
        %c0_121 = arith.constant 0 : index
        %209 = vector.load %arg17[%c3, %c8_120, %c0_121] : memref<4x24x128xf32, #tpu.memory_space<vmem>>, vector<1x16x128xf32>
        %210 = vector.shape_cast %209 : vector<1x16x128xf32> to vector<16x128xf32>
        %211 = vector.shape_cast %208 : vector<16x128xf32> to vector<1x16x128xf32>
        tpu.vector_store %arg17[%c3, %c8_120, %c0_121], %211 {strides = array<i32>} : memref<4x24x128xf32, #tpu.memory_space<vmem>>, vector<1x16x128xf32>,
      } else {
      }
      %c4_i32_28 = arith.constant 4 : i32
      %38 = arith.muli %arg0, %c4_i32_28 : i32
      %39 = arith.index_cast %38 : i32 to index
      %c1 = arith.constant 1 : index
      %40 = memref.load %arg2[%39, %c1] : memref<8x2xi32, #tpu.memory_space<smem>>
      %c4_i32_29 = arith.constant 4 : i32
      %41 = arith.muli %arg0, %c4_i32_29 : i32
      %c1_i32_30 = arith.constant 1 : i32
      %42 = arith.addi %41, %c1_i32_30 : i32
      %43 = arith.index_cast %42 : i32 to index
      %c1_31 = arith.constant 1 : index
      %44 = memref.load %arg2[%43, %c1_31] : memref<8x2xi32, #tpu.memory_space<smem>>
      %45 = arith.addi %40, %44 : i32
      %c4_i32_32 = arith.constant 4 : i32
      %46 = arith.muli %arg0, %c4_i32_32 : i32
      %c2_i32_33 = arith.constant 2 : i32
      %47 = arith.addi %46, %c2_i32_33 : i32
      %48 = arith.index_cast %47 : i32 to index
      %c1_34 = arith.constant 1 : index
      %49 = memref.load %arg2[%48, %c1_34] : memref<8x2xi32, #tpu.memory_space<smem>>
      %50 = arith.addi %45, %49 : i32
      %c4_i32_35 = arith.constant 4 : i32
      %51 = arith.muli %arg0, %c4_i32_35 : i32
      %c3_i32_36 = arith.constant 3 : i32
      %52 = arith.addi %51, %c3_i32_36 : i32
      %53 = arith.index_cast %52 : i32 to index
      %c1_37 = arith.constant 1 : index
      %54 = memref.load %arg2[%53, %c1_37] : memref<8x2xi32, #tpu.memory_space<smem>>
      %55 = arith.addi %50, %54 : i32
      %c0_i32_38 = arith.constant 0 : i32
      %56 = arith.cmpi sgt, %55, %c0_i32_38 : i32
      %57 = arith.extui %56 : i1 to i32
      %c0_i32_39 = arith.constant 0 : i32
      %58 = arith.cmpi ne, %57, %c0_i32_39 : i32
      scf.if %58 {
        %c0_40 = arith.constant 0 : index
        %c8_41 = arith.constant 8 : index
        %c0_42 = arith.constant 0 : index
        %59 = vector.load %arg17[%c0_40, %c8_41, %c0_42] : memref<4x24x128xf32, #tpu.memory_space<vmem>>, vector<4x16x128xf32>
        %c1_43 = arith.constant 1 : index
        %c0_44 = arith.constant 0 : index
        %c0_45 = arith.constant 0 : index
        %60 = vector.load %arg6[%c1_43, %c0_44, %c0_45] : memref<2x384x128xbf16, #tpu.memory_space<vmem>>, vector<1x384x128xbf16>
        %61 = vector.shape_cast %60 : vector<1x384x128xbf16> to vector<384x128xbf16>
        %c1_46 = arith.constant 1 : index
        %c0_47 = arith.constant 0 : index
        %c0_48 = arith.constant 0 : index
        %62 = vector.load %arg7[%c1_46, %c0_47, %c0_48] : memref<2x1x128xf32, #tpu.memory_space<vmem>>, vector<1x1x128xf32>
        %63 = vector.shape_cast %62 : vector<1x1x128xf32> to vector<1x128xf32>
        %c0_49 = arith.constant 0 : index
        %c4 = arith.constant 4 : index
        %c0_50 = arith.constant 0 : index
        %64 = vector.load %arg17[%c0_49, %c4, %c0_50] : memref<4x24x128xf32, #tpu.memory_space<vmem>>, vector<4x16x128xf32>
        %c0_51 = arith.constant 0 : index
        %c6 = arith.constant 6 : index
        %c0_52 = arith.constant 0 : index
        %65 = vector.load %arg17[%c0_51, %c6, %c0_52] : memref<4x24x128xf32, #tpu.memory_space<vmem>>, vector<4x16x128xf32>
        %c0_53 = arith.constant 0 : index
        %c8_54 = arith.constant 8 : index
        %c0_55 = arith.constant 0 : index
        %66 = vector.load %arg17[%c0_53, %c8_54, %c0_55] : memref<4x24x128xf32, #tpu.memory_space<vmem>>, vector<4x16x128xf32>
        %67 = tpu.concatenate %64, %65, %66 in 2 : vector<4x16x128xf32>, vector<4x16x128xf32>, vector<4x16x128xf32> -> vector<4x16x384xf32>
        %68 = vector.shape_cast %67 : vector<4x16x384xf32> to vector<64x384xf32>
        %69 = arith.truncf %68 : vector<64x384xf32> to vector<64x384xbf16>
        %cst_56 = arith.constant dense<0.000000e+00> : vector<64x128xf32>
        %70 = tpu.matmul %69, %61, %cst_56 {dimension_numbers = #tpu.dot_dimension_numbers<[1], [0], [0], [1], [0, 0, 1, 1], [], []>} : vector<64x384xbf16>, vector<384x128xbf16>, vector<64x128xf32> -> vector<64x128xf32>
        %71 = vector.shape_cast %70 : vector<64x128xf32> to vector<4x16x128xf32>
        %72 = vector.shape_cast %63 : vector<1x128xf32> to vector<1x1x128xf32>
        %73 = vector.broadcast %72 : vector<1x1x128xf32> to vector<4x16x128xf32>
        %74 = arith.addf %71, %73 : vector<4x16x128xf32>
        %c1_57 = arith.constant 1 : index
        %c0_58 = arith.constant 0 : index
        %c0_59 = arith.constant 0 : index
        %75 = vector.load %arg8[%c1_57, %c0_58, %c0_59] : memref<2x1x128xf32, #tpu.memory_space<vmem>>, vector<1x1x128xf32>
        %76 = vector.shape_cast %75 : vector<1x1x128xf32> to vector<1x128xf32>
        %c1_60 = arith.constant 1 : index
        %c0_61 = arith.constant 0 : index
        %c0_62 = arith.constant 0 : index
        %77 = vector.load %arg9[%c1_60, %c0_61, %c0_62] : memref<2x1x128xf32, #tpu.memory_space<vmem>>, vector<1x1x128xf32>
        %78 = vector.shape_cast %77 : vector<1x1x128xf32> to vector<1x128xf32>
        %cst_63 = arith.constant dense<0.000000e+00> : vector<4x16xf32>
        %79 = vector.multi_reduction <add>, %74, %cst_63 [2] : vector<4x16x128xf32> to vector<4x16xf32>
        %80 = vector.shape_cast %79 : vector<4x16xf32> to vector<4x16x1xf32>
        %cst_64 = arith.constant 3.125000e-02 : f32
        %81 = vector.broadcast %cst_64 : f32 to vector<4x16x1xf32>
        %82 = arith.mulf %80, %81 : vector<4x16x1xf32>
        %83 = arith.mulf %74, %74 : vector<4x16x128xf32>
        %cst_65 = arith.constant dense<0.000000e+00> : vector<4x16xf32>
        %84 = vector.multi_reduction <add>, %83, %cst_65 [2] : vector<4x16x128xf32> to vector<4x16xf32>
        %85 = vector.shape_cast %84 : vector<4x16xf32> to vector<4x16x1xf32>
        %cst_66 = arith.constant 3.125000e-02 : f32
        %86 = vector.broadcast %cst_66 : f32 to vector<4x16x1xf32>
        %87 = arith.mulf %85, %86 : vector<4x16x1xf32>
        %88 = arith.mulf %82, %82 : vector<4x16x1xf32>
        %89 = arith.subf %87, %88 : vector<4x16x1xf32>
        %90 = vector.broadcast %82 : vector<4x16x1xf32> to vector<4x16x128xf32>
        %91 = arith.subf %74, %90 : vector<4x16x128xf32>
        %cst_67 = arith.constant 9.99999993E-9 : f32
        %92 = vector.broadcast %cst_67 : f32 to vector<4x16x1xf32>
        %93 = arith.addf %89, %92 : vector<4x16x1xf32>
        %94 = math.rsqrt %93 : vector<4x16x1xf32>
        %95 = vector.broadcast %94 : vector<4x16x1xf32> to vector<4x16x128xf32>
        %96 = arith.mulf %91, %95 : vector<4x16x128xf32>
        %97 = vector.shape_cast %76 : vector<1x128xf32> to vector<1x1x128xf32>
        %98 = vector.broadcast %97 : vector<1x1x128xf32> to vector<4x16x128xf32>
        %99 = arith.mulf %96, %98 : vector<4x16x128xf32>
        %100 = vector.shape_cast %78 : vector<1x128xf32> to vector<1x1x128xf32>
        %101 = vector.broadcast %100 : vector<1x1x128xf32> to vector<4x16x128xf32>
        %102 = arith.addf %99, %101 : vector<4x16x128xf32>
        %cst_68 = arith.constant 0.000000e+00 : f32
        %103 = vector.broadcast %cst_68 : f32 to vector<4x16x128xf32>
        %104 = arith.maximumf %102, %103 : vector<4x16x128xf32>
        %c0_69 = arith.constant 0 : index
        %c8_70 = arith.constant 8 : index
        %c0_71 = arith.constant 0 : index
        %105 = vector.load %arg17[%c0_69, %c8_70, %c0_71] : memref<4x24x128xf32, #tpu.memory_space<vmem>>, vector<4x16x128xf32>
        tpu.vector_store %arg17[%c0_69, %c8_70, %c0_71], %104 {strides = array<i32>} : memref<4x24x128xf32, #tpu.memory_space<vmem>>, vector<4x16x128xf32>,
        %c1_72 = arith.constant 1 : index
        %c0_73 = arith.constant 0 : index
        %c0_74 = arith.constant 0 : index
        %106 = vector.load %arg10[%c1_72, %c0_73, %c0_74] : memref<2x384x128xbf16, #tpu.memory_space<vmem>>, vector<1x384x128xbf16>
        %107 = vector.shape_cast %106 : vector<1x384x128xbf16> to vector<384x128xbf16>
        %c1_75 = arith.constant 1 : index
        %c0_76 = arith.constant 0 : index
        %c0_77 = arith.constant 0 : index
        %108 = vector.load %arg11[%c1_75, %c0_76, %c0_77] : memref<2x1x128xf32, #tpu.memory_space<vmem>>, vector<1x1x128xf32>
        %109 = vector.shape_cast %108 : vector<1x1x128xf32> to vector<1x128xf32>
        %c0_78 = arith.constant 0 : index
        %c0_79 = arith.constant 0 : index
        %c0_80 = arith.constant 0 : index
        %110 = vector.load %arg17[%c0_78, %c0_79, %c0_80] : memref<4x24x128xf32, #tpu.memory_space<vmem>>, vector<4x16x128xf32>
        %c0_81 = arith.constant 0 : index
        %c4_82 = arith.constant 4 : index
        %c0_83 = arith.constant 0 : index
        %111 = vector.load %arg17[%c0_81, %c4_82, %c0_83] : memref<4x24x128xf32, #tpu.memory_space<vmem>>, vector<4x16x128xf32>
        %c0_84 = arith.constant 0 : index
        %c8_85 = arith.constant 8 : index
        %c0_86 = arith.constant 0 : index
        %112 = vector.load %arg17[%c0_84, %c8_85, %c0_86] : memref<4x24x128xf32, #tpu.memory_space<vmem>>, vector<4x16x128xf32>
        %113 = tpu.concatenate %110, %111, %112 in 2 : vector<4x16x128xf32>, vector<4x16x128xf32>, vector<4x16x128xf32> -> vector<4x16x384xf32>
        %114 = vector.shape_cast %113 : vector<4x16x384xf32> to vector<64x384xf32>
        %115 = arith.truncf %114 : vector<64x384xf32> to vector<64x384xbf16>
        %cst_87 = arith.constant dense<0.000000e+00> : vector<64x128xf32>
        %116 = tpu.matmul %115, %107, %cst_87 {dimension_numbers = #tpu.dot_dimension_numbers<[1], [0], [0], [1], [0, 0, 1, 1], [], []>} : vector<64x384xbf16>, vector<384x128xbf16>, vector<64x128xf32> -> vector<64x128xf32>
        %117 = vector.shape_cast %116 : vector<64x128xf32> to vector<4x16x128xf32>
        %118 = vector.shape_cast %109 : vector<1x128xf32> to vector<1x1x128xf32>
        %119 = vector.broadcast %118 : vector<1x1x128xf32> to vector<4x16x128xf32>
        %120 = arith.addf %117, %119 : vector<4x16x128xf32>
        %c1_88 = arith.constant 1 : index
        %c0_89 = arith.constant 0 : index
        %c0_90 = arith.constant 0 : index
        %121 = vector.load %arg12[%c1_88, %c0_89, %c0_90] : memref<2x1x128xf32, #tpu.memory_space<vmem>>, vector<1x1x128xf32>
        %122 = vector.shape_cast %121 : vector<1x1x128xf32> to vector<1x128xf32>
        %c1_91 = arith.constant 1 : index
        %c0_92 = arith.constant 0 : index
        %c0_93 = arith.constant 0 : index
        %123 = vector.load %arg13[%c1_91, %c0_92, %c0_93] : memref<2x1x128xf32, #tpu.memory_space<vmem>>, vector<1x1x128xf32>
        %124 = vector.shape_cast %123 : vector<1x1x128xf32> to vector<1x128xf32>
        %cst_94 = arith.constant dense<0.000000e+00> : vector<4x16xf32>
        %125 = vector.multi_reduction <add>, %120, %cst_94 [2] : vector<4x16x128xf32> to vector<4x16xf32>
        %126 = vector.shape_cast %125 : vector<4x16xf32> to vector<4x16x1xf32>
        %cst_95 = arith.constant 3.125000e-02 : f32
        %127 = vector.broadcast %cst_95 : f32 to vector<4x16x1xf32>
        %128 = arith.mulf %126, %127 : vector<4x16x1xf32>
        %129 = arith.mulf %120, %120 : vector<4x16x128xf32>
        %cst_96 = arith.constant dense<0.000000e+00> : vector<4x16xf32>
        %130 = vector.multi_reduction <add>, %129, %cst_96 [2] : vector<4x16x128xf32> to vector<4x16xf32>
        %131 = vector.shape_cast %130 : vector<4x16xf32> to vector<4x16x1xf32>
        %cst_97 = arith.constant 3.125000e-02 : f32
        %132 = vector.broadcast %cst_97 : f32 to vector<4x16x1xf32>
        %133 = arith.mulf %131, %132 : vector<4x16x1xf32>
        %134 = arith.mulf %128, %128 : vector<4x16x1xf32>
        %135 = arith.subf %133, %134 : vector<4x16x1xf32>
        %136 = vector.broadcast %128 : vector<4x16x1xf32> to vector<4x16x128xf32>
        %137 = arith.subf %120, %136 : vector<4x16x128xf32>
        %cst_98 = arith.constant 9.99999993E-9 : f32
        %138 = vector.broadcast %cst_98 : f32 to vector<4x16x1xf32>
        %139 = arith.addf %135, %138 : vector<4x16x1xf32>
        %140 = math.rsqrt %139 : vector<4x16x1xf32>
        %141 = vector.broadcast %140 : vector<4x16x1xf32> to vector<4x16x128xf32>
        %142 = arith.mulf %137, %141 : vector<4x16x128xf32>
        %143 = vector.shape_cast %122 : vector<1x128xf32> to vector<1x1x128xf32>
        %144 = vector.broadcast %143 : vector<1x1x128xf32> to vector<4x16x128xf32>
        %145 = arith.mulf %142, %144 : vector<4x16x128xf32>
        %146 = vector.shape_cast %124 : vector<1x128xf32> to vector<1x1x128xf32>
        %147 = vector.broadcast %146 : vector<1x1x128xf32> to vector<4x16x128xf32>
        %148 = arith.addf %145, %147 : vector<4x16x128xf32>
        %cst_99 = arith.constant 0.000000e+00 : f32
        %149 = vector.broadcast %cst_99 : f32 to vector<4x16x128xf32>
        %150 = arith.maximumf %148, %149 : vector<4x16x128xf32>
        %c1_100 = arith.constant 1 : index
        %151 = memref.load %arg4[%c1_100] : memref<2xf32, #tpu.memory_space<smem>>
        %c4_i32_101 = arith.constant 4 : i32
        %152 = arith.muli %arg0, %c4_i32_101 : i32
        %c0_i32_102 = arith.constant 0 : i32
        %153 = arith.addi %152, %c0_i32_102 : i32
        %154 = arith.index_cast %153 : i32 to index
        %c1_103 = arith.constant 1 : index
        %155 = memref.load %arg3[%154, %c1_103] : memref<8x2xf32, #tpu.memory_space<smem>>
        %156 = vector.extract_strided_slice %59 {offsets = [0, 0, 0], sizes = [1, 16, 128], strides = [1, 1, 1]} : vector<4x16x128xf32> to vector<1x16x128xf32>
        %157 = vector.shape_cast %156 : vector<1x16x128xf32> to vector<16x128xf32>
        %158 = arith.mulf %155, %151 : f32
        %159 = vector.extract_strided_slice %150 {offsets = [0, 0, 0], sizes = [1, 16, 128], strides = [1, 1, 1]} : vector<4x16x128xf32> to vector<1x16x128xf32>
        %160 = vector.shape_cast %159 : vector<1x16x128xf32> to vector<16x128xf32>
        %161 = vector.broadcast %158 : f32 to vector<16x128xf32>
        %162 = arith.mulf %161, %160 : vector<16x128xf32>
        %163 = arith.addf %157, %162 : vector<16x128xf32>
        %c0_104 = arith.constant 0 : index
        %c8_105 = arith.constant 8 : index
        %c0_106 = arith.constant 0 : index
        %164 = vector.load %arg17[%c0_104, %c8_105, %c0_106] : memref<4x24x128xf32, #tpu.memory_space<vmem>>, vector<1x16x128xf32>
        %165 = vector.shape_cast %164 : vector<1x16x128xf32> to vector<16x128xf32>
        %166 = vector.shape_cast %163 : vector<16x128xf32> to vector<1x16x128xf32>
        tpu.vector_store %arg17[%c0_104, %c8_105, %c0_106], %166 {strides = array<i32>} : memref<4x24x128xf32, #tpu.memory_space<vmem>>, vector<1x16x128xf32>,
        %c4_i32_107 = arith.constant 4 : i32
        %167 = arith.muli %arg0, %c4_i32_107 : i32
        %c1_i32_108 = arith.constant 1 : i32
        %168 = arith.addi %167, %c1_i32_108 : i32
        %169 = arith.index_cast %168 : i32 to index
        %c1_109 = arith.constant 1 : index
        %170 = memref.load %arg3[%169, %c1_109] : memref<8x2xf32, #tpu.memory_space<smem>>
        %171 = vector.extract_strided_slice %59 {offsets = [1, 0, 0], sizes = [1, 16, 128], strides = [1, 1, 1]} : vector<4x16x128xf32> to vector<1x16x128xf32>
        %172 = vector.shape_cast %171 : vector<1x16x128xf32> to vector<16x128xf32>
        %173 = arith.mulf %170, %151 : f32
        %174 = vector.extract_strided_slice %150 {offsets = [1, 0, 0], sizes = [1, 16, 128], strides = [1, 1, 1]} : vector<4x16x128xf32> to vector<1x16x128xf32>
        %175 = vector.shape_cast %174 : vector<1x16x128xf32> to vector<16x128xf32>
        %176 = vector.broadcast %173 : f32 to vector<16x128xf32>
        %177 = arith.mulf %176, %175 : vector<16x128xf32>
        %178 = arith.addf %172, %177 : vector<16x128xf32>
        %c1_110 = arith.constant 1 : index
        %c8_111 = arith.constant 8 : index
        %c0_112 = arith.constant 0 : index
        %179 = vector.load %arg17[%c1_110, %c8_111, %c0_112] : memref<4x24x128xf32, #tpu.memory_space<vmem>>, vector<1x16x128xf32>
        %180 = vector.shape_cast %179 : vector<1x16x128xf32> to vector<16x128xf32>
        %181 = vector.shape_cast %178 : vector<16x128xf32> to vector<1x16x128xf32>
        tpu.vector_store %arg17[%c1_110, %c8_111, %c0_112], %181 {strides = array<i32>} : memref<4x24x128xf32, #tpu.memory_space<vmem>>, vector<1x16x128xf32>,
        %c4_i32_113 = arith.constant 4 : i32
        %182 = arith.muli %arg0, %c4_i32_113 : i32
        %c2_i32_114 = arith.constant 2 : i32
        %183 = arith.addi %182, %c2_i32_114 : i32
        %184 = arith.index_cast %183 : i32 to index
        %c1_115 = arith.constant 1 : index
        %185 = memref.load %arg3[%184, %c1_115] : memref<8x2xf32, #tpu.memory_space<smem>>
        %186 = vector.extract_strided_slice %59 {offsets = [2, 0, 0], sizes = [1, 16, 128], strides = [1, 1, 1]} : vector<4x16x128xf32> to vector<1x16x128xf32>
        %187 = vector.shape_cast %186 : vector<1x16x128xf32> to vector<16x128xf32>
        %188 = arith.mulf %185, %151 : f32
        %189 = vector.extract_strided_slice %150 {offsets = [2, 0, 0], sizes = [1, 16, 128], strides = [1, 1, 1]} : vector<4x16x128xf32> to vector<1x16x128xf32>
        %190 = vector.shape_cast %189 : vector<1x16x128xf32> to vector<16x128xf32>
        %191 = vector.broadcast %188 : f32 to vector<16x128xf32>
        %192 = arith.mulf %191, %190 : vector<16x128xf32>
        %193 = arith.addf %187, %192 : vector<16x128xf32>
        %c2 = arith.constant 2 : index
        %c8_116 = arith.constant 8 : index
        %c0_117 = arith.constant 0 : index
        %194 = vector.load %arg17[%c2, %c8_116, %c0_117] : memref<4x24x128xf32, #tpu.memory_space<vmem>>, vector<1x16x128xf32>
        %195 = vector.shape_cast %194 : vector<1x16x128xf32> to vector<16x128xf32>
        %196 = vector.shape_cast %193 : vector<16x128xf32> to vector<1x16x128xf32>
        tpu.vector_store %arg17[%c2, %c8_116, %c0_117], %196 {strides = array<i32>} : memref<4x24x128xf32, #tpu.memory_space<vmem>>, vector<1x16x128xf32>,
        %c4_i32_118 = arith.constant 4 : i32
        %197 = arith.muli %arg0, %c4_i32_118 : i32
        %c3_i32_119 = arith.constant 3 : i32
        %198 = arith.addi %197, %c3_i32_119 : i32
        %199 = arith.index_cast %198 : i32 to index
        %c1_120 = arith.constant 1 : index
        %200 = memref.load %arg3[%199, %c1_120] : memref<8x2xf32, #tpu.memory_space<smem>>
        %201 = vector.extract_strided_slice %59 {offsets = [3, 0, 0], sizes = [1, 16, 128], strides = [1, 1, 1]} : vector<4x16x128xf32> to vector<1x16x128xf32>
        %202 = vector.shape_cast %201 : vector<1x16x128xf32> to vector<16x128xf32>
        %203 = arith.mulf %200, %151 : f32
        %204 = vector.extract_strided_slice %150 {offsets = [3, 0, 0], sizes = [1, 16, 128], strides = [1, 1, 1]} : vector<4x16x128xf32> to vector<1x16x128xf32>
        %205 = vector.shape_cast %204 : vector<1x16x128xf32> to vector<16x128xf32>
        %206 = vector.broadcast %203 : f32 to vector<16x128xf32>
        %207 = arith.mulf %206, %205 : vector<16x128xf32>
        %208 = arith.addf %202, %207 : vector<16x128xf32>
        %c3 = arith.constant 3 : index
        %c8_121 = arith.constant 8 : index
        %c0_122 = arith.constant 0 : index
        %209 = vector.load %arg17[%c3, %c8_121, %c0_122] : memref<4x24x128xf32, #tpu.memory_space<vmem>>, vector<1x16x128xf32>
        %210 = vector.shape_cast %209 : vector<1x16x128xf32> to vector<16x128xf32>
        %211 = vector.shape_cast %208 : vector<16x128xf32> to vector<1x16x128xf32>
        tpu.vector_store %arg17[%c3, %c8_121, %c0_122], %211 {strides = array<i32>} : memref<4x24x128xf32, #tpu.memory_space<vmem>>, vector<1x16x128xf32>,
      } else {
      }
    } else {
    }
    %c0 = arith.constant 0 : index
    %c8 = arith.constant 8 : index
    %c0_1 = arith.constant 0 : index
    %3 = vector.load %arg17[%c0, %c8, %c0_1] : memref<4x24x128xf32, #tpu.memory_space<vmem>>, vector<4x16x128xf32>
    %4 = vector.shape_cast %3 : vector<4x16x128xf32> to vector<64x128xf32>
    %5 = arith.truncf %4 : vector<64x128xf32> to vector<64x128xbf16>
    %c0_2 = arith.constant 0 : index
    %c0_3 = arith.constant 0 : index
    %6 = vector.load %arg14[%c0_2, %c0_3] : memref<128x128xbf16, #tpu.memory_space<vmem>>, vector<128x128xbf16>
    %cst = arith.constant dense<0.000000e+00> : vector<64x128xf32>
    %7 = tpu.matmul %5, %6, %cst {dimension_numbers = #tpu.dot_dimension_numbers<[1], [0], [0], [1], [0, 0, 1, 1], [], []>} : vector<64x128xbf16>, vector<128x128xbf16>, vector<64x128xf32> -> vector<64x128xf32>
    %c0_4 = arith.constant 0 : index
    %c0_5 = arith.constant 0 : index
    %8 = vector.load %arg15[%c0_4, %c0_5] : memref<1x128xf32, #tpu.memory_space<vmem>>, vector<1x128xf32>
    %9 = vector.broadcast %8 : vector<1x128xf32> to vector<64x128xf32>
    %10 = arith.addf %7, %9 : vector<64x128xf32>
    %11 = vector.shape_cast %10 : vector<64x128xf32> to vector<4x16x128xf32>
    %c0_6 = arith.constant 0 : index
    %c0_7 = arith.constant 0 : index
    %c0_8 = arith.constant 0 : index
    %12 = vector.load %arg16[%c0_6, %c0_7, %c0_8] : memref<4x16x128xf32, #tpu.memory_space<vmem>>, vector<4x16x128xf32>
    tpu.vector_store %arg16[%c0_6, %c0_7, %c0_8], %11 {strides = array<i32>} : memref<4x16x128xf32, #tpu.memory_space<vmem>>, vector<4x16x128xf32>,
    return
  }
  func.func @transform_0(%arg0: i32, %arg1: i32, %arg2: memref<8x2xi32, #tpu.memory_space<smem>>, %arg3: memref<8x2xf32, #tpu.memory_space<smem>>, %arg4: memref<2xf32, #tpu.memory_space<smem>>) -> (i32, i32, i32) {
    %c0_i32 = arith.constant 0 : i32
    %c0_i32_0 = arith.constant 0 : i32
    %c0_i32_1 = arith.constant 0 : i32
    return %arg0, %c0_i32, %c0_i32_0 : i32, i32, i32
  }
  func.func @transform_1(%arg0: i32, %arg1: i32, %arg2: memref<8x2xi32, #tpu.memory_space<smem>>, %arg3: memref<8x2xf32, #tpu.memory_space<smem>>, %arg4: memref<2xf32, #tpu.memory_space<smem>>) -> (i32, i32, i32) {
    %c0_i32 = arith.constant 0 : i32
    %c0_i32_0 = arith.constant 0 : i32
    %c0_i32_1 = arith.constant 0 : i32
    %c0_i32_2 = arith.constant 0 : i32
    return %c0_i32, %c0_i32_0, %c0_i32_1 : i32, i32, i32
  }
  func.func @transform_2(%arg0: i32, %arg1: i32, %arg2: memref<8x2xi32, #tpu.memory_space<smem>>, %arg3: memref<8x2xf32, #tpu.memory_space<smem>>, %arg4: memref<2xf32, #tpu.memory_space<smem>>) -> (i32, i32, i32) {
    %c0_i32 = arith.constant 0 : i32
    %c0_i32_0 = arith.constant 0 : i32
    %c0_i32_1 = arith.constant 0 : i32
    %c0_i32_2 = arith.constant 0 : i32
    return %c0_i32, %c0_i32_0, %c0_i32_1 : i32, i32, i32
  }
  func.func @transform_3(%arg0: i32, %arg1: i32, %arg2: memref<8x2xi32, #tpu.memory_space<smem>>, %arg3: memref<8x2xf32, #tpu.memory_space<smem>>, %arg4: memref<2xf32, #tpu.memory_space<smem>>) -> (i32, i32, i32) {
    %c0_i32 = arith.constant 0 : i32
    %c0_i32_0 = arith.constant 0 : i32
    %c0_i32_1 = arith.constant 0 : i32
    %c0_i32_2 = arith.constant 0 : i32
    return %c0_i32, %c0_i32_0, %c0_i32_1 : i32, i32, i32
  }
  func.func @transform_4(%arg0: i32, %arg1: i32, %arg2: memref<8x2xi32, #tpu.memory_space<smem>>, %arg3: memref<8x2xf32, #tpu.memory_space<smem>>, %arg4: memref<2xf32, #tpu.memory_space<smem>>) -> (i32, i32, i32) {
    %c0_i32 = arith.constant 0 : i32
    %c0_i32_0 = arith.constant 0 : i32
    %c0_i32_1 = arith.constant 0 : i32
    %c0_i32_2 = arith.constant 0 : i32
    return %c0_i32, %c0_i32_0, %c0_i32_1 : i32, i32, i32
  }
  func.func @transform_5(%arg0: i32, %arg1: i32, %arg2: memref<8x2xi32, #tpu.memory_space<smem>>, %arg3: memref<8x2xf32, #tpu.memory_space<smem>>, %arg4: memref<2xf32, #tpu.memory_space<smem>>) -> (i32, i32, i32) {
    %c0_i32 = arith.constant 0 : i32
    %c0_i32_0 = arith.constant 0 : i32
    %c0_i32_1 = arith.constant 0 : i32
    %c0_i32_2 = arith.constant 0 : i32
    return %c0_i32, %c0_i32_0, %c0_i32_1 : i32, i32, i32
  }
  func.func @transform_6(%arg0: i32, %arg1: i32, %arg2: memref<8x2xi32, #tpu.memory_space<smem>>, %arg3: memref<8x2xf32, #tpu.memory_space<smem>>, %arg4: memref<2xf32, #tpu.memory_space<smem>>) -> (i32, i32, i32) {
    %c0_i32 = arith.constant 0 : i32
    %c0_i32_0 = arith.constant 0 : i32
    %c0_i32_1 = arith.constant 0 : i32
    %c0_i32_2 = arith.constant 0 : i32
    return %c0_i32, %c0_i32_0, %c0_i32_1 : i32, i32, i32
  }
  func.func @transform_7(%arg0: i32, %arg1: i32, %arg2: memref<8x2xi32, #tpu.memory_space<smem>>, %arg3: memref<8x2xf32, #tpu.memory_space<smem>>, %arg4: memref<2xf32, #tpu.memory_space<smem>>) -> (i32, i32, i32) {
    %c0_i32 = arith.constant 0 : i32
    %c0_i32_0 = arith.constant 0 : i32
    %c0_i32_1 = arith.constant 0 : i32
    %c0_i32_2 = arith.constant 0 : i32
    return %c0_i32, %c0_i32_0, %c0_i32_1 : i32, i32, i32
  }
  func.func @transform_8(%arg0: i32, %arg1: i32, %arg2: memref<8x2xi32, #tpu.memory_space<smem>>, %arg3: memref<8x2xf32, #tpu.memory_space<smem>>, %arg4: memref<2xf32, #tpu.memory_space<smem>>) -> (i32, i32, i32) {
    %c0_i32 = arith.constant 0 : i32
    %c0_i32_0 = arith.constant 0 : i32
    %c0_i32_1 = arith.constant 0 : i32
    %c0_i32_2 = arith.constant 0 : i32
    return %c0_i32, %c0_i32_0, %c0_i32_1 : i32, i32, i32
  }
  func.func @transform_9(%arg0: i32, %arg1: i32, %arg2: memref<8x2xi32, #tpu.memory_space<smem>>, %arg3: memref<8x2xf32, #tpu.memory_space<smem>>, %arg4: memref<2xf32, #tpu.memory_space<smem>>) -> (i32, i32) {
    %c0_i32 = arith.constant 0 : i32
    %c0_i32_0 = arith.constant 0 : i32
    return %c0_i32, %arg1 : i32, i32
  }
  func.func @transform_10(%arg0: i32, %arg1: i32, %arg2: memref<8x2xi32, #tpu.memory_space<smem>>, %arg3: memref<8x2xf32, #tpu.memory_space<smem>>, %arg4: memref<2xf32, #tpu.memory_space<smem>>) -> (i32, i32) {
    %c0_i32 = arith.constant 0 : i32
    %c0_i32_0 = arith.constant 0 : i32
    return %c0_i32, %arg1 : i32, i32
  }
  func.func @transform_11(%arg0: i32, %arg1: i32, %arg2: memref<8x2xi32, #tpu.memory_space<smem>>, %arg3: memref<8x2xf32, #tpu.memory_space<smem>>, %arg4: memref<2xf32, #tpu.memory_space<smem>>) -> (i32, i32, i32) {
    %c0_i32 = arith.constant 0 : i32
    %c0_i32_0 = arith.constant 0 : i32
    return %arg0, %c0_i32, %arg1 : i32, i32, i32
  }
}

</mosaic_0001>

<llo_original>
// kernel: tpu_custom_call.1
$region0: #{tpu_custom_call.1}
  #allocation0 [shape = 'u32[]', space=smem, size = 0x4, offset = 0x4, fixed_abs, tag = 'smem constant byte address 0x4 - core index']
  #allocation1 [shape = 'u32[144,128]{1,0:T(1,128)}', space=vmem, size = 0x12000, scoped, tag = 'internal scratch']
  #allocation2 [shape = 'f32[4,24,128]{2,1,0:T(8,128)}', space=vmem, size = 0xc000, scoped, tag = 'scratch operand']
  #allocation3 [shape = 's32[1]{0}', space=sflag, size = 0x4, scoped, tag = 'scoped memory for tpu_custom_call.1']
  #allocation4 [shape = 'u8[4096]{0}', space=smem, size = 0x1000, scoped, tag = 'prefetched SMEM operand 0']
  #allocation5 [shape = 'u8[4096]{0}', space=smem, size = 0x1000, scoped, tag = 'prefetched SMEM operand 1']
  #allocation6 [shape = 'u8[512]{0}', space=smem, size = 0x200, scoped, tag = 'prefetched SMEM operand 2']
  %s0 = inlined_call_operand.vmem [shape: s32[8,2], index: 0, kind: input, shape index: {}]
  %s1 = inlined_call_operand.vmem [shape: f32[8,2], index: 1, kind: input, shape index: {}]
  %s2 = inlined_call_operand.vmem [shape: f32[2], index: 2, kind: input, shape index: {}]
  %s3 = inlined_call_operand.hbm [shape: f32[8,16,128], index: 3, kind: input, shape index: {}]
  %s4 = inlined_call_operand.hbm [shape: bf16[2,384,128], index: 4, kind: input, shape index: {}]
  %s5 = inlined_call_operand.hbm [shape: f32[2,1,128], index: 5, kind: input, shape index: {}]
  %s6 = inlined_call_operand.hbm [shape: f32[2,1,128], index: 6, kind: input, shape index: {}]
  %s7 = inlined_call_operand.hbm [shape: f32[2,1,128], index: 7, kind: input, shape index: {}]
  %s8 = inlined_call_operand.hbm [shape: bf16[2,384,128], index: 8, kind: input, shape index: {}]
  %s9 = inlined_call_operand.hbm [shape: f32[2,1,128], index: 9, kind: input, shape index: {}]
  %s10 = inlined_call_operand.hbm [shape: f32[2,1,128], index: 10, kind: input, shape index: {}]
  %s11 = inlined_call_operand.hbm [shape: f32[2,1,128], index: 11, kind: input, shape index: {}]
  %s12 = inlined_call_operand.vmem [shape: bf16[128,128], index: 12, kind: input, shape index: {}]
  %s13 = inlined_call_operand.vmem [shape: f32[1,128], index: 13, kind: input, shape index: {}]
  %s14 = inlined_call_operand.hbm [shape: f32[8,16,128], index: 14, kind: output, shape index: {}]
  %s15 = sld [smem:[#allocation0]]
  $region125: #{tpu_custom_call.1} parent=0
    _
  %s17 = ssub.s32 1, %s15
  %s18 = scalar_select 0, %s17, %s15
  %s19 = sshll.u32 %s0, 4
  %s20 = int_to_ptr.vmem [resolvable:$true] %s19
  %22 = dma.vmem_to_smem %s20, 128, [#allocation4], [#allocation3]
  %s23 = sshll.u32 %s1, 4
  %s24 = int_to_ptr.vmem [resolvable:$true] %s23
  %26 = dma.vmem_to_smem %s24, 128, [#allocation5], [#allocation3]
  %s27 = sshll.u32 %s2, 4
  %s28 = int_to_ptr.vmem [resolvable:$true] %s27
  %30 = dma.vmem_to_smem %s28, 16, [#allocation6], [#allocation3]
  %31 = dma.done [#allocation3], 272
  %32 = sfence
  $region1: #{tpu_custom_call.1} parent=0
    #allocation7 [shape = 'u8[65536]{0}', space=vmem, size = 0x10000, scoped, tag = 'input window, operand 3']
    #allocation8 [shape = 's32[2]{0}', space=sflag, size = 0x8, scoped, tag = 'scoped memory for tpu_custom_call.1']
    #allocation9 [shape = 's32[2]{0}', space=sflag, size = 0x8, scoped, tag = 'scoped memory for tpu_custom_call.1']
    #allocation10 [shape = 'u8[196608]{0}', space=vmem, size = 0x30000, scoped, tag = 'input window, operand 4, single buffered']
    #allocation11 [shape = 's32[1]{0}', space=sflag, size = 0x4, scoped, tag = 'scoped memory for tpu_custom_call.1']
    #allocation12 [shape = 'u8[1024]{0}', space=vmem, size = 0x400, scoped, tag = 'input window, operand 5, single buffered']
    #allocation13 [shape = 'u8[1024]{0}', space=vmem, size = 0x400, scoped, tag = 'input window, operand 6, single buffered']
    #allocation14 [shape = 's32[1]{0}', space=sflag, size = 0x4, scoped, tag = 'scoped memory for tpu_custom_call.1']
    #allocation15 [shape = 'u8[1024]{0}', space=vmem, size = 0x400, scoped, tag = 'input window, operand 7, single buffered']
    #allocation16 [shape = 'u8[196608]{0}', space=vmem, size = 0x30000, scoped, tag = 'input window, operand 8, single buffered']
    #allocation17 [shape = 's32[1]{0}', space=sflag, size = 0x4, scoped, tag = 'scoped memory for tpu_custom_call.1']
    #allocation18 [shape = 'u8[1024]{0}', space=vmem, size = 0x400, scoped, tag = 'input window, operand 9, single buffered']
    #allocation19 [shape = 'u8[1024]{0}', space=vmem, size = 0x400, scoped, tag = 'input window, operand 10, single buffered']
    #allocation20 [shape = 's32[1]{0}', space=sflag, size = 0x4, scoped, tag = 'scoped memory for tpu_custom_call.1']
    #allocation21 [shape = 'u8[1024]{0}', space=vmem, size = 0x400, scoped, tag = 'input window, operand 11, single buffered']
    #allocation22 [shape = 'u8[65536]{0}', space=vmem, size = 0x10000, scoped, tag = 'output window, operand 0']
    %33 = vsyncpa [#allocation8], 0
    %s34 = scalar_lea.sflag [#allocation8], 1
    %35 = vsyncpa %s34, 0
    %36 = vsyncpa [#allocation11], 0
    %37 = vsyncpa [#allocation14], 0
    %38 = vsyncpa [#allocation17], 0
    %39 = vsyncpa [#allocation20], 0
    %40 = vsyncpa [#allocation9], 0
    %s41 = scalar_lea.sflag [#allocation9], 1
    %42 = vsyncpa %s41, 0
    loop: start=0, step=1, limit=4
    $region2: #{tpu_custom_call.1} parent=1 // loop_pre_header
      _
    $region3: #{tpu_custom_call.1} parent=1 // loop_header
      %s44 = sphi 0, %s48
      %p45 = scmp.ge.s32.totalorder %s44, 4
      %s51 = sphi 0, %s63
      %s52 = sphi 0, %s59
      %s53 = sphi 0, %s51
      %s54 = sphi 0, %s52
      %s55 = sphi 0, %s53
      %s56 = sphi 0, %s54
      %s66 = sphi 0, %s68
      %s69 = sphi 0, %s66
      %s70 = sphi 0, %s69
      %s86 = sphi 0, %s70
      %s90 = sphi 0, %s90
      %s92 = sphi 0, %s90
      %s93 = sphi 0, %s92
      %s107 = sphi 0, %s93
      %s111 = sphi 0, %s111
      %s113 = sphi 0, %s111
      %s114 = sphi 0, %s113
      %s128 = sphi 0, %s114
      %s132 = sphi 0, %s132
      %s134 = sphi 0, %s132
      %s135 = sphi 0, %s134
      %s149 = sphi 0, %s135
      %s153 = sphi 0, %s153
      %s155 = sphi 0, %s153
      %s156 = sphi 0, %s155
      %s170 = sphi 0, %s156
      %s174 = sphi 0, %s174
      %s176 = sphi 0, %s174
      %s177 = sphi 0, %s176
      %s191 = sphi 0, %s177
      %s195 = sphi 0, %s195
      %s197 = sphi 0, %s195
      %s198 = sphi 0, %s197
      %s212 = sphi 0, %s198
      %s216 = sphi 0, %s216
      %s218 = sphi 0, %s216
      %s219 = sphi 0, %s218
      %s233 = sphi 0, %s219
      %s237 = sphi 0, %s237
      %s239 = sphi 0, %s237
      %s240 = sphi 0, %s239
      %s254 = sphi 0, %s240
      %s260 = sphi 0, %s262
      %s263 = sphi 0, %s260
      %s264 = sphi 0, %s263
      %s280 = sphi 0, %s264
      %s286 = sphi 0, %s288
      %s289 = sphi 0, %s286
      %s290 = sphi 0, %s289
      %s306 = sphi 0, %s290
      %s314 = sphi 0, %s316
      %s317 = sphi 0, %s314
      %s318 = sphi 0, %s317
      %s334 = sphi 0, %s318
    $region4: #{tpu_custom_call.1} parent=1 // loop_header_branch
      %47 = sbr.rel (%p45) target = $region8
    $region5: #{tpu_custom_call.1} parent=1 // loop_body
      %s49 = ssub.s32 %s44, 1
      %s50 = ssub.s32 %s44, 2
      %s57 = sadd.s32 1, %s52
      %p58 = scmp.ge.s32.totalorder %s57, 1
      %s59 = scalar_select %p58, 0, %s57
      %s60 = sadd.s32 1, %s51
      %s61 = scalar_select %p58, %s60, %s51
      %p62 = scmp.ge.s32.totalorder %s61, 2
      %s63 = scalar_select %p62, 0, %s61
      %s64 = ssub.s32 %s51, %s63
      %p65 = scmp.eq.s32.totalorder %s64, 0
      %s67 = sadd.s32 %s66, 1
      %s68 = scalar_select %p65, %s66, %s67
      %p71 = pneg %p65
      %p72 = scmp.eq.s32.totalorder %s44, 1
      %p73 = por %p71, %p72
      %p74 = scmp.ne.s32.totalorder %s66, %s69
      %p75 = scmp.eq.s32.totalorder %s44, 0
      %p76 = por %p74, %p75
      %p77 = scmp.ne.s32.totalorder %s66, %s69
      %p78 = scmp.eq.s32.totalorder %s49, 1
      %p79 = por %p77, %p78
      %p80 = scmp.ne.s32.totalorder %s69, %s70
      %p81 = scmp.eq.s32.totalorder %s49, 0
      %p82 = por %p80, %p81
      %p83 = scmp.ne.s32.totalorder %s69, %s70
      %p84 = scmp.eq.s32.totalorder %s50, 1
      %p85 = por %p83, %p84
      %p87 = scmp.ne.s32.totalorder %s70, %s86
      %p88 = scmp.eq.s32.totalorder %s50, 0
      %p89 = por %p87, %p88
      %s91 = sadd.s32 %s90, 1
      %p94 = scmp.eq.s32.totalorder %s44, 1
      %p95 = scmp.ne.s32.totalorder %s90, %s92
      %p96 = scmp.eq.s32.totalorder %s44, 0
      %p97 = por %p95, %p96
      %p98 = scmp.ne.s32.totalorder %s90, %s92
      %p99 = scmp.eq.s32.totalorder %s49, 1
      %p100 = por %p98, %p99
      %p101 = scmp.ne.s32.totalorder %s92, %s93
      %p102 = scmp.eq.s32.totalorder %s49, 0
      %p103 = por %p101, %p102
      %p104 = scmp.ne.s32.totalorder %s92, %s93
      %p105 = scmp.eq.s32.totalorder %s50, 1
      %p106 = por %p104, %p105
      %p108 = scmp.ne.s32.totalorder %s93, %s107
      %p109 = scmp.eq.s32.totalorder %s50, 0
      %p110 = por %p108, %p109
      %s112 = sadd.s32 %s111, 1
      %p115 = scmp.eq.s32.totalorder %s44, 1
      %p116 = scmp.ne.s32.totalorder %s111, %s113
      %p117 = scmp.eq.s32.totalorder %s44, 0
      %p118 = por %p116, %p117
      %p119 = scmp.ne.s32.totalorder %s111, %s113
      %p120 = scmp.eq.s32.totalorder %s49, 1
      %p121 = por %p119, %p120
      %p122 = scmp.ne.s32.totalorder %s113, %s114
      %p123 = scmp.eq.s32.totalorder %s49, 0
      %p124 = por %p122, %p123
      %p125 = scmp.ne.s32.totalorder %s113, %s114
      %p126 = scmp.eq.s32.totalorder %s50, 1
      %p127 = por %p125, %p126
      %p129 = scmp.ne.s32.totalorder %s114, %s128
      %p130 = scmp.eq.s32.totalorder %s50, 0
      %p131 = por %p129, %p130
      %s133 = sadd.s32 %s132, 1
      %p136 = scmp.eq.s32.totalorder %s44, 1
      %p137 = scmp.ne.s32.totalorder %s132, %s134
      %p138 = scmp.eq.s32.totalorder %s44, 0
      %p139 = por %p137, %p138
      %p140 = scmp.ne.s32.totalorder %s132, %s134
      %p141 = scmp.eq.s32.totalorder %s49, 1
      %p142 = por %p140, %p141
      %p143 = scmp.ne.s32.totalorder %s134, %s135
      %p144 = scmp.eq.s32.totalorder %s49, 0
      %p145 = por %p143, %p144
      %p146 = scmp.ne.s32.totalorder %s134, %s135
      %p147 = scmp.eq.s32.totalorder %s50, 1
      %p148 = por %p146, %p147
      %p150 = scmp.ne.s32.totalorder %s135, %s149
      %p151 = scmp.eq.s32.totalorder %s50, 0
      %p152 = por %p150, %p151
      %s154 = sadd.s32 %s153, 1
      %p157 = scmp.eq.s32.totalorder %s44, 1
      %p158 = scmp.ne.s32.totalorder %s153, %s155
      %p159 = scmp.eq.s32.totalorder %s44, 0
      %p160 = por %p158, %p159
      %p161 = scmp.ne.s32.totalorder %s153, %s155
      %p162 = scmp.eq.s32.totalorder %s49, 1
      %p163 = por %p161, %p162
      %p164 = scmp.ne.s32.totalorder %s155, %s156
      %p165 = scmp.eq.s32.totalorder %s49, 0
      %p166 = por %p164, %p165
      %p167 = scmp.ne.s32.totalorder %s155, %s156
      %p168 = scmp.eq.s32.totalorder %s50, 1
      %p169 = por %p167, %p168
      %p171 = scmp.ne.s32.totalorder %s156, %s170
      %p172 = scmp.eq.s32.totalorder %s50, 0
      %p173 = por %p171, %p172
      %s175 = sadd.s32 %s174, 1
      %p178 = scmp.eq.s32.totalorder %s44, 1
      %p179 = scmp.ne.s32.totalorder %s174, %s176
      %p180 = scmp.eq.s32.totalorder %s44, 0
      %p181 = por %p179, %p180
      %p182 = scmp.ne.s32.totalorder %s174, %s176
      %p183 = scmp.eq.s32.totalorder %s49, 1
      %p184 = por %p182, %p183
      %p185 = scmp.ne.s32.totalorder %s176, %s177
      %p186 = scmp.eq.s32.totalorder %s49, 0
      %p187 = por %p185, %p186
      %p188 = scmp.ne.s32.totalorder %s176, %s177
      %p189 = scmp.eq.s32.totalorder %s50, 1
      %p190 = por %p188, %p189
      %p192 = scmp.ne.s32.totalorder %s177, %s191
      %p193 = scmp.eq.s32.totalorder %s50, 0
      %p194 = por %p192, %p193
      %s196 = sadd.s32 %s195, 1
      %p199 = scmp.eq.s32.totalorder %s44, 1
      %p200 = scmp.ne.s32.totalorder %s195, %s197
      %p201 = scmp.eq.s32.totalorder %s44, 0
      %p202 = por %p200, %p201
      %p203 = scmp.ne.s32.totalorder %s195, %s197
      %p204 = scmp.eq.s32.totalorder %s49, 1
      %p205 = por %p203, %p204
      %p206 = scmp.ne.s32.totalorder %s197, %s198
      %p207 = scmp.eq.s32.totalorder %s49, 0
      %p208 = por %p206, %p207
      %p209 = scmp.ne.s32.totalorder %s197, %s198
      %p210 = scmp.eq.s32.totalorder %s50, 1
      %p211 = por %p209, %p210
      %p213 = scmp.ne.s32.totalorder %s198, %s212
      %p214 = scmp.eq.s32.totalorder %s50, 0
      %p215 = por %p213, %p214
      %s217 = sadd.s32 %s216, 1
      %p220 = scmp.eq.s32.totalorder %s44, 1
      %p221 = scmp.ne.s32.totalorder %s216, %s218
      %p222 = scmp.eq.s32.totalorder %s44, 0
      %p223 = por %p221, %p222
      %p224 = scmp.ne.s32.totalorder %s216, %s218
      %p225 = scmp.eq.s32.totalorder %s49, 1
      %p226 = por %p224, %p225
      %p227 = scmp.ne.s32.totalorder %s218, %s219
      %p228 = scmp.eq.s32.totalorder %s49, 0
      %p229 = por %p227, %p228
      %p230 = scmp.ne.s32.totalorder %s218, %s219
      %p231 = scmp.eq.s32.totalorder %s50, 1
      %p232 = por %p230, %p231
      %p234 = scmp.ne.s32.totalorder %s219, %s233
      %p235 = scmp.eq.s32.totalorder %s50, 0
      %p236 = por %p234, %p235
      %s238 = sadd.s32 %s237, 1
      %p241 = scmp.eq.s32.totalorder %s44, 1
      %p242 = scmp.ne.s32.totalorder %s237, %s239
      %p243 = scmp.eq.s32.totalorder %s44, 0
      %p244 = por %p242, %p243
      %p245 = scmp.ne.s32.totalorder %s237, %s239
      %p246 = scmp.eq.s32.totalorder %s49, 1
      %p247 = por %p245, %p246
      %p248 = scmp.ne.s32.totalorder %s239, %s240
      %p249 = scmp.eq.s32.totalorder %s49, 0
      %p250 = por %p248, %p249
      %p251 = scmp.ne.s32.totalorder %s239, %s240
      %p252 = scmp.eq.s32.totalorder %s50, 1
      %p253 = por %p251, %p252
      %p255 = scmp.ne.s32.totalorder %s240, %s254
      %p256 = scmp.eq.s32.totalorder %s50, 0
      %p257 = por %p255, %p256
      %s258 = ssub.s32 %s52, %s59
      %p259 = scmp.eq.s32.totalorder %s258, 0
      %s261 = sadd.s32 %s260, 1
      %s262 = scalar_select %p259, %s260, %s261
      %p265 = pneg %p259
      %p266 = scmp.eq.s32.totalorder %s44, 1
      %p267 = por %p265, %p266
      %p268 = scmp.ne.s32.totalorder %s260, %s263
      %p269 = scmp.eq.s32.totalorder %s44, 0
      %p270 = por %p268, %p269
      %p271 = scmp.ne.s32.totalorder %s260, %s263
      %p272 = scmp.eq.s32.totalorder %s49, 1
      %p273 = por %p271, %p272
      %p274 = scmp.ne.s32.totalorder %s263, %s264
      %p275 = scmp.eq.s32.totalorder %s49, 0
      %p276 = por %p274, %p275
      %p277 = scmp.ne.s32.totalorder %s263, %s264
      %p278 = scmp.eq.s32.totalorder %s50, 1
      %p279 = por %p277, %p278
      %p281 = scmp.ne.s32.totalorder %s264, %s280
      %p282 = scmp.eq.s32.totalorder %s50, 0
      %p283 = por %p281, %p282
      %s284 = ssub.s32 %s52, %s59
      %p285 = scmp.eq.s32.totalorder %s284, 0
      %s287 = sadd.s32 %s286, 1
      %s288 = scalar_select %p285, %s286, %s287
      %p291 = pneg %p285
      %p292 = scmp.eq.s32.totalorder %s44, 1
      %p293 = por %p291, %p292
      %p294 = scmp.ne.s32.totalorder %s286, %s289
      %p295 = scmp.eq.s32.totalorder %s44, 0
      %p296 = por %p294, %p295
      %p297 = scmp.ne.s32.totalorder %s286, %s289
      %p298 = scmp.eq.s32.totalorder %s49, 1
      %p299 = por %p297, %p298
      %p300 = scmp.ne.s32.totalorder %s289, %s290
      %p301 = scmp.eq.s32.totalorder %s49, 0
      %p302 = por %p300, %p301
      %p303 = scmp.ne.s32.totalorder %s289, %s290
      %p304 = scmp.eq.s32.totalorder %s50, 1
      %p305 = por %p303, %p304
      %p307 = scmp.ne.s32.totalorder %s290, %s306
      %p308 = scmp.eq.s32.totalorder %s50, 0
      %p309 = por %p307, %p308
      %s310 = ssub.s32 %s51, %s63
      %s311 = ssub.s32 %s52, %s59
      %s312 = sor.u32 %s310, %s311
      %p313 = scmp.eq.s32.totalorder %s312, 0
      %s315 = sadd.s32 %s314, 1
      %s316 = scalar_select %p313, %s314, %s315
      %p319 = pneg %p313
      %p320 = scmp.eq.s32.totalorder %s44, 1
      %p321 = por %p319, %p320
      %p322 = scmp.ne.s32.totalorder %s314, %s317
      %p323 = scmp.eq.s32.totalorder %s44, 0
      %p324 = por %p322, %p323
      %p325 = scmp.ne.s32.totalorder %s314, %s317
      %p326 = scmp.eq.s32.totalorder %s49, 1
      %p327 = por %p325, %p326
      %p328 = scmp.ne.s32.totalorder %s317, %s318
      %p329 = scmp.eq.s32.totalorder %s49, 0
      %p330 = por %p328, %p329
      %p331 = scmp.ne.s32.totalorder %s317, %s318
      %p332 = scmp.eq.s32.totalorder %s50, 1
      %p333 = por %p331, %p332
      %p335 = scmp.ne.s32.totalorder %s318, %s334
      %p336 = scmp.eq.s32.totalorder %s50, 0
      %p337 = por %p335, %p336
      %p338 = scmp.le.s32.totalorder 1, %s44
      %p339 = scmp.lt.s32.totalorder %s44, 3
      %p340 = pnand %p338, %p339
      %p341 = pneg %p340
      // Predicated region
      $region9: #{tpu_custom_call.1} parent=5 // pred_check
        _
      $region10: #{tpu_custom_call.1} parent=5 // pred_check_branch
        %343 = sbr.rel (%p340) target = $region12
      $region11: #{tpu_custom_call.1} parent=5 // pred_region
        %s344 = ssub.s32 %s44, 1
        // Predicated region
        $region13: #{tpu_custom_call.1} parent=11 // pred_check
          %p345 = pneg %p103
        $region14: #{tpu_custom_call.1} parent=11 // pred_check_branch
          %347 = sbr.rel (%p345) target = $region16
        $region15: #{tpu_custom_call.1} parent=11 // pred_region
          %s349 = ssub.s32 6144, 6144
          %350 = vsyncadd [#allocation11], %s349
          %s351 = sshll.u32 [#allocation10], 4
          %s352 = int_to_ptr.vmem [resolvable:$true] %s351
          %357 = dma.hbm_to_vmem [thread:$0]  %s4, 6144, %s352, [#allocation11], 64, 64, 4
        $region16: #{tpu_custom_call.1} parent=11 // pred_fallthru
          _
        // Predicated region
        $region17: #{tpu_custom_call.1} parent=11 // pred_check
          %p358 = pneg %p124
        $region18: #{tpu_custom_call.1} parent=11 // pred_check_branch
          %360 = sbr.rel (%p358) target = $region20
        $region19: #{tpu_custom_call.1} parent=11 // pred_region
          %s362 = ssub.s32 32, 32
          %363 = vsyncadd [#allocation11], %s362
          %s364 = sshll.u32 [#allocation12], 4
          %s365 = int_to_ptr.vmem [resolvable:$true] %s364
          %370 = dma.hbm_to_vmem [thread:$0]  %s5, 32, %s365, [#allocation11], 16, 16, 1
        $region20: #{tpu_custom_call.1} parent=11 // pred_fallthru
          _
        // Predicated region
        $region21: #{tpu_custom_call.1} parent=11 // pred_check
          %p371 = pneg %p145
        $region22: #{tpu_custom_call.1} parent=11 // pred_check_branch
          %373 = sbr.rel (%p371) target = $region24
        $region23: #{tpu_custom_call.1} parent=11 // pred_region
          %s375 = ssub.s32 32, 32
          %376 = vsyncadd [#allocation14], %s375
          %s377 = sshll.u32 [#allocation13], 4
          %s378 = int_to_ptr.vmem [resolvable:$true] %s377
          %383 = dma.hbm_to_vmem [thread:$0]  %s6, 32, %s378, [#allocation14], 16, 16, 1
        $region24: #{tpu_custom_call.1} parent=11 // pred_fallthru
          _
        // Predicated region
        $region25: #{tpu_custom_call.1} parent=11 // pred_check
          %p384 = pneg %p166
        $region26: #{tpu_custom_call.1} parent=11 // pred_check_branch
          %386 = sbr.rel (%p384) target = $region28
        $region27: #{tpu_custom_call.1} parent=11 // pred_region
          %s388 = ssub.s32 32, 32
          %389 = vsyncadd [#allocation14], %s388
          %s390 = sshll.u32 [#allocation15], 4
          %s391 = int_to_ptr.vmem [resolvable:$true] %s390
          %396 = dma.hbm_to_vmem [thread:$0]  %s7, 32, %s391, [#allocation14], 16, 16, 1
        $region28: #{tpu_custom_call.1} parent=11 // pred_fallthru
          _
        // Predicated region
        $region29: #{tpu_custom_call.1} parent=11 // pred_check
          %p397 = pneg %p187
        $region30: #{tpu_custom_call.1} parent=11 // pred_check_branch
          %399 = sbr.rel (%p397) target = $region32
        $region31: #{tpu_custom_call.1} parent=11 // pred_region
          %s401 = ssub.s32 6144, 6144
          %402 = vsyncadd [#allocation17], %s401
          %s403 = sshll.u32 [#allocation16], 4
          %s404 = int_to_ptr.vmem [resolvable:$true] %s403
          %409 = dma.hbm_to_vmem [thread:$0]  %s8, 6144, %s404, [#allocation17], 64, 64, 4
        $region32: #{tpu_custom_call.1} parent=11 // pred_fallthru
          _
        // Predicated region
        $region33: #{tpu_custom_call.1} parent=11 // pred_check
          %p410 = pneg %p208
        $region34: #{tpu_custom_call.1} parent=11 // pred_check_branch
          %412 = sbr.rel (%p410) target = $region36
        $region35: #{tpu_custom_call.1} parent=11 // pred_region
          %s414 = ssub.s32 32, 32
          %415 = vsyncadd [#allocation17], %s414
          %s416 = sshll.u32 [#allocation18], 4
          %s417 = int_to_ptr.vmem [resolvable:$true] %s416
          %422 = dma.hbm_to_vmem [thread:$0]  %s9, 32, %s417, [#allocation17], 16, 16, 1
        $region36: #{tpu_custom_call.1} parent=11 // pred_fallthru
          _
        // Predicated region
        $region37: #{tpu_custom_call.1} parent=11 // pred_check
          %p423 = pneg %p229
        $region38: #{tpu_custom_call.1} parent=11 // pred_check_branch
          %425 = sbr.rel (%p423) target = $region40
        $region39: #{tpu_custom_call.1} parent=11 // pred_region
          %s427 = ssub.s32 32, 32
          %428 = vsyncadd [#allocation20], %s427
          %s429 = sshll.u32 [#allocation19], 4
          %s430 = int_to_ptr.vmem [resolvable:$true] %s429
          %435 = dma.hbm_to_vmem [thread:$0]  %s10, 32, %s430, [#allocation20], 16, 16, 1
        $region40: #{tpu_custom_call.1} parent=11 // pred_fallthru
          _
        // Predicated region
        $region41: #{tpu_custom_call.1} parent=11 // pred_check
          %p436 = pneg %p250
        $region42: #{tpu_custom_call.1} parent=11 // pred_check_branch
          %438 = sbr.rel (%p436) target = $region44
        $region43: #{tpu_custom_call.1} parent=11 // pred_region
          %s440 = ssub.s32 32, 32
          %441 = vsyncadd [#allocation20], %s440
          %s442 = sshll.u32 [#allocation21], 4
          %s443 = int_to_ptr.vmem [resolvable:$true] %s442
          %448 = dma.hbm_to_vmem [thread:$0]  %s11, 32, %s443, [#allocation20], 16, 16, 1
        $region44: #{tpu_custom_call.1} parent=11 // pred_fallthru
          _
        // Predicated region
        $region45: #{tpu_custom_call.1} parent=11 // pred_check
          %p449 = pneg %p276
        $region46: #{tpu_custom_call.1} parent=11 // pred_check_branch
          %451 = sbr.rel (%p449) target = $region48
        $region47: #{tpu_custom_call.1} parent=11 // pred_region
          %p452 = scmp.lt.s32.totalorder %s54, 0
          %s453 = scalar_select %p452, %s54, 0
          %s454 = smul.addr %s453, 4
          %s455 = scalar_lea.vmem %s12, %s454
        $region48: #{tpu_custom_call.1} parent=11 // pred_fallthru
          _
        // Predicated region
        $region49: #{tpu_custom_call.1} parent=11 // pred_check
          %p456 = pneg %p302
        $region50: #{tpu_custom_call.1} parent=11 // pred_check_branch
          %458 = sbr.rel (%p456) target = $region52
        $region51: #{tpu_custom_call.1} parent=11 // pred_region
          %p459 = scmp.lt.s32.totalorder %s54, 0
          %s460 = scalar_select %p459, %s54, 0
          %s461 = scalar_lea.vmem %s13, %s460
        $region52: #{tpu_custom_call.1} parent=11 // pred_fallthru
          _
      $region12: #{tpu_custom_call.1} parent=5 // pred_fallthru
        _
      %p462 = scmp.lt.s32.totalorder %s44, 2
      // Predicated region
      $region53: #{tpu_custom_call.1} parent=5 // pred_check
        %p463 = pneg %p462
      $region54: #{tpu_custom_call.1} parent=5 // pred_check_branch
        %465 = sbr.rel (%p463) target = $region56
      $region55: #{tpu_custom_call.1} parent=5 // pred_region
        // Predicated region
        $region57: #{tpu_custom_call.1} parent=55 // pred_check
          %p466 = pneg %p76
        $region58: #{tpu_custom_call.1} parent=55 // pred_check_branch
          %468 = sbr.rel (%p466) target = $region60
        $region59: #{tpu_custom_call.1} parent=55 // pred_region
          %s469 = sand.u32 %s66, 1
          %s470 = scalar_lea.sflag [#allocation8], %s469
          %s471 = sand.u32 %s66, 1
          %s472 = smul.addr %s471, 64
          %s473 = scalar_lea.vmem [#allocation7], %s472
          %s474 = smul.u32 4, %s51
          %s476 = ssub.s32 1024, 1024
          %477 = vsyncadd %s470, %s476
          %s478 = smul.addr %s474, 2
          %s479 = smul.addr %s478, 128
          %s480 = scalar_lea.hbm %s3, %s479
          %s481 = sshll.u32 %s473, 4
          %s482 = int_to_ptr.vmem [resolvable:$true] %s481
          %487 = dma.hbm_to_vmem [thread:$0]  %s480, 1024, %s482, %s470, 128, 128, 8
        $region60: #{tpu_custom_call.1} parent=55 // pred_fallthru
          _
      $region56: #{tpu_custom_call.1} parent=5 // pred_fallthru
        _
      %p488 = scmp.le.s32.totalorder 1, %s44
      %p489 = scmp.lt.s32.totalorder %s44, 3
      %p490 = pnand %p488, %p489
      %p491 = pneg %p490
      // Predicated region
      $region61: #{tpu_custom_call.1} parent=5 // pred_check
        _
      $region62: #{tpu_custom_call.1} parent=5 // pred_check_branch
        %493 = sbr.rel (%p490) target = $region64
      $region63: #{tpu_custom_call.1} parent=5 // pred_region
        %s494 = ssub.s32 %s44, 1
        %s495 = sand.u32 %s69, 1
        %s496 = scalar_lea.sflag [#allocation8], %s495
        %s497 = sand.u32 %s69, 1
        %s498 = smul.addr %s497, 64
        %s499 = scalar_lea.vmem [#allocation7], %s498
        // Predicated region
        $region65: #{tpu_custom_call.1} parent=63 // pred_check
          %p500 = pneg %p82
        $region66: #{tpu_custom_call.1} parent=63 // pred_check_branch
          %502 = sbr.rel (%p500) target = $region68
        $region67: #{tpu_custom_call.1} parent=63 // pred_region
          %503 = dma.done %s496, 1024
        $region68: #{tpu_custom_call.1} parent=63 // pred_fallthru
          _
        // Predicated region
        $region69: #{tpu_custom_call.1} parent=63 // pred_check
          %p504 = pneg %p103
        $region70: #{tpu_custom_call.1} parent=63 // pred_check_branch
          %506 = sbr.rel (%p504) target = $region72
        $region71: #{tpu_custom_call.1} parent=63 // pred_region
          %507 = dma.done [#allocation11], 6144
        $region72: #{tpu_custom_call.1} parent=63 // pred_fallthru
          _
        // Predicated region
        $region73: #{tpu_custom_call.1} parent=63 // pred_check
          %p508 = pneg %p124
        $region74: #{tpu_custom_call.1} parent=63 // pred_check_branch
          %510 = sbr.rel (%p508) target = $region76
        $region75: #{tpu_custom_call.1} parent=63 // pred_region
          %511 = dma.done [#allocation11], 32
        $region76: #{tpu_custom_call.1} parent=63 // pred_fallthru
          _
        // Predicated region
        $region77: #{tpu_custom_call.1} parent=63 // pred_check
          %p512 = pneg %p145
        $region78: #{tpu_custom_call.1} parent=63 // pred_check_branch
          %514 = sbr.rel (%p512) target = $region80
        $region79: #{tpu_custom_call.1} parent=63 // pred_region
          %515 = dma.done [#allocation14], 32
        $region80: #{tpu_custom_call.1} parent=63 // pred_fallthru
          _
        // Predicated region
        $region81: #{tpu_custom_call.1} parent=63 // pred_check
          %p516 = pneg %p166
        $region82: #{tpu_custom_call.1} parent=63 // pred_check_branch
          %518 = sbr.rel (%p516) target = $region84
        $region83: #{tpu_custom_call.1} parent=63 // pred_region
          %519 = dma.done [#allocation14], 32
        $region84: #{tpu_custom_call.1} parent=63 // pred_fallthru
          _
        // Predicated region
        $region85: #{tpu_custom_call.1} parent=63 // pred_check
          %p520 = pneg %p187
        $region86: #{tpu_custom_call.1} parent=63 // pred_check_branch
          %522 = sbr.rel (%p520) target = $region88
        $region87: #{tpu_custom_call.1} parent=63 // pred_region
          %523 = dma.done [#allocation17], 6144
        $region88: #{tpu_custom_call.1} parent=63 // pred_fallthru
          _
        // Predicated region
        $region89: #{tpu_custom_call.1} parent=63 // pred_check
          %p524 = pneg %p208
        $region90: #{tpu_custom_call.1} parent=63 // pred_check_branch
          %526 = sbr.rel (%p524) target = $region92
        $region91: #{tpu_custom_call.1} parent=63 // pred_region
          %527 = dma.done [#allocation17], 32
        $region92: #{tpu_custom_call.1} parent=63 // pred_fallthru
          _
        // Predicated region
        $region93: #{tpu_custom_call.1} parent=63 // pred_check
          %p528 = pneg %p229
        $region94: #{tpu_custom_call.1} parent=63 // pred_check_branch
          %530 = sbr.rel (%p528) target = $region96
        $region95: #{tpu_custom_call.1} parent=63 // pred_region
          %531 = dma.done [#allocation20], 32
        $region96: #{tpu_custom_call.1} parent=63 // pred_fallthru
          _
        // Predicated region
        $region97: #{tpu_custom_call.1} parent=63 // pred_check
          %p532 = pneg %p250
        $region98: #{tpu_custom_call.1} parent=63 // pred_check_branch
          %534 = sbr.rel (%p532) target = $region100
        $region99: #{tpu_custom_call.1} parent=63 // pred_region
          %535 = dma.done [#allocation20], 32
        $region100: #{tpu_custom_call.1} parent=63 // pred_fallthru
          _
        %s536 = sand.u32 %s69, 1
        %s537 = scalar_lea.sflag [#allocation8], %s536
        %s538 = sand.u32 %s69, 1
        %s539 = smul.addr %s538, 64
        %s540 = scalar_lea.vmem [#allocation7], %s539
        %p541 = pneg %p82
        %p542 = pneg %p79
        %p543 = pneg %p103
        %p544 = pneg %p100
        %p545 = pneg %p124
        %p546 = pneg %p121
        %p547 = pneg %p145
        %p548 = pneg %p142
        %p549 = pneg %p166
        %p550 = pneg %p163
        %p551 = pneg %p187
        %p552 = pneg %p184
        %p553 = pneg %p208
        %p554 = pneg %p205
        %p555 = pneg %p229
        %p556 = pneg %p226
        %p557 = pneg %p250
        %p558 = pneg %p247
        %p559 = scmp.lt.s32.totalorder %s54, 0
        %s560 = scalar_select %p559, %s54, 0
        %s561 = smul.addr %s560, 4
        %s562 = scalar_lea.vmem %s12, %s561
        %p563 = pneg %p276
        %p564 = pneg %p273
        %p565 = scmp.lt.s32.totalorder %s54, 0
        %s566 = scalar_select %p565, %s54, 0
        %s567 = scalar_lea.vmem %s13, %s566
        %p568 = pneg %p302
        %p569 = pneg %p299
        %p570 = pneg %p330
        %p571 = pneg %p327
        %s572 = sand.u32 %s317, 1
        %s573 = scalar_lea.sflag [#allocation9], %s572
        %s574 = sand.u32 %s317, 1
        %s575 = smul.addr %s574, 64
        %s576 = scalar_lea.vmem [#allocation22], %s575
        %s577 = smul.u32 4, %s53
        %p578 = scmp.lt.s32.totalorder %s54, 0
        %s579 = scalar_select %p578, %s54, 0
        %s580 = smul.addr %s579, 4
        %s581 = scalar_lea.vmem %s12, %s580
        %p582 = scmp.lt.s32.totalorder %s54, 0
        %s583 = scalar_select %p582, %s54, 0
        %s584 = scalar_lea.vmem %s13, %s583
        %s585 = smul.u32 4, %s53
        %p587 = scmp.eq.s32.totalorder %s54, 0
        // Predicated region
        $region101: #{tpu_custom_call.1} parent=63 // pred_check
          %p588 = pneg %p587
        $region102: #{tpu_custom_call.1} parent=63 // pred_check_branch
          %590 = sbr.rel (%p588) target = $region104
        $region103: #{tpu_custom_call.1} parent=63 // pred_region
          %591 = vst [vmem:[#allocation2] sm:$0xff] 0.0
          %592 = vst [vmem:[#allocation2 + $0x18] sm:$0xff] 0.0
          %593 = vst [vmem:[#allocation2 + $0x30] sm:$0xff] 0.0
          %594 = vst [vmem:[#allocation2 + $0x48] sm:$0xff] 0.0
          %v595 = vld [vmem:[%s499] sm:$0xff]
          %v596 = vld [vmem:[%s499 + $0x8] sm:$0xff]
          %v597 = vld [vmem:[%s499 + $0x10] sm:$0xff]
          %v598 = vld [vmem:[%s499 + $0x18] sm:$0xff]
          %v599 = vld [vmem:[%s499 + $0x20] sm:$0xff]
          %v600 = vld [vmem:[%s499 + $0x28] sm:$0xff]
          %v601 = vld [vmem:[%s499 + $0x30] sm:$0xff]
          %v602 = vld [vmem:[%s499 + $0x38] sm:$0xff]
          %603 = vst [vmem:[#allocation2 + $0x8] sm:$0xff] %v595
          %604 = vst [vmem:[#allocation2 + $0x10] sm:$0xff] %v596
          %605 = vst [vmem:[#allocation2 + $0x20] sm:$0xff] %v597
          %606 = vst [vmem:[#allocation2 + $0x28] sm:$0xff] %v598
          %607 = vst [vmem:[#allocation2 + $0x38] sm:$0xff] %v599
          %608 = vst [vmem:[#allocation2 + $0x40] sm:$0xff] %v600
          %609 = vst [vmem:[#allocation2 + $0x50] sm:$0xff] %v601
          %610 = vst [vmem:[#allocation2 + $0x58] sm:$0xff] %v602
          %s611 = smul.u32 %s53, 4
          %s612 = smul.u32 %s611, 128
          %s613 = sld [smem:[#allocation4 + %s612]]
          %s614 = sadd.s32 %s611, 1
          %s615 = smul.u32 %s614, 128
          %s616 = sld [smem:[#allocation4 + %s615]]
          %s617 = sadd.s32 %s613, %s616
          %s618 = sadd.s32 %s611, 2
          %s619 = smul.u32 %s618, 128
          %s620 = sld [smem:[#allocation4 + %s619]]
          %s621 = sadd.s32 %s617, %s620
          %s622 = sadd.s32 %s611, 3
          %s623 = smul.u32 %s622, 128
          %s624 = sld [smem:[#allocation4 + %s623]]
          %s625 = sadd.s32 %s621, %s624
          %p626 = scmp.gt.s32.totalorder %s625, 0
          // Predicated region
          $region105: #{tpu_custom_call.1} parent=103 // pred_check
            %p627 = pneg %p626
          $region106: #{tpu_custom_call.1} parent=103 // pred_check_branch
            %629 = sbr.rel (%p627) target = $region108
          $region107: #{tpu_custom_call.1} parent=103 // pred_region
            %v630 = vld [vmem:[#allocation2 + $0x8] sm:$0xff]
            %v631 = vld [vmem:[#allocation2 + $0x10] sm:$0xff]
            %v632 = vld [vmem:[#allocation2 + $0x20] sm:$0xff]
            %v633 = vld [vmem:[#allocation2 + $0x28] sm:$0xff]
            %v634 = vld [vmem:[#allocation2 + $0x38] sm:$0xff]
            %v635 = vld [vmem:[#allocation2 + $0x40] sm:$0xff]
            %v636 = vld [vmem:[#allocation2 + $0x50] sm:$0xff]
            %v637 = vld [vmem:[#allocation2 + $0x58] sm:$0xff]
            %v638 = vld [vmem:[#allocation10] sm:$0xf]
            %v639 = vld [vmem:[#allocation10 + $0x4] sm:$0xf]
            %v640 = vld [vmem:[#allocation10 + $0x8] sm:$0xf]
            %v641 = vld [vmem:[#allocation10 + $0xc] sm:$0xf]
            %v642 = vld [vmem:[#allocation10 + $0x10] sm:$0xf]
            %v643 = vld [vmem:[#allocation10 + $0x14] sm:$0xf]
            %v644 = vld [vmem:[#allocation10 + $0x18] sm:$0xf]
            %v645 = vld [vmem:[#allocation10 + $0x1c] sm:$0xf]
            %v646 = vld [vmem:[#allocation10 + $0x20] sm:$0xf]
            %v647 = vld [vmem:[#allocation10 + $0x24] sm:$0xf]
            %v648 = vld [vmem:[#allocation10 + $0x28] sm:$0xf]
            %v649 = vld [vmem:[#allocation10 + $0x2c] sm:$0xf]
            %v650 = vld [vmem:[#allocation10 + $0x30] sm:$0xf]
            %v651 = vld [vmem:[#allocation10 + $0x34] sm:$0xf]
            %v652 = vld [vmem:[#allocation10 + $0x38] sm:$0xf]
            %v653 = vld [vmem:[#allocation10 + $0x3c] sm:$0xf]
            %v654 = vld [vmem:[#allocation10 + $0x40] sm:$0xf]
            %v655 = vld [vmem:[#allocation10 + $0x44] sm:$0xf]
            %v656 = vld [vmem:[#allocation10 + $0x48] sm:$0xf]
            %v657 = vld [vmem:[#allocation10 + $0x4c] sm:$0xf]
            %v658 = vld [vmem:[#allocation10 + $0x50] sm:$0xf]
            %v659 = vld [vmem:[#allocation10 + $0x54] sm:$0xf]
            %v660 = vld [vmem:[#allocation10 + $0x58] sm:$0xf]
            %v661 = vld [vmem:[#allocation10 + $0x5c] sm:$0xf]
            %v662 = vld [vmem:[#allocation10 + $0x60] sm:$0xf]
            %v663 = vld [vmem:[#allocation10 + $0x64] sm:$0xf]
            %v664 = vld [vmem:[#allocation10 + $0x68] sm:$0xf]
            %v665 = vld [vmem:[#allocation10 + $0x6c] sm:$0xf]
            %v666 = vld [vmem:[#allocation10 + $0x70] sm:$0xf]
            %v667 = vld [vmem:[#allocation10 + $0x74] sm:$0xf]
            %v668 = vld [vmem:[#allocation10 + $0x78] sm:$0xf]
            %v669 = vld [vmem:[#allocation10 + $0x7c] sm:$0xf]
            %v670 = vld [vmem:[#allocation10 + $0x80] sm:$0xf]
            %v671 = vld [vmem:[#allocation10 + $0x84] sm:$0xf]
            %v672 = vld [vmem:[#allocation10 + $0x88] sm:$0xf]
            %v673 = vld [vmem:[#allocation10 + $0x8c] sm:$0xf]
            %v674 = vld [vmem:[#allocation10 + $0x90] sm:$0xf]
            %v675 = vld [vmem:[#allocation10 + $0x94] sm:$0xf]
            %v676 = vld [vmem:[#allocation10 + $0x98] sm:$0xf]
            %v677 = vld [vmem:[#allocation10 + $0x9c] sm:$0xf]
            %v678 = vld [vmem:[#allocation10 + $0xa0] sm:$0xf]
            %v679 = vld [vmem:[#allocation10 + $0xa4] sm:$0xf]
            %v680 = vld [vmem:[#allocation10 + $0xa8] sm:$0xf]
            %v681 = vld [vmem:[#allocation10 + $0xac] sm:$0xf]
            %v682 = vld [vmem:[#allocation10 + $0xb0] sm:$0xf]
            %v683 = vld [vmem:[#allocation10 + $0xb4] sm:$0xf]
            %v684 = vld [vmem:[#allocation10 + $0xb8] sm:$0xf]
            %v685 = vld [vmem:[#allocation10 + $0xbc] sm:$0xf]
            %v686 = vld [vmem:[#allocation12] sm:$0x1]
            %v687 = vld [vmem:[#allocation2 + $0x6] sm:$0xff]
            %v688 = vld [vmem:[#allocation2 + $0xe] sm:$0xff]
            %v689 = vld [vmem:[#allocation2 + $0x1e] sm:$0xff]
            %v690 = vld [vmem:[#allocation2 + $0x26] sm:$0xff]
            %v691 = vld [vmem:[#allocation2 + $0x36] sm:$0xff]
            %v692 = vld [vmem:[#allocation2 + $0x3e] sm:$0xff]
            %v693 = vld [vmem:[#allocation2 + $0x4e] sm:$0xff]
            %v694 = vld [vmem:[#allocation2 + $0x56] sm:$0xff]
            %v695 = vld [vmem:[#allocation2 + $0x7] sm:$0xff]
            %v696 = vld [vmem:[#allocation2 + $0xf] sm:$0xff]
            %v697 = vld [vmem:[#allocation2 + $0x1f] sm:$0xff]
            %v698 = vld [vmem:[#allocation2 + $0x27] sm:$0xff]
            %v699 = vld [vmem:[#allocation2 + $0x37] sm:$0xff]
            %v700 = vld [vmem:[#allocation2 + $0x3f] sm:$0xff]
            %v701 = vld [vmem:[#allocation2 + $0x4f] sm:$0xff]
            %v702 = vld [vmem:[#allocation2 + $0x57] sm:$0xff]
            %v703 = vpack.c.bf16 %v688, %v687
            %v704 = vpack.c.bf16 %v696, %v695
            %v705 = vpack.c.bf16 %v631, %v630
            %v706 = vpack.c.bf16 %v690, %v689
            %v707 = vpack.c.bf16 %v698, %v697
            %v708 = vpack.c.bf16 %v633, %v632
            %v709 = vpack.c.bf16 %v692, %v691
            %v710 = vpack.c.bf16 %v700, %v699
            %v711 = vpack.c.bf16 %v635, %v634
            %v712 = vpack.c.bf16 %v694, %v693
            %v713 = vpack.c.bf16 %v702, %v701
            %v714 = vpack.c.bf16 %v637, %v636
            %v763 = vunpack.c.l.b16 %v638
            %v764 = vunpack.c.l.b16 %v639
            %v765 = vunpack.c.l.b16 %v640
            %v766 = vunpack.c.l.b16 %v641
            %v767 = vunpack.c.l.b16 %v642
            %v768 = vunpack.c.l.b16 %v643
            %v769 = vunpack.c.l.b16 %v644
            %v770 = vunpack.c.l.b16 %v645
            %v771 = vunpack.c.l.b16 %v646
            %v772 = vunpack.c.l.b16 %v647
            %v773 = vunpack.c.l.b16 %v648
            %v774 = vunpack.c.l.b16 %v649
            %v775 = vunpack.c.l.b16 %v650
            %v776 = vunpack.c.l.b16 %v651
            %v777 = vunpack.c.l.b16 %v652
            %v778 = vunpack.c.l.b16 %v653
            %v779 = vunpack.c.l.b16 %v654
            %v780 = vunpack.c.l.b16 %v655
            %v781 = vunpack.c.l.b16 %v656
            %v782 = vunpack.c.l.b16 %v657
            %v783 = vunpack.c.l.b16 %v658
            %v784 = vunpack.c.l.b16 %v659
            %v785 = vunpack.c.l.b16 %v660
            %v786 = vunpack.c.l.b16 %v661
            %v787 = vunpack.c.l.b16 %v662
            %v788 = vunpack.c.l.b16 %v663
            %v789 = vunpack.c.l.b16 %v664
            %v790 = vunpack.c.l.b16 %v665
            %v791 = vunpack.c.l.b16 %v666
            %v792 = vunpack.c.l.b16 %v667
            %v793 = vunpack.c.l.b16 %v668
            %v794 = vunpack.c.l.b16 %v669
            %v795 = vunpack.c.l.b16 %v670
            %v796 = vunpack.c.l.b16 %v671
            %v797 = vunpack.c.l.b16 %v672
            %v798 = vunpack.c.l.b16 %v673
            %v799 = vunpack.c.l.b16 %v674
            %v800 = vunpack.c.l.b16 %v675
            %v801 = vunpack.c.l.b16 %v676
            %v802 = vunpack.c.l.b16 %v677
            %v803 = vunpack.c.l.b16 %v678
            %v804 = vunpack.c.l.b16 %v679
            %v805 = vunpack.c.l.b16 %v680
            %v806 = vunpack.c.l.b16 %v681
            %v807 = vunpack.c.l.b16 %v682
            %v808 = vunpack.c.l.b16 %v683
            %v809 = vunpack.c.l.b16 %v684
            %v810 = vunpack.c.l.b16 %v685
            %v811 = vpack.c.b16 %v764, %v763
            %v812 = vpack.c.b16 %v766, %v765
            %v813 = vpack.c.b16 %v768, %v767
            %v814 = vpack.c.b16 %v770, %v769
            %v815 = vpack.c.b16 %v772, %v771
            %v816 = vpack.c.b16 %v774, %v773
            %v817 = vpack.c.b16 %v776, %v775
            %v818 = vpack.c.b16 %v778, %v777
            %v819 = vpack.c.b16 %v780, %v779
            %v820 = vpack.c.b16 %v782, %v781
            %v821 = vpack.c.b16 %v784, %v783
            %v822 = vpack.c.b16 %v786, %v785
            %v823 = vpack.c.b16 %v788, %v787
            %v824 = vpack.c.b16 %v790, %v789
            %v825 = vpack.c.b16 %v792, %v791
            %v826 = vpack.c.b16 %v794, %v793
            %v827 = vpack.c.b16 %v796, %v795
            %v828 = vpack.c.b16 %v798, %v797
            %v829 = vpack.c.b16 %v800, %v799
            %v830 = vpack.c.b16 %v802, %v801
            %v831 = vpack.c.b16 %v804, %v803
            %v832 = vpack.c.b16 %v806, %v805
            %v833 = vpack.c.b16 %v808, %v807
            %v834 = vpack.c.b16 %v810, %v809
            %859 = vmatprep.subr.bf16.mxu0 0
            %860 = vmatpush1.bf16.msra.mxu0 %v811
            %861 = vmatprep.subr.bf16.mxu0 0
            %862 = vmatpush1.bf16.msra.mxu0 %v812
            %863 = vmatprep.subr.bf16.mxu0 0
            %864 = vmatpush1.bf16.msra.mxu0 %v813
            %865 = vmatprep.subr.bf16.mxu0 0
            %866 = vmatpush1.bf16.msra.mxu0 %v814
            %867 = vmatprep.subr.bf16.mxu0 0
            %868 = vmatpush1.bf16.msra.mxu0 %v815
            %869 = vmatprep.subr.bf16.mxu0 0
            %870 = vmatpush1.bf16.msra.mxu0 %v816
            %871 = vmatprep.subr.bf16.mxu0 0
            %872 = vmatpush1.bf16.msra.mxu0 %v817
            %873 = vmatprep.subr.bf16.mxu0 0
            %874 = vmatpush1.bf16.msra.mxu0 %v818
            %875 = vmatprep.subr.bf16.mxu0 0
            %876 = vmatpush1.bf16.msra.mxu0 %v819
            %877 = vmatprep.subr.bf16.mxu0 0
            %878 = vmatpush1.bf16.msra.mxu0 %v820
            %879 = vmatprep.subr.bf16.mxu0 0
            %880 = vmatpush1.bf16.msra.mxu0 %v821
            %881 = vmatprep.subr.bf16.mxu0 0
            %882 = vmatpush1.bf16.msra.mxu0 %v822
            %883 = vmatprep.subr.bf16.mxu0 0
            %884 = vmatpush1.bf16.msra.mxu0 %v823
            %885 = vmatprep.subr.bf16.mxu0 0
            %886 = vmatpush1.bf16.msra.mxu0 %v824
            %887 = vmatprep.subr.bf16.mxu0 0
            %888 = vmatpush1.bf16.msra.mxu0 %v825
            %889 = vmatprep.subr.bf16.mxu0 0
            %890 = vmatpush1.bf16.msra.mxu0 %v826
            %891 = vmatprep.mubr.bf16.mxu0 %v704
            %892 = vmatmul.mubr.bf16.gmra.mrb[0].mxu0 %v703
            %v893 = vpop.f32.mrb[0].mxu0
            %v894 = vadd.f32 0.0, %v893
            %v895 = vpop.f32.mrb[0].mxu0
            %v896 = vpop.f32.mrb[0].mxu0
            %v897 = vadd.f32 0.0, %v896
            %v898 = vpop.f32.mrb[0].mxu0
            %899 = vmatprep.mubr.bf16.mxu0 %v707
            %900 = vmatmul.mubr.bf16.gmra.mrb[0].mxu0 %v706
            %v901 = vpop.f32.mrb[0].mxu0
            %v902 = vadd.f32 0.0, %v901
            %v903 = vpop.f32.mrb[0].mxu0
            %v904 = vpop.f32.mrb[0].mxu0
            %v905 = vadd.f32 0.0, %v904
            %v906 = vpop.f32.mrb[0].mxu0
            %907 = vmatprep.mubr.bf16.mxu0 %v710
            %908 = vmatmul.mubr.bf16.gmra.mrb[0].mxu0 %v709
            %v909 = vpop.f32.mrb[0].mxu0
            %v910 = vadd.f32 0.0, %v909
            %v911 = vpop.f32.mrb[0].mxu0
            %v912 = vpop.f32.mrb[0].mxu0
            %v913 = vadd.f32 0.0, %v912
            %v914 = vpop.f32.mrb[0].mxu0
            %915 = vmatprep.mubr.bf16.mxu0 %v713
            %916 = vmatmul.mubr.bf16.gmra.mrb[0].mxu0 %v712
            %v917 = vpop.f32.mrb[0].mxu0
            %v918 = vadd.f32 0.0, %v917
            %v919 = vpop.f32.mrb[0].mxu0
            %v920 = vpop.f32.mrb[0].mxu0
            %v921 = vadd.f32 0.0, %v920
            %v922 = vpop.f32.mrb[0].mxu0
            %923 = vdwg.mxu0
            %924 = vmatprep.subr.bf16.mxu0 0
            %925 = vmatpush1.bf16.msra.mxu0 %v827
            %926 = vmatprep.subr.bf16.mxu0 0
            %927 = vmatpush1.bf16.msra.mxu0 %v828
            %928 = vmatprep.subr.bf16.mxu0 0
            %929 = vmatpush1.bf16.msra.mxu0 %v829
            %930 = vmatprep.subr.bf16.mxu0 0
            %931 = vmatpush1.bf16.msra.mxu0 %v830
            %932 = vmatprep.subr.bf16.mxu0 0
            %933 = vmatpush1.bf16.msra.mxu0 %v831
            %934 = vmatprep.subr.bf16.mxu0 0
            %935 = vmatpush1.bf16.msra.mxu0 %v832
            %936 = vmatprep.subr.bf16.mxu0 0
            %937 = vmatpush1.bf16.msra.mxu0 %v833
            %938 = vmatprep.subr.bf16.mxu0 0
            %939 = vmatpush1.bf16.msra.mxu0 %v834
            %940 = vmatprep.subr.bf16.mxu0 0
            %941 = vmatpush1.bf16.msra.mxu0 0
            %942 = vmatprep.subr.bf16.mxu0 0
            %943 = vmatpush1.bf16.msra.mxu0 0
            %944 = vmatprep.subr.bf16.mxu0 0
            %945 = vmatpush1.bf16.msra.mxu0 0
            %946 = vmatprep.subr.bf16.mxu0 0
            %947 = vmatpush1.bf16.msra.mxu0 0
            %948 = vmatprep.subr.bf16.mxu0 0
            %949 = vmatpush1.bf16.msra.mxu0 0
            %950 = vmatprep.subr.bf16.mxu0 0
            %951 = vmatpush1.bf16.msra.mxu0 0
            %952 = vmatprep.subr.bf16.mxu0 0
            %953 = vmatpush1.bf16.msra.mxu0 0
            %954 = vmatprep.subr.bf16.mxu0 0
            %955 = vmatpush1.bf16.msra.mxu0 0
            %956 = vmatprep.mubr.bf16.mxu0 0
            %957 = vmatmul.mubr.bf16.gmra.mrb[0].mxu0 %v705
            %v958 = vpop.f32.mrb[0].mxu0
            %v959 = vadd.f32 %v894, %v958
            %v960 = vpop.f32.mrb[0].mxu0
            %v961 = vpop.f32.mrb[0].mxu0
            %v962 = vadd.f32 %v897, %v961
            %v963 = vpop.f32.mrb[0].mxu0
            %964 = vmatprep.mubr.bf16.mxu0 0
            %965 = vmatmul.mubr.bf16.gmra.mrb[0].mxu0 %v708
            %v966 = vpop.f32.mrb[0].mxu0
            %v967 = vadd.f32 %v902, %v966
            %v968 = vpop.f32.mrb[0].mxu0
            %v969 = vpop.f32.mrb[0].mxu0
            %v970 = vadd.f32 %v905, %v969
            %v971 = vpop.f32.mrb[0].mxu0
            %972 = vmatprep.mubr.bf16.mxu0 0
            %973 = vmatmul.mubr.bf16.gmra.mrb[0].mxu0 %v711
            %v974 = vpop.f32.mrb[0].mxu0
            %v975 = vadd.f32 %v910, %v974
            %v976 = vpop.f32.mrb[0].mxu0
            %v977 = vpop.f32.mrb[0].mxu0
            %v978 = vadd.f32 %v913, %v977
            %v979 = vpop.f32.mrb[0].mxu0
            %980 = vmatprep.mubr.bf16.mxu0 0
            %981 = vmatmul.mubr.bf16.gmra.mrb[0].mxu0 %v714
            %v982 = vpop.f32.mrb[0].mxu0
            %v983 = vadd.f32 %v918, %v982
            %v984 = vpop.f32.mrb[0].mxu0
            %v985 = vpop.f32.mrb[0].mxu0
            %v986 = vadd.f32 %v921, %v985
            %v987 = vpop.f32.mrb[0].mxu0
            %988 = vdwg.mxu0
            %v990 = vlaneseq
            %v991 = vshrl.u32 %v990, 7
            %v992 = vsub.s32 0, %v991
            %v993 = vrot.slane %v686, %v992
            %v995 = vadd.f32 %v959, %v993
            %v996 = vadd.f32 %v962, %v993
            %v997 = vadd.f32 %v967, %v993
            %v998 = vadd.f32 %v970, %v993
            %v999 = vadd.f32 %v975, %v993
            %v1000 = vadd.f32 %v978, %v993
            %v1001 = vadd.f32 %v983, %v993
            %v1002 = vadd.f32 %v986, %v993
            %v1003 = vld [vmem:[#allocation13] sm:$0x1]
            %v1004 = vld [vmem:[#allocation15] sm:$0x1]
            %1005 = vadd.xlane.f32.xlu0 %v995
            %v1006 = vpop.xlane.xlu0 %1005
            %1007 = vadd.xlane.f32.xlu0 %v996
            %v1008 = vpop.xlane.xlu0 %1007
            %1009 = vadd.xlane.f32.xlu0 %v997
            %v1010 = vpop.xlane.xlu0 %1009
            %1011 = vadd.xlane.f32.xlu0 %v998
            %v1012 = vpop.xlane.xlu0 %1011
            %1013 = vadd.xlane.f32.xlu0 %v999
            %v1014 = vpop.xlane.xlu0 %1013
            %1015 = vadd.xlane.f32.xlu0 %v1000
            %v1016 = vpop.xlane.xlu0 %1015
            %1017 = vadd.xlane.f32.xlu0 %v1001
            %v1018 = vpop.xlane.xlu0 %1017
            %1019 = vadd.xlane.f32.xlu0 %v1002
            %v1020 = vpop.xlane.xlu0 %1019
            %v1021 = vmul.f32 %v1006, 0.03125
            %v1022 = vmul.f32 %v1008, 0.03125
            %v1023 = vmul.f32 %v1010, 0.03125
            %v1024 = vmul.f32 %v1012, 0.03125
            %v1025 = vmul.f32 %v1014, 0.03125
            %v1026 = vmul.f32 %v1016, 0.03125
            %v1027 = vmul.f32 %v1018, 0.03125
            %v1028 = vmul.f32 %v1020, 0.03125
            %v1029 = vmul.f32 %v995, %v995
            %v1030 = vmul.f32 %v996, %v996
            %v1031 = vmul.f32 %v997, %v997
            %v1032 = vmul.f32 %v998, %v998
            %v1033 = vmul.f32 %v999, %v999
            %v1034 = vmul.f32 %v1000, %v1000
            %v1035 = vmul.f32 %v1001, %v1001
            %v1036 = vmul.f32 %v1002, %v1002
            %1037 = vadd.xlane.f32.xlu0 %v1029
            %v1038 = vpop.xlane.xlu0 %1037
            %1039 = vadd.xlane.f32.xlu0 %v1030
            %v1040 = vpop.xlane.xlu0 %1039
            %1041 = vadd.xlane.f32.xlu0 %v1031
            %v1042 = vpop.xlane.xlu0 %1041
            %1043 = vadd.xlane.f32.xlu0 %v1032
            %v1044 = vpop.xlane.xlu0 %1043
            %1045 = vadd.xlane.f32.xlu0 %v1033
            %v1046 = vpop.xlane.xlu0 %1045
            %1047 = vadd.xlane.f32.xlu0 %v1034
            %v1048 = vpop.xlane.xlu0 %1047
            %1049 = vadd.xlane.f32.xlu0 %v1035
            %v1050 = vpop.xlane.xlu0 %1049
            %1051 = vadd.xlane.f32.xlu0 %v1036
            %v1052 = vpop.xlane.xlu0 %1051
            %v1053 = vmul.f32 %v1038, 0.03125
            %v1054 = vmul.f32 %v1040, 0.03125
            %v1055 = vmul.f32 %v1042, 0.03125
            %v1056 = vmul.f32 %v1044, 0.03125
            %v1057 = vmul.f32 %v1046, 0.03125
            %v1058 = vmul.f32 %v1048, 0.03125
            %v1059 = vmul.f32 %v1050, 0.03125
            %v1060 = vmul.f32 %v1052, 0.03125
            %v1061 = vmul.f32 %v1021, %v1021
            %v1062 = vmul.f32 %v1022, %v1022
            %v1063 = vmul.f32 %v1023, %v1023
            %v1064 = vmul.f32 %v1024, %v1024
            %v1065 = vmul.f32 %v1025, %v1025
            %v1066 = vmul.f32 %v1026, %v1026
            %v1067 = vmul.f32 %v1027, %v1027
            %v1068 = vmul.f32 %v1028, %v1028
            %v1069 = vsub.f32 %v1053, %v1061
            %v1070 = vsub.f32 %v1054, %v1062
            %v1071 = vsub.f32 %v1055, %v1063
            %v1072 = vsub.f32 %v1056, %v1064
            %v1073 = vsub.f32 %v1057, %v1065
            %v1074 = vsub.f32 %v1058, %v1066
            %v1075 = vsub.f32 %v1059, %v1067
            %v1076 = vsub.f32 %v1060, %v1068
            %v1077 = vsub.f32 %v995, %v1021
            %v1078 = vsub.f32 %v996, %v1022
            %v1079 = vsub.f32 %v997, %v1023
            %v1080 = vsub.f32 %v998, %v1024
            %v1081 = vsub.f32 %v999, %v1025
            %v1082 = vsub.f32 %v1000, %v1026
            %v1083 = vsub.f32 %v1001, %v1027
            %v1084 = vsub.f32 %v1002, %v1028
            %v1085 = vadd.f32 %v1069, 1e-08
            %v1086 = vadd.f32 %v1070, 1e-08
            %v1087 = vadd.f32 %v1071, 1e-08
            %v1088 = vadd.f32 %v1072, 1e-08
            %v1089 = vadd.f32 %v1073, 1e-08
            %v1090 = vadd.f32 %v1074, 1e-08
            %v1091 = vadd.f32 %v1075, 1e-08
            %v1092 = vadd.f32 %v1076, 1e-08
            %v1093 = vrsqrt.pop %v1085
            %v1094 = vrsqrt.pop %v1086
            %v1095 = vrsqrt.pop %v1087
            %v1096 = vrsqrt.pop %v1088
            %v1097 = vrsqrt.pop %v1089
            %v1098 = vrsqrt.pop %v1090
            %v1099 = vrsqrt.pop %v1091
            %v1100 = vrsqrt.pop %v1092
            %v1101 = vmul.f32 %v1077, %v1093
            %v1102 = vmul.f32 %v1078, %v1094
            %v1103 = vmul.f32 %v1079, %v1095
            %v1104 = vmul.f32 %v1080, %v1096
            %v1105 = vmul.f32 %v1081, %v1097
            %v1106 = vmul.f32 %v1082, %v1098
            %v1107 = vmul.f32 %v1083, %v1099
            %v1108 = vmul.f32 %v1084, %v1100
            %v1110 = vlaneseq
            %v1111 = vshrl.u32 %v1110, 7
            %v1112 = vsub.s32 0, %v1111
            %v1113 = vrot.slane %v1003, %v1112
            %v1115 = vmul.f32 %v1101, %v1113
            %v1116 = vmul.f32 %v1102, %v1113
            %v1117 = vmul.f32 %v1103, %v1113
            %v1118 = vmul.f32 %v1104, %v1113
            %v1119 = vmul.f32 %v1105, %v1113
            %v1120 = vmul.f32 %v1106, %v1113
            %v1121 = vmul.f32 %v1107, %v1113
            %v1122 = vmul.f32 %v1108, %v1113
            %v1124 = vlaneseq
            %v1125 = vshrl.u32 %v1124, 7
            %v1126 = vsub.s32 0, %v1125
            %v1127 = vrot.slane %v1004, %v1126
            %v1129 = vadd.f32 %v1115, %v1127
            %v1130 = vadd.f32 %v1116, %v1127
            %v1131 = vadd.f32 %v1117, %v1127
            %v1132 = vadd.f32 %v1118, %v1127
            %v1133 = vadd.f32 %v1119, %v1127
            %v1134 = vadd.f32 %v1120, %v1127
            %v1135 = vadd.f32 %v1121, %v1127
            %v1136 = vadd.f32 %v1122, %v1127
            %v1137 = vmax.f32 %v1129, 0.0
            %v1138 = vmax.f32 %v1130, 0.0
            %v1139 = vmax.f32 %v1131, 0.0
            %v1140 = vmax.f32 %v1132, 0.0
            %v1141 = vmax.f32 %v1133, 0.0
            %v1142 = vmax.f32 %v1134, 0.0
            %v1143 = vmax.f32 %v1135, 0.0
            %v1144 = vmax.f32 %v1136, 0.0
            %1145 = vst [vmem:[#allocation2 + $0x8] sm:$0xff] %v1137
            %1146 = vst [vmem:[#allocation2 + $0x10] sm:$0xff] %v1138
            %1147 = vst [vmem:[#allocation2 + $0x20] sm:$0xff] %v1139
            %1148 = vst [vmem:[#allocation2 + $0x28] sm:$0xff] %v1140
            %1149 = vst [vmem:[#allocation2 + $0x38] sm:$0xff] %v1141
            %1150 = vst [vmem:[#allocation2 + $0x40] sm:$0xff] %v1142
            %1151 = vst [vmem:[#allocation2 + $0x50] sm:$0xff] %v1143
            %1152 = vst [vmem:[#allocation2 + $0x58] sm:$0xff] %v1144
            %v1153 = vld [vmem:[#allocation16] sm:$0xf]
            %v1154 = vld [vmem:[#allocation16 + $0x4] sm:$0xf]
            %v1155 = vld [vmem:[#allocation16 + $0x8] sm:$0xf]
            %v1156 = vld [vmem:[#allocation16 + $0xc] sm:$0xf]
            %v1157 = vld [vmem:[#allocation16 + $0x10] sm:$0xf]
            %v1158 = vld [vmem:[#allocation16 + $0x14] sm:$0xf]
            %v1159 = vld [vmem:[#allocation16 + $0x18] sm:$0xf]
            %v1160 = vld [vmem:[#allocation16 + $0x1c] sm:$0xf]
            %v1161 = vld [vmem:[#allocation16 + $0x20] sm:$0xf]
            %v1162 = vld [vmem:[#allocation16 + $0x24] sm:$0xf]
            %v1163 = vld [vmem:[#allocation16 + $0x28] sm:$0xf]
            %v1164 = vld [vmem:[#allocation16 + $0x2c] sm:$0xf]
            %v1165 = vld [vmem:[#allocation16 + $0x30] sm:$0xf]
            %v1166 = vld [vmem:[#allocation16 + $0x34] sm:$0xf]
            %v1167 = vld [vmem:[#allocation16 + $0x38] sm:$0xf]
            %v1168 = vld [vmem:[#allocation16 + $0x3c] sm:$0xf]
            %v1169 = vld [vmem:[#allocation16 + $0x40] sm:$0xf]
            %v1170 = vld [vmem:[#allocation16 + $0x44] sm:$0xf]
            %v1171 = vld [vmem:[#allocation16 + $0x48] sm:$0xf]
            %v1172 = vld [vmem:[#allocation16 + $0x4c] sm:$0xf]
            %v1173 = vld [vmem:[#allocation16 + $0x50] sm:$0xf]
            %v1174 = vld [vmem:[#allocation16 + $0x54] sm:$0xf]
            %v1175 = vld [vmem:[#allocation16 + $0x58] sm:$0xf]
            %v1176 = vld [vmem:[#allocation16 + $0x5c] sm:$0xf]
            %v1177 = vld [vmem:[#allocation16 + $0x60] sm:$0xf]
            %v1178 = vld [vmem:[#allocation16 + $0x64] sm:$0xf]
            %v1179 = vld [vmem:[#allocation16 + $0x68] sm:$0xf]
            %v1180 = vld [vmem:[#allocation16 + $0x6c] sm:$0xf]
            %v1181 = vld [vmem:[#allocation16 + $0x70] sm:$0xf]
            %v1182 = vld [vmem:[#allocation16 + $0x74] sm:$0xf]
            %v1183 = vld [vmem:[#allocation16 + $0x78] sm:$0xf]
            %v1184 = vld [vmem:[#allocation16 + $0x7c] sm:$0xf]
            %v1185 = vld [vmem:[#allocation16 + $0x80] sm:$0xf]
            %v1186 = vld [vmem:[#allocation16 + $0x84] sm:$0xf]
            %v1187 = vld [vmem:[#allocation16 + $0x88] sm:$0xf]
            %v1188 = vld [vmem:[#allocation16 + $0x8c] sm:$0xf]
            %v1189 = vld [vmem:[#allocation16 + $0x90] sm:$0xf]
            %v1190 = vld [vmem:[#allocation16 + $0x94] sm:$0xf]
            %v1191 = vld [vmem:[#allocation16 + $0x98] sm:$0xf]
            %v1192 = vld [vmem:[#allocation16 + $0x9c] sm:$0xf]
            %v1193 = vld [vmem:[#allocation16 + $0xa0] sm:$0xf]
            %v1194 = vld [vmem:[#allocation16 + $0xa4] sm:$0xf]
            %v1195 = vld [vmem:[#allocation16 + $0xa8] sm:$0xf]
            %v1196 = vld [vmem:[#allocation16 + $0xac] sm:$0xf]
            %v1197 = vld [vmem:[#allocation16 + $0xb0] sm:$0xf]
            %v1198 = vld [vmem:[#allocation16 + $0xb4] sm:$0xf]
            %v1199 = vld [vmem:[#allocation16 + $0xb8] sm:$0xf]
            %v1200 = vld [vmem:[#allocation16 + $0xbc] sm:$0xf]
            %v1201 = vld [vmem:[#allocation18] sm:$0x1]
            %v1202 = vld [vmem:[#allocation2 + $0x4] sm:$0xff]
            %v1203 = vld [vmem:[#allocation2 + $0xc] sm:$0xff]
            %v1204 = vld [vmem:[#allocation2 + $0x1c] sm:$0xff]
            %v1205 = vld [vmem:[#allocation2 + $0x24] sm:$0xff]
            %v1206 = vld [vmem:[#allocation2 + $0x34] sm:$0xff]
            %v1207 = vld [vmem:[#allocation2 + $0x3c] sm:$0xff]
            %v1208 = vld [vmem:[#allocation2 + $0x4c] sm:$0xff]
            %v1209 = vld [vmem:[#allocation2 + $0x54] sm:$0xff]
            %v1210 = vld [vmem:[#allocation2 + $0x6] sm:$0xff]
            %v1211 = vld [vmem:[#allocation2 + $0xe] sm:$0xff]
            %v1212 = vld [vmem:[#allocation2 + $0x1e] sm:$0xff]
            %v1213 = vld [vmem:[#allocation2 + $0x26] sm:$0xff]
            %v1214 = vld [vmem:[#allocation2 + $0x36] sm:$0xff]
            %v1215 = vld [vmem:[#allocation2 + $0x3e] sm:$0xff]
            %v1216 = vld [vmem:[#allocation2 + $0x4e] sm:$0xff]
            %v1217 = vld [vmem:[#allocation2 + $0x56] sm:$0xff]
            %v1218 = vld [vmem:[#allocation2 + $0x8] sm:$0xff]
            %v1219 = vld [vmem:[#allocation2 + $0x10] sm:$0xff]
            %v1220 = vld [vmem:[#allocation2 + $0x20] sm:$0xff]
            %v1221 = vld [vmem:[#allocation2 + $0x28] sm:$0xff]
            %v1222 = vld [vmem:[#allocation2 + $0x38] sm:$0xff]
            %v1223 = vld [vmem:[#allocation2 + $0x40] sm:$0xff]
            %v1224 = vld [vmem:[#allocation2 + $0x50] sm:$0xff]
            %v1225 = vld [vmem:[#allocation2 + $0x58] sm:$0xff]
            %v1226 = vpack.c.bf16 %v1203, %v1202
            %v1227 = vpack.c.bf16 %v1211, %v1210
            %v1228 = vpack.c.bf16 %v1219, %v1218
            %v1229 = vpack.c.bf16 %v1205, %v1204
            %v1230 = vpack.c.bf16 %v1213, %v1212
            %v1231 = vpack.c.bf16 %v1221, %v1220
            %v1232 = vpack.c.bf16 %v1207, %v1206
            %v1233 = vpack.c.bf16 %v1215, %v1214
            %v1234 = vpack.c.bf16 %v1223, %v1222
            %v1235 = vpack.c.bf16 %v1209, %v1208
            %v1236 = vpack.c.bf16 %v1217, %v1216
            %v1237 = vpack.c.bf16 %v1225, %v1224
            %v1286 = vunpack.c.l.b16 %v1153
            %v1287 = vunpack.c.l.b16 %v1154
            %v1288 = vunpack.c.l.b16 %v1155
            %v1289 = vunpack.c.l.b16 %v1156
            %v1290 = vunpack.c.l.b16 %v1157
            %v1291 = vunpack.c.l.b16 %v1158
            %v1292 = vunpack.c.l.b16 %v1159
            %v1293 = vunpack.c.l.b16 %v1160
            %v1294 = vunpack.c.l.b16 %v1161
            %v1295 = vunpack.c.l.b16 %v1162
            %v1296 = vunpack.c.l.b16 %v1163
            %v1297 = vunpack.c.l.b16 %v1164
            %v1298 = vunpack.c.l.b16 %v1165
            %v1299 = vunpack.c.l.b16 %v1166
            %v1300 = vunpack.c.l.b16 %v1167
            %v1301 = vunpack.c.l.b16 %v1168
            %v1302 = vunpack.c.l.b16 %v1169
            %v1303 = vunpack.c.l.b16 %v1170
            %v1304 = vunpack.c.l.b16 %v1171
            %v1305 = vunpack.c.l.b16 %v1172
            %v1306 = vunpack.c.l.b16 %v1173
            %v1307 = vunpack.c.l.b16 %v1174
            %v1308 = vunpack.c.l.b16 %v1175
            %v1309 = vunpack.c.l.b16 %v1176
            %v1310 = vunpack.c.l.b16 %v1177
            %v1311 = vunpack.c.l.b16 %v1178
            %v1312 = vunpack.c.l.b16 %v1179
            %v1313 = vunpack.c.l.b16 %v1180
            %v1314 = vunpack.c.l.b16 %v1181
            %v1315 = vunpack.c.l.b16 %v1182
            %v1316 = vunpack.c.l.b16 %v1183
            %v1317 = vunpack.c.l.b16 %v1184
            %v1318 = vunpack.c.l.b16 %v1185
            %v1319 = vunpack.c.l.b16 %v1186
            %v1320 = vunpack.c.l.b16 %v1187
            %v1321 = vunpack.c.l.b16 %v1188
            %v1322 = vunpack.c.l.b16 %v1189
            %v1323 = vunpack.c.l.b16 %v1190
            %v1324 = vunpack.c.l.b16 %v1191
            %v1325 = vunpack.c.l.b16 %v1192
            %v1326 = vunpack.c.l.b16 %v1193
            %v1327 = vunpack.c.l.b16 %v1194
            %v1328 = vunpack.c.l.b16 %v1195
            %v1329 = vunpack.c.l.b16 %v1196
            %v1330 = vunpack.c.l.b16 %v1197
            %v1331 = vunpack.c.l.b16 %v1198
            %v1332 = vunpack.c.l.b16 %v1199
            %v1333 = vunpack.c.l.b16 %v1200
            %v1334 = vpack.c.b16 %v1287, %v1286
            %v1335 = vpack.c.b16 %v1289, %v1288
            %v1336 = vpack.c.b16 %v1291, %v1290
            %v1337 = vpack.c.b16 %v1293, %v1292
            %v1338 = vpack.c.b16 %v1295, %v1294
            %v1339 = vpack.c.b16 %v1297, %v1296
            %v1340 = vpack.c.b16 %v1299, %v1298
            %v1341 = vpack.c.b16 %v1301, %v1300
            %v1342 = vpack.c.b16 %v1303, %v1302
            %v1343 = vpack.c.b16 %v1305, %v1304
            %v1344 = vpack.c.b16 %v1307, %v1306
            %v1345 = vpack.c.b16 %v1309, %v1308
            %v1346 = vpack.c.b16 %v1311, %v1310
            %v1347 = vpack.c.b16 %v1313, %v1312
            %v1348 = vpack.c.b16 %v1315, %v1314
            %v1349 = vpack.c.b16 %v1317, %v1316
            %v1350 = vpack.c.b16 %v1319, %v1318
            %v1351 = vpack.c.b16 %v1321, %v1320
            %v1352 = vpack.c.b16 %v1323, %v1322
            %v1353 = vpack.c.b16 %v1325, %v1324
            %v1354 = vpack.c.b16 %v1327, %v1326
            %v1355 = vpack.c.b16 %v1329, %v1328
            %v1356 = vpack.c.b16 %v1331, %v1330
            %v1357 = vpack.c.b16 %v1333, %v1332
            %1382 = vmatprep.subr.bf16.mxu0 0
            %1383 = vmatpush1.bf16.msra.mxu0 %v1334
            %1384 = vmatprep.subr.bf16.mxu0 0
            %1385 = vmatpush1.bf16.msra.mxu0 %v1335
            %1386 = vmatprep.subr.bf16.mxu0 0
            %1387 = vmatpush1.bf16.msra.mxu0 %v1336
            %1388 = vmatprep.subr.bf16.mxu0 0
            %1389 = vmatpush1.bf16.msra.mxu0 %v1337
            %1390 = vmatprep.subr.bf16.mxu0 0
            %1391 = vmatpush1.bf16.msra.mxu0 %v1338
            %1392 = vmatprep.subr.bf16.mxu0 0
            %1393 = vmatpush1.bf16.msra.mxu0 %v1339
            %1394 = vmatprep.subr.bf16.mxu0 0
            %1395 = vmatpush1.bf16.msra.mxu0 %v1340
            %1396 = vmatprep.subr.bf16.mxu0 0
            %1397 = vmatpush1.bf16.msra.mxu0 %v1341
            %1398 = vmatprep.subr.bf16.mxu0 0
            %1399 = vmatpush1.bf16.msra.mxu0 %v1342
            %1400 = vmatprep.subr.bf16.mxu0 0
            %1401 = vmatpush1.bf16.msra.mxu0 %v1343
            %1402 = vmatprep.subr.bf16.mxu0 0
            %1403 = vmatpush1.bf16.msra.mxu0 %v1344
            %1404 = vmatprep.subr.bf16.mxu0 0
            %1405 = vmatpush1.bf16.msra.mxu0 %v1345
            %1406 = vmatprep.subr.bf16.mxu0 0
            %1407 = vmatpush1.bf16.msra.mxu0 %v1346
            %1408 = vmatprep.subr.bf16.mxu0 0
            %1409 = vmatpush1.bf16.msra.mxu0 %v1347
            %1410 = vmatprep.subr.bf16.mxu0 0
            %1411 = vmatpush1.bf16.msra.mxu0 %v1348
            %1412 = vmatprep.subr.bf16.mxu0 0
            %1413 = vmatpush1.bf16.msra.mxu0 %v1349
            %1414 = vmatprep.mubr.bf16.mxu0 %v1227
            %1415 = vmatmul.mubr.bf16.gmra.mrb[0].mxu0 %v1226
            %v1416 = vpop.f32.mrb[0].mxu0
            %v1417 = vadd.f32 0.0, %v1416
            %v1418 = vpop.f32.mrb[0].mxu0
            %v1419 = vpop.f32.mrb[0].mxu0
            %v1420 = vadd.f32 0.0, %v1419
            %v1421 = vpop.f32.mrb[0].mxu0
            %1422 = vmatprep.mubr.bf16.mxu0 %v1230
            %1423 = vmatmul.mubr.bf16.gmra.mrb[0].mxu0 %v1229
            %v1424 = vpop.f32.mrb[0].mxu0
            %v1425 = vadd.f32 0.0, %v1424
            %v1426 = vpop.f32.mrb[0].mxu0
            %v1427 = vpop.f32.mrb[0].mxu0
            %v1428 = vadd.f32 0.0, %v1427
            %v1429 = vpop.f32.mrb[0].mxu0
            %1430 = vmatprep.mubr.bf16.mxu0 %v1233
            %1431 = vmatmul.mubr.bf16.gmra.mrb[0].mxu0 %v1232
            %v1432 = vpop.f32.mrb[0].mxu0
            %v1433 = vadd.f32 0.0, %v1432
            %v1434 = vpop.f32.mrb[0].mxu0
            %v1435 = vpop.f32.mrb[0].mxu0
            %v1436 = vadd.f32 0.0, %v1435
            %v1437 = vpop.f32.mrb[0].mxu0
            %1438 = vmatprep.mubr.bf16.mxu0 %v1236
            %1439 = vmatmul.mubr.bf16.gmra.mrb[0].mxu0 %v1235
            %v1440 = vpop.f32.mrb[0].mxu0
            %v1441 = vadd.f32 0.0, %v1440
            %v1442 = vpop.f32.mrb[0].mxu0
            %v1443 = vpop.f32.mrb[0].mxu0
            %v1444 = vadd.f32 0.0, %v1443
            %v1445 = vpop.f32.mrb[0].mxu0
            %1446 = vdwg.mxu0
            %1447 = vmatprep.subr.bf16.mxu0 0
            %1448 = vmatpush1.bf16.msra.mxu0 %v1350
            %1449 = vmatprep.subr.bf16.mxu0 0
            %1450 = vmatpush1.bf16.msra.mxu0 %v1351
            %1451 = vmatprep.subr.bf16.mxu0 0
            %1452 = vmatpush1.bf16.msra.mxu0 %v1352
            %1453 = vmatprep.subr.bf16.mxu0 0
            %1454 = vmatpush1.bf16.msra.mxu0 %v1353
            %1455 = vmatprep.subr.bf16.mxu0 0
            %1456 = vmatpush1.bf16.msra.mxu0 %v1354
            %1457 = vmatprep.subr.bf16.mxu0 0
            %1458 = vmatpush1.bf16.msra.mxu0 %v1355
            %1459 = vmatprep.subr.bf16.mxu0 0
            %1460 = vmatpush1.bf16.msra.mxu0 %v1356
            %1461 = vmatprep.subr.bf16.mxu0 0
            %1462 = vmatpush1.bf16.msra.mxu0 %v1357
            %1463 = vmatprep.subr.bf16.mxu0 0
            %1464 = vmatpush1.bf16.msra.mxu0 0
            %1465 = vmatprep.subr.bf16.mxu0 0
            %1466 = vmatpush1.bf16.msra.mxu0 0
            %1467 = vmatprep.subr.bf16.mxu0 0
            %1468 = vmatpush1.bf16.msra.mxu0 0
            %1469 = vmatprep.subr.bf16.mxu0 0
            %1470 = vmatpush1.bf16.msra.mxu0 0
            %1471 = vmatprep.subr.bf16.mxu0 0
            %1472 = vmatpush1.bf16.msra.mxu0 0
            %1473 = vmatprep.subr.bf16.mxu0 0
            %1474 = vmatpush1.bf16.msra.mxu0 0
            %1475 = vmatprep.subr.bf16.mxu0 0
            %1476 = vmatpush1.bf16.msra.mxu0 0
            %1477 = vmatprep.subr.bf16.mxu0 0
            %1478 = vmatpush1.bf16.msra.mxu0 0
            %1479 = vmatprep.mubr.bf16.mxu0 0
            %1480 = vmatmul.mubr.bf16.gmra.mrb[0].mxu0 %v1228
            %v1481 = vpop.f32.mrb[0].mxu0
            %v1482 = vadd.f32 %v1417, %v1481
            %v1483 = vpop.f32.mrb[0].mxu0
            %v1484 = vpop.f32.mrb[0].mxu0
            %v1485 = vadd.f32 %v1420, %v1484
            %v1486 = vpop.f32.mrb[0].mxu0
            %1487 = vmatprep.mubr.bf16.mxu0 0
            %1488 = vmatmul.mubr.bf16.gmra.mrb[0].mxu0 %v1231
            %v1489 = vpop.f32.mrb[0].mxu0
            %v1490 = vadd.f32 %v1425, %v1489
            %v1491 = vpop.f32.mrb[0].mxu0
            %v1492 = vpop.f32.mrb[0].mxu0
            %v1493 = vadd.f32 %v1428, %v1492
            %v1494 = vpop.f32.mrb[0].mxu0
            %1495 = vmatprep.mubr.bf16.mxu0 0
            %1496 = vmatmul.mubr.bf16.gmra.mrb[0].mxu0 %v1234
            %v1497 = vpop.f32.mrb[0].mxu0
            %v1498 = vadd.f32 %v1433, %v1497
            %v1499 = vpop.f32.mrb[0].mxu0
            %v1500 = vpop.f32.mrb[0].mxu0
            %v1501 = vadd.f32 %v1436, %v1500
            %v1502 = vpop.f32.mrb[0].mxu0
            %1503 = vmatprep.mubr.bf16.mxu0 0
            %1504 = vmatmul.mubr.bf16.gmra.mrb[0].mxu0 %v1237
            %v1505 = vpop.f32.mrb[0].mxu0
            %v1506 = vadd.f32 %v1441, %v1505
            %v1507 = vpop.f32.mrb[0].mxu0
            %v1508 = vpop.f32.mrb[0].mxu0
            %v1509 = vadd.f32 %v1444, %v1508
            %v1510 = vpop.f32.mrb[0].mxu0
            %1511 = vdwg.mxu0
            %v1513 = vlaneseq
            %v1514 = vshrl.u32 %v1513, 7
            %v1515 = vsub.s32 0, %v1514
            %v1516 = vrot.slane %v1201, %v1515
            %v1518 = vadd.f32 %v1482, %v1516
            %v1519 = vadd.f32 %v1485, %v1516
            %v1520 = vadd.f32 %v1490, %v1516
            %v1521 = vadd.f32 %v1493, %v1516
            %v1522 = vadd.f32 %v1498, %v1516
            %v1523 = vadd.f32 %v1501, %v1516
            %v1524 = vadd.f32 %v1506, %v1516
            %v1525 = vadd.f32 %v1509, %v1516
            %v1526 = vld [vmem:[#allocation19] sm:$0x1]
            %v1527 = vld [vmem:[#allocation21] sm:$0x1]
            %1528 = vadd.xlane.f32.xlu0 %v1518
            %v1529 = vpop.xlane.xlu0 %1528
            %1530 = vadd.xlane.f32.xlu0 %v1519
            %v1531 = vpop.xlane.xlu0 %1530
            %1532 = vadd.xlane.f32.xlu0 %v1520
            %v1533 = vpop.xlane.xlu0 %1532
            %1534 = vadd.xlane.f32.xlu0 %v1521
            %v1535 = vpop.xlane.xlu0 %1534
            %1536 = vadd.xlane.f32.xlu0 %v1522
            %v1537 = vpop.xlane.xlu0 %1536
            %1538 = vadd.xlane.f32.xlu0 %v1523
            %v1539 = vpop.xlane.xlu0 %1538
            %1540 = vadd.xlane.f32.xlu0 %v1524
            %v1541 = vpop.xlane.xlu0 %1540
            %1542 = vadd.xlane.f32.xlu0 %v1525
            %v1543 = vpop.xlane.xlu0 %1542
            %v1544 = vmul.f32 %v1529, 0.03125
            %v1545 = vmul.f32 %v1531, 0.03125
            %v1546 = vmul.f32 %v1533, 0.03125
            %v1547 = vmul.f32 %v1535, 0.03125
            %v1548 = vmul.f32 %v1537, 0.03125
            %v1549 = vmul.f32 %v1539, 0.03125
            %v1550 = vmul.f32 %v1541, 0.03125
            %v1551 = vmul.f32 %v1543, 0.03125
            %v1552 = vmul.f32 %v1518, %v1518
            %v1553 = vmul.f32 %v1519, %v1519
            %v1554 = vmul.f32 %v1520, %v1520
            %v1555 = vmul.f32 %v1521, %v1521
            %v1556 = vmul.f32 %v1522, %v1522
            %v1557 = vmul.f32 %v1523, %v1523
            %v1558 = vmul.f32 %v1524, %v1524
            %v1559 = vmul.f32 %v1525, %v1525
            %1560 = vadd.xlane.f32.xlu0 %v1552
            %v1561 = vpop.xlane.xlu0 %1560
            %1562 = vadd.xlane.f32.xlu0 %v1553
            %v1563 = vpop.xlane.xlu0 %1562
            %1564 = vadd.xlane.f32.xlu0 %v1554
            %v1565 = vpop.xlane.xlu0 %1564
            %1566 = vadd.xlane.f32.xlu0 %v1555
            %v1567 = vpop.xlane.xlu0 %1566
            %1568 = vadd.xlane.f32.xlu0 %v1556
            %v1569 = vpop.xlane.xlu0 %1568
            %1570 = vadd.xlane.f32.xlu0 %v1557
            %v1571 = vpop.xlane.xlu0 %1570
            %1572 = vadd.xlane.f32.xlu0 %v1558
            %v1573 = vpop.xlane.xlu0 %1572
            %1574 = vadd.xlane.f32.xlu0 %v1559
            %v1575 = vpop.xlane.xlu0 %1574
            %v1576 = vmul.f32 %v1561, 0.03125
            %v1577 = vmul.f32 %v1563, 0.03125
            %v1578 = vmul.f32 %v1565, 0.03125
            %v1579 = vmul.f32 %v1567, 0.03125
            %v1580 = vmul.f32 %v1569, 0.03125
            %v1581 = vmul.f32 %v1571, 0.03125
            %v1582 = vmul.f32 %v1573, 0.03125
            %v1583 = vmul.f32 %v1575, 0.03125
            %v1584 = vmul.f32 %v1544, %v1544
            %v1585 = vmul.f32 %v1545, %v1545
            %v1586 = vmul.f32 %v1546, %v1546
            %v1587 = vmul.f32 %v1547, %v1547
            %v1588 = vmul.f32 %v1548, %v1548
            %v1589 = vmul.f32 %v1549, %v1549
            %v1590 = vmul.f32 %v1550, %v1550
            %v1591 = vmul.f32 %v1551, %v1551
            %v1592 = vsub.f32 %v1576, %v1584
            %v1593 = vsub.f32 %v1577, %v1585
            %v1594 = vsub.f32 %v1578, %v1586
            %v1595 = vsub.f32 %v1579, %v1587
            %v1596 = vsub.f32 %v1580, %v1588
            %v1597 = vsub.f32 %v1581, %v1589
            %v1598 = vsub.f32 %v1582, %v1590
            %v1599 = vsub.f32 %v1583, %v1591
            %v1600 = vsub.f32 %v1518, %v1544
            %v1601 = vsub.f32 %v1519, %v1545
            %v1602 = vsub.f32 %v1520, %v1546
            %v1603 = vsub.f32 %v1521, %v1547
            %v1604 = vsub.f32 %v1522, %v1548
            %v1605 = vsub.f32 %v1523, %v1549
            %v1606 = vsub.f32 %v1524, %v1550
            %v1607 = vsub.f32 %v1525, %v1551
            %v1608 = vadd.f32 %v1592, 1e-08
            %v1609 = vadd.f32 %v1593, 1e-08
            %v1610 = vadd.f32 %v1594, 1e-08
            %v1611 = vadd.f32 %v1595, 1e-08
            %v1612 = vadd.f32 %v1596, 1e-08
            %v1613 = vadd.f32 %v1597, 1e-08
            %v1614 = vadd.f32 %v1598, 1e-08
            %v1615 = vadd.f32 %v1599, 1e-08
            %v1616 = vrsqrt.pop %v1608
            %v1617 = vrsqrt.pop %v1609
            %v1618 = vrsqrt.pop %v1610
            %v1619 = vrsqrt.pop %v1611
            %v1620 = vrsqrt.pop %v1612
            %v1621 = vrsqrt.pop %v1613
            %v1622 = vrsqrt.pop %v1614
            %v1623 = vrsqrt.pop %v1615
            %v1624 = vmul.f32 %v1600, %v1616
            %v1625 = vmul.f32 %v1601, %v1617
            %v1626 = vmul.f32 %v1602, %v1618
            %v1627 = vmul.f32 %v1603, %v1619
            %v1628 = vmul.f32 %v1604, %v1620
            %v1629 = vmul.f32 %v1605, %v1621
            %v1630 = vmul.f32 %v1606, %v1622
            %v1631 = vmul.f32 %v1607, %v1623
            %v1633 = vlaneseq
            %v1634 = vshrl.u32 %v1633, 7
            %v1635 = vsub.s32 0, %v1634
            %v1636 = vrot.slane %v1526, %v1635
            %v1638 = vmul.f32 %v1624, %v1636
            %v1639 = vmul.f32 %v1625, %v1636
            %v1640 = vmul.f32 %v1626, %v1636
            %v1641 = vmul.f32 %v1627, %v1636
            %v1642 = vmul.f32 %v1628, %v1636
            %v1643 = vmul.f32 %v1629, %v1636
            %v1644 = vmul.f32 %v1630, %v1636
            %v1645 = vmul.f32 %v1631, %v1636
            %v1647 = vlaneseq
            %v1648 = vshrl.u32 %v1647, 7
            %v1649 = vsub.s32 0, %v1648
            %v1650 = vrot.slane %v1527, %v1649
            %v1652 = vadd.f32 %v1638, %v1650
            %v1653 = vadd.f32 %v1639, %v1650
            %v1654 = vadd.f32 %v1640, %v1650
            %v1655 = vadd.f32 %v1641, %v1650
            %v1656 = vadd.f32 %v1642, %v1650
            %v1657 = vadd.f32 %v1643, %v1650
            %v1658 = vadd.f32 %v1644, %v1650
            %v1659 = vadd.f32 %v1645, %v1650
            %v1660 = vmax.f32 %v1652, 0.0
            %v1661 = vmax.f32 %v1653, 0.0
            %v1662 = vmax.f32 %v1654, 0.0
            %v1663 = vmax.f32 %v1655, 0.0
            %v1664 = vmax.f32 %v1656, 0.0
            %v1665 = vmax.f32 %v1657, 0.0
            %v1666 = vmax.f32 %v1658, 0.0
            %v1667 = vmax.f32 %v1659, 0.0
            %s1668 = sld [smem:[#allocation6]]
            %s1669 = sld [smem:[#allocation5 + %s612]]
            %s1670 = smul.f32 %s1669, %s1668
            %v1671 = vstv %s1670
            %v1672 = vmul.f32 %v1671, %v1660
            %v1673 = vmul.f32 %v1671, %v1661
            %v1674 = vadd.f32 %v630, %v1672
            %v1675 = vadd.f32 %v631, %v1673
            %1676 = vst [vmem:[#allocation2 + $0x8] sm:$0xff] %v1674
            %1677 = vst [vmem:[#allocation2 + $0x10] sm:$0xff] %v1675
            %s1678 = sld [smem:[#allocation5 + %s615]]
            %s1679 = smul.f32 %s1678, %s1668
            %v1680 = vstv %s1679
            %v1681 = vmul.f32 %v1680, %v1662
            %v1682 = vmul.f32 %v1680, %v1663
            %v1683 = vadd.f32 %v632, %v1681
            %v1684 = vadd.f32 %v633, %v1682
            %s1685 = scalar_lea.vmem [#allocation2], 24
            %1686 = vst [vmem:[%s1685 + $0x8] sm:$0xff] %v1683
            %1687 = vst [vmem:[%s1685 + $0x10] sm:$0xff] %v1684
            %s1688 = sld [smem:[#allocation5 + %s619]]
            %s1689 = smul.f32 %s1688, %s1668
            %v1690 = vstv %s1689
            %v1691 = vmul.f32 %v1690, %v1664
            %v1692 = vmul.f32 %v1690, %v1665
            %v1693 = vadd.f32 %v634, %v1691
            %v1694 = vadd.f32 %v635, %v1692
            %s1695 = scalar_lea.vmem [#allocation2], 48
            %1696 = vst [vmem:[%s1695 + $0x8] sm:$0xff] %v1693
            %1697 = vst [vmem:[%s1695 + $0x10] sm:$0xff] %v1694
            %s1698 = sld [smem:[#allocation5 + %s623]]
            %s1699 = smul.f32 %s1698, %s1668
            %v1700 = vstv %s1699
            %v1701 = vmul.f32 %v1700, %v1666
            %v1702 = vmul.f32 %v1700, %v1667
            %v1703 = vadd.f32 %v636, %v1701
            %v1704 = vadd.f32 %v637, %v1702
            %s1705 = scalar_lea.vmem [#allocation2], 72
            %1706 = vst [vmem:[%s1705 + $0x8] sm:$0xff] %v1703
            %1707 = vst [vmem:[%s1705 + $0x10] sm:$0xff] %v1704
          $region108: #{tpu_custom_call.1} parent=103 // pred_fallthru
            _
          %s1708 = sadd.s32 %s612, 1
          %s1709 = sld [smem:[#allocation4 + %s1708]]
          %s1710 = sadd.s32 %s615, 1
          %s1711 = sld [smem:[#allocation4 + %s1710]]
          %s1712 = sadd.s32 %s1709, %s1711
          %s1713 = sadd.s32 %s619, 1
          %s1714 = sld [smem:[#allocation4 + %s1713]]
          %s1715 = sadd.s32 %s1712, %s1714
          %s1716 = sadd.s32 %s623, 1
          %s1717 = sld [smem:[#allocation4 + %s1716]]
          %s1718 = sadd.s32 %s1715, %s1717
          %p1719 = scmp.gt.s32.totalorder %s1718, 0
          // Predicated region
          $region109: #{tpu_custom_call.1} parent=103 // pred_check
            %p1720 = pneg %p1719
          $region110: #{tpu_custom_call.1} parent=103 // pred_check_branch
            %1722 = sbr.rel (%p1720) target = $region112
          $region111: #{tpu_custom_call.1} parent=103 // pred_region
            %v1723 = vld [vmem:[#allocation2 + $0x8] sm:$0xff]
            %v1724 = vld [vmem:[#allocation2 + $0x10] sm:$0xff]
            %v1725 = vld [vmem:[#allocation2 + $0x20] sm:$0xff]
            %v1726 = vld [vmem:[#allocation2 + $0x28] sm:$0xff]
            %v1727 = vld [vmem:[#allocation2 + $0x38] sm:$0xff]
            %v1728 = vld [vmem:[#allocation2 + $0x40] sm:$0xff]
            %v1729 = vld [vmem:[#allocation2 + $0x50] sm:$0xff]
            %v1730 = vld [vmem:[#allocation2 + $0x58] sm:$0xff]
            %s1731 = scalar_lea.vmem [#allocation10], 192
            %v1732 = vld [vmem:[%s1731] sm:$0xf]
            %v1733 = vld [vmem:[%s1731 + $0x4] sm:$0xf]
            %v1734 = vld [vmem:[%s1731 + $0x8] sm:$0xf]
            %v1735 = vld [vmem:[%s1731 + $0xc] sm:$0xf]
            %v1736 = vld [vmem:[%s1731 + $0x10] sm:$0xf]
            %v1737 = vld [vmem:[%s1731 + $0x14] sm:$0xf]
            %v1738 = vld [vmem:[%s1731 + $0x18] sm:$0xf]
            %v1739 = vld [vmem:[%s1731 + $0x1c] sm:$0xf]
            %v1740 = vld [vmem:[%s1731 + $0x20] sm:$0xf]
            %v1741 = vld [vmem:[%s1731 + $0x24] sm:$0xf]
            %v1742 = vld [vmem:[%s1731 + $0x28] sm:$0xf]
            %v1743 = vld [vmem:[%s1731 + $0x2c] sm:$0xf]
            %v1744 = vld [vmem:[%s1731 + $0x30] sm:$0xf]
            %v1745 = vld [vmem:[%s1731 + $0x34] sm:$0xf]
            %v1746 = vld [vmem:[%s1731 + $0x38] sm:$0xf]
            %v1747 = vld [vmem:[%s1731 + $0x3c] sm:$0xf]
            %v1748 = vld [vmem:[%s1731 + $0x40] sm:$0xf]
            %v1749 = vld [vmem:[%s1731 + $0x44] sm:$0xf]
            %v1750 = vld [vmem:[%s1731 + $0x48] sm:$0xf]
            %v1751 = vld [vmem:[%s1731 + $0x4c] sm:$0xf]
            %v1752 = vld [vmem:[%s1731 + $0x50] sm:$0xf]
            %v1753 = vld [vmem:[%s1731 + $0x54] sm:$0xf]
            %v1754 = vld [vmem:[%s1731 + $0x58] sm:$0xf]
            %v1755 = vld [vmem:[%s1731 + $0x5c] sm:$0xf]
            %v1756 = vld [vmem:[%s1731 + $0x60] sm:$0xf]
            %v1757 = vld [vmem:[%s1731 + $0x64] sm:$0xf]
            %v1758 = vld [vmem:[%s1731 + $0x68] sm:$0xf]
            %v1759 = vld [vmem:[%s1731 + $0x6c] sm:$0xf]
            %v1760 = vld [vmem:[%s1731 + $0x70] sm:$0xf]
            %v1761 = vld [vmem:[%s1731 + $0x74] sm:$0xf]
            %v1762 = vld [vmem:[%s1731 + $0x78] sm:$0xf]
            %v1763 = vld [vmem:[%s1731 + $0x7c] sm:$0xf]
            %v1764 = vld [vmem:[%s1731 + $0x80] sm:$0xf]
            %v1765 = vld [vmem:[%s1731 + $0x84] sm:$0xf]
            %v1766 = vld [vmem:[%s1731 + $0x88] sm:$0xf]
            %v1767 = vld [vmem:[%s1731 + $0x8c] sm:$0xf]
            %v1768 = vld [vmem:[%s1731 + $0x90] sm:$0xf]
            %v1769 = vld [vmem:[%s1731 + $0x94] sm:$0xf]
            %v1770 = vld [vmem:[%s1731 + $0x98] sm:$0xf]
            %v1771 = vld [vmem:[%s1731 + $0x9c] sm:$0xf]
            %v1772 = vld [vmem:[%s1731 + $0xa0] sm:$0xf]
            %v1773 = vld [vmem:[%s1731 + $0xa4] sm:$0xf]
            %v1774 = vld [vmem:[%s1731 + $0xa8] sm:$0xf]
            %v1775 = vld [vmem:[%s1731 + $0xac] sm:$0xf]
            %v1776 = vld [vmem:[%s1731 + $0xb0] sm:$0xf]
            %v1777 = vld [vmem:[%s1731 + $0xb4] sm:$0xf]
            %v1778 = vld [vmem:[%s1731 + $0xb8] sm:$0xf]
            %v1779 = vld [vmem:[%s1731 + $0xbc] sm:$0xf]
            %s1780 = scalar_lea.vmem [#allocation12], 1
            %v1781 = vld [vmem:[%s1780] sm:$0x1]
            %v1782 = vld [vmem:[#allocation2 + $0x4] sm:$0xff]
            %v1783 = vld [vmem:[#allocation2 + $0xc] sm:$0xff]
            %v1784 = vld [vmem:[#allocation2 + $0x1c] sm:$0xff]
            %v1785 = vld [vmem:[#allocation2 + $0x24] sm:$0xff]
            %v1786 = vld [vmem:[#allocation2 + $0x34] sm:$0xff]
            %v1787 = vld [vmem:[#allocation2 + $0x3c] sm:$0xff]
            %v1788 = vld [vmem:[#allocation2 + $0x4c] sm:$0xff]
            %v1789 = vld [vmem:[#allocation2 + $0x54] sm:$0xff]
            %v1790 = vld [vmem:[#allocation2 + $0x6] sm:$0xff]
            %v1791 = vld [vmem:[#allocation2 + $0xe] sm:$0xff]
            %v1792 = vld [vmem:[#allocation2 + $0x1e] sm:$0xff]
            %v1793 = vld [vmem:[#allocation2 + $0x26] sm:$0xff]
            %v1794 = vld [vmem:[#allocation2 + $0x36] sm:$0xff]
            %v1795 = vld [vmem:[#allocation2 + $0x3e] sm:$0xff]
            %v1796 = vld [vmem:[#allocation2 + $0x4e] sm:$0xff]
            %v1797 = vld [vmem:[#allocation2 + $0x56] sm:$0xff]
            %v1798 = vpack.c.bf16 %v1783, %v1782
            %v1799 = vpack.c.bf16 %v1791, %v1790
            %v1800 = vpack.c.bf16 %v1724, %v1723
            %v1801 = vpack.c.bf16 %v1785, %v1784
            %v1802 = vpack.c.bf16 %v1793, %v1792
            %v1803 = vpack.c.bf16 %v1726, %v1725
            %v1804 = vpack.c.bf16 %v1787, %v1786
            %v1805 = vpack.c.bf16 %v1795, %v1794
            %v1806 = vpack.c.bf16 %v1728, %v1727
            %v1807 = vpack.c.bf16 %v1789, %v1788
            %v1808 = vpack.c.bf16 %v1797, %v1796
            %v1809 = vpack.c.bf16 %v1730, %v1729
            %v1858 = vunpack.c.l.b16 %v1732
            %v1859 = vunpack.c.l.b16 %v1733
            %v1860 = vunpack.c.l.b16 %v1734
            %v1861 = vunpack.c.l.b16 %v1735
            %v1862 = vunpack.c.l.b16 %v1736
            %v1863 = vunpack.c.l.b16 %v1737
            %v1864 = vunpack.c.l.b16 %v1738
            %v1865 = vunpack.c.l.b16 %v1739
            %v1866 = vunpack.c.l.b16 %v1740
            %v1867 = vunpack.c.l.b16 %v1741
            %v1868 = vunpack.c.l.b16 %v1742
            %v1869 = vunpack.c.l.b16 %v1743
            %v1870 = vunpack.c.l.b16 %v1744
            %v1871 = vunpack.c.l.b16 %v1745
            %v1872 = vunpack.c.l.b16 %v1746
            %v1873 = vunpack.c.l.b16 %v1747
            %v1874 = vunpack.c.l.b16 %v1748
            %v1875 = vunpack.c.l.b16 %v1749
            %v1876 = vunpack.c.l.b16 %v1750
            %v1877 = vunpack.c.l.b16 %v1751
            %v1878 = vunpack.c.l.b16 %v1752
            %v1879 = vunpack.c.l.b16 %v1753
            %v1880 = vunpack.c.l.b16 %v1754
            %v1881 = vunpack.c.l.b16 %v1755
            %v1882 = vunpack.c.l.b16 %v1756
            %v1883 = vunpack.c.l.b16 %v1757
            %v1884 = vunpack.c.l.b16 %v1758
            %v1885 = vunpack.c.l.b16 %v1759
            %v1886 = vunpack.c.l.b16 %v1760
            %v1887 = vunpack.c.l.b16 %v1761
            %v1888 = vunpack.c.l.b16 %v1762
            %v1889 = vunpack.c.l.b16 %v1763
            %v1890 = vunpack.c.l.b16 %v1764
            %v1891 = vunpack.c.l.b16 %v1765
            %v1892 = vunpack.c.l.b16 %v1766
            %v1893 = vunpack.c.l.b16 %v1767
            %v1894 = vunpack.c.l.b16 %v1768
            %v1895 = vunpack.c.l.b16 %v1769
            %v1896 = vunpack.c.l.b16 %v1770
            %v1897 = vunpack.c.l.b16 %v1771
            %v1898 = vunpack.c.l.b16 %v1772
            %v1899 = vunpack.c.l.b16 %v1773
            %v1900 = vunpack.c.l.b16 %v1774
            %v1901 = vunpack.c.l.b16 %v1775
            %v1902 = vunpack.c.l.b16 %v1776
            %v1903 = vunpack.c.l.b16 %v1777
            %v1904 = vunpack.c.l.b16 %v1778
            %v1905 = vunpack.c.l.b16 %v1779
            %v1906 = vpack.c.b16 %v1859, %v1858
            %v1907 = vpack.c.b16 %v1861, %v1860
            %v1908 = vpack.c.b16 %v1863, %v1862
            %v1909 = vpack.c.b16 %v1865, %v1864
            %v1910 = vpack.c.b16 %v1867, %v1866
            %v1911 = vpack.c.b16 %v1869, %v1868
            %v1912 = vpack.c.b16 %v1871, %v1870
            %v1913 = vpack.c.b16 %v1873, %v1872
            %v1914 = vpack.c.b16 %v1875, %v1874
            %v1915 = vpack.c.b16 %v1877, %v1876
            %v1916 = vpack.c.b16 %v1879, %v1878
            %v1917 = vpack.c.b16 %v1881, %v1880
            %v1918 = vpack.c.b16 %v1883, %v1882
            %v1919 = vpack.c.b16 %v1885, %v1884
            %v1920 = vpack.c.b16 %v1887, %v1886
            %v1921 = vpack.c.b16 %v1889, %v1888
            %v1922 = vpack.c.b16 %v1891, %v1890
            %v1923 = vpack.c.b16 %v1893, %v1892
            %v1924 = vpack.c.b16 %v1895, %v1894
            %v1925 = vpack.c.b16 %v1897, %v1896
            %v1926 = vpack.c.b16 %v1899, %v1898
            %v1927 = vpack.c.b16 %v1901, %v1900
            %v1928 = vpack.c.b16 %v1903, %v1902
            %v1929 = vpack.c.b16 %v1905, %v1904
            %1954 = vmatprep.subr.bf16.mxu0 0
            %1955 = vmatpush1.bf16.msra.mxu0 %v1906
            %1956 = vmatprep.subr.bf16.mxu0 0
            %1957 = vmatpush1.bf16.msra.mxu0 %v1907
            %1958 = vmatprep.subr.bf16.mxu0 0
            %1959 = vmatpush1.bf16.msra.mxu0 %v1908
            %1960 = vmatprep.subr.bf16.mxu0 0
            %1961 = vmatpush1.bf16.msra.mxu0 %v1909
            %1962 = vmatprep.subr.bf16.mxu0 0
            %1963 = vmatpush1.bf16.msra.mxu0 %v1910
            %1964 = vmatprep.subr.bf16.mxu0 0
            %1965 = vmatpush1.bf16.msra.mxu0 %v1911
            %1966 = vmatprep.subr.bf16.mxu0 0
            %1967 = vmatpush1.bf16.msra.mxu0 %v1912
            %1968 = vmatprep.subr.bf16.mxu0 0
            %1969 = vmatpush1.bf16.msra.mxu0 %v1913
            %1970 = vmatprep.subr.bf16.mxu0 0
            %1971 = vmatpush1.bf16.msra.mxu0 %v1914
            %1972 = vmatprep.subr.bf16.mxu0 0
            %1973 = vmatpush1.bf16.msra.mxu0 %v1915
            %1974 = vmatprep.subr.bf16.mxu0 0
            %1975 = vmatpush1.bf16.msra.mxu0 %v1916
            %1976 = vmatprep.subr.bf16.mxu0 0
            %1977 = vmatpush1.bf16.msra.mxu0 %v1917
            %1978 = vmatprep.subr.bf16.mxu0 0
            %1979 = vmatpush1.bf16.msra.mxu0 %v1918
            %1980 = vmatprep.subr.bf16.mxu0 0
            %1981 = vmatpush1.bf16.msra.mxu0 %v1919
            %1982 = vmatprep.subr.bf16.mxu0 0
            %1983 = vmatpush1.bf16.msra.mxu0 %v1920
            %1984 = vmatprep.subr.bf16.mxu0 0
            %1985 = vmatpush1.bf16.msra.mxu0 %v1921
            %1986 = vmatprep.mubr.bf16.mxu0 %v1799
            %1987 = vmatmul.mubr.bf16.gmra.mrb[0].mxu0 %v1798
            %v1988 = vpop.f32.mrb[0].mxu0
            %v1989 = vadd.f32 0.0, %v1988
            %v1990 = vpop.f32.mrb[0].mxu0
            %v1991 = vpop.f32.mrb[0].mxu0
            %v1992 = vadd.f32 0.0, %v1991
            %v1993 = vpop.f32.mrb[0].mxu0
            %1994 = vmatprep.mubr.bf16.mxu0 %v1802
            %1995 = vmatmul.mubr.bf16.gmra.mrb[0].mxu0 %v1801
            %v1996 = vpop.f32.mrb[0].mxu0
            %v1997 = vadd.f32 0.0, %v1996
            %v1998 = vpop.f32.mrb[0].mxu0
            %v1999 = vpop.f32.mrb[0].mxu0
            %v2000 = vadd.f32 0.0, %v1999
            %v2001 = vpop.f32.mrb[0].mxu0
            %2002 = vmatprep.mubr.bf16.mxu0 %v1805
            %2003 = vmatmul.mubr.bf16.gmra.mrb[0].mxu0 %v1804
            %v2004 = vpop.f32.mrb[0].mxu0
            %v2005 = vadd.f32 0.0, %v2004
            %v2006 = vpop.f32.mrb[0].mxu0
            %v2007 = vpop.f32.mrb[0].mxu0
            %v2008 = vadd.f32 0.0, %v2007
            %v2009 = vpop.f32.mrb[0].mxu0
            %2010 = vmatprep.mubr.bf16.mxu0 %v1808
            %2011 = vmatmul.mubr.bf16.gmra.mrb[0].mxu0 %v1807
            %v2012 = vpop.f32.mrb[0].mxu0
            %v2013 = vadd.f32 0.0, %v2012
            %v2014 = vpop.f32.mrb[0].mxu0
            %v2015 = vpop.f32.mrb[0].mxu0
            %v2016 = vadd.f32 0.0, %v2015
            %v2017 = vpop.f32.mrb[0].mxu0
            %2018 = vdwg.mxu0
            %2019 = vmatprep.subr.bf16.mxu0 0
            %2020 = vmatpush1.bf16.msra.mxu0 %v1922
            %2021 = vmatprep.subr.bf16.mxu0 0
            %2022 = vmatpush1.bf16.msra.mxu0 %v1923
            %2023 = vmatprep.subr.bf16.mxu0 0
            %2024 = vmatpush1.bf16.msra.mxu0 %v1924
            %2025 = vmatprep.subr.bf16.mxu0 0
            %2026 = vmatpush1.bf16.msra.mxu0 %v1925
            %2027 = vmatprep.subr.bf16.mxu0 0
            %2028 = vmatpush1.bf16.msra.mxu0 %v1926
            %2029 = vmatprep.subr.bf16.mxu0 0
            %2030 = vmatpush1.bf16.msra.mxu0 %v1927
            %2031 = vmatprep.subr.bf16.mxu0 0
            %2032 = vmatpush1.bf16.msra.mxu0 %v1928
            %2033 = vmatprep.subr.bf16.mxu0 0
            %2034 = vmatpush1.bf16.msra.mxu0 %v1929
            %2035 = vmatprep.subr.bf16.mxu0 0
            %2036 = vmatpush1.bf16.msra.mxu0 0
            %2037 = vmatprep.subr.bf16.mxu0 0
            %2038 = vmatpush1.bf16.msra.mxu0 0
            %2039 = vmatprep.subr.bf16.mxu0 0
            %2040 = vmatpush1.bf16.msra.mxu0 0
            %2041 = vmatprep.subr.bf16.mxu0 0
            %2042 = vmatpush1.bf16.msra.mxu0 0
            %2043 = vmatprep.subr.bf16.mxu0 0
            %2044 = vmatpush1.bf16.msra.mxu0 0
            %2045 = vmatprep.subr.bf16.mxu0 0
            %2046 = vmatpush1.bf16.msra.mxu0 0
            %2047 = vmatprep.subr.bf16.mxu0 0
            %2048 = vmatpush1.bf16.msra.mxu0 0
            %2049 = vmatprep.subr.bf16.mxu0 0
            %2050 = vmatpush1.bf16.msra.mxu0 0
            %2051 = vmatprep.mubr.bf16.mxu0 0
            %2052 = vmatmul.mubr.bf16.gmra.mrb[0].mxu0 %v1800
            %v2053 = vpop.f32.mrb[0].mxu0
            %v2054 = vadd.f32 %v1989, %v2053
            %v2055 = vpop.f32.mrb[0].mxu0
            %v2056 = vpop.f32.mrb[0].mxu0
            %v2057 = vadd.f32 %v1992, %v2056
            %v2058 = vpop.f32.mrb[0].mxu0
            %2059 = vmatprep.mubr.bf16.mxu0 0
            %2060 = vmatmul.mubr.bf16.gmra.mrb[0].mxu0 %v1803
            %v2061 = vpop.f32.mrb[0].mxu0
            %v2062 = vadd.f32 %v1997, %v2061
            %v2063 = vpop.f32.mrb[0].mxu0
            %v2064 = vpop.f32.mrb[0].mxu0
            %v2065 = vadd.f32 %v2000, %v2064
            %v2066 = vpop.f32.mrb[0].mxu0
            %2067 = vmatprep.mubr.bf16.mxu0 0
            %2068 = vmatmul.mubr.bf16.gmra.mrb[0].mxu0 %v1806
            %v2069 = vpop.f32.mrb[0].mxu0
            %v2070 = vadd.f32 %v2005, %v2069
            %v2071 = vpop.f32.mrb[0].mxu0
            %v2072 = vpop.f32.mrb[0].mxu0
            %v2073 = vadd.f32 %v2008, %v2072
            %v2074 = vpop.f32.mrb[0].mxu0
            %2075 = vmatprep.mubr.bf16.mxu0 0
            %2076 = vmatmul.mubr.bf16.gmra.mrb[0].mxu0 %v1809
            %v2077 = vpop.f32.mrb[0].mxu0
            %v2078 = vadd.f32 %v2013, %v2077
            %v2079 = vpop.f32.mrb[0].mxu0
            %v2080 = vpop.f32.mrb[0].mxu0
            %v2081 = vadd.f32 %v2016, %v2080
            %v2082 = vpop.f32.mrb[0].mxu0
            %2083 = vdwg.mxu0
            %v2085 = vlaneseq
            %v2086 = vshrl.u32 %v2085, 7
            %v2087 = vsub.s32 0, %v2086
            %v2088 = vrot.slane %v1781, %v2087
            %v2090 = vadd.f32 %v2054, %v2088
            %v2091 = vadd.f32 %v2057, %v2088
            %v2092 = vadd.f32 %v2062, %v2088
            %v2093 = vadd.f32 %v2065, %v2088
            %v2094 = vadd.f32 %v2070, %v2088
            %v2095 = vadd.f32 %v2073, %v2088
            %v2096 = vadd.f32 %v2078, %v2088
            %v2097 = vadd.f32 %v2081, %v2088
            %s2098 = scalar_lea.vmem [#allocation13], 1
            %v2099 = vld [vmem:[%s2098] sm:$0x1]
            %s2100 = scalar_lea.vmem [#allocation15], 1
            %v2101 = vld [vmem:[%s2100] sm:$0x1]
            %2102 = vadd.xlane.f32.xlu0 %v2090
            %v2103 = vpop.xlane.xlu0 %2102
            %2104 = vadd.xlane.f32.xlu0 %v2091
            %v2105 = vpop.xlane.xlu0 %2104
            %2106 = vadd.xlane.f32.xlu0 %v2092
            %v2107 = vpop.xlane.xlu0 %2106
            %2108 = vadd.xlane.f32.xlu0 %v2093
            %v2109 = vpop.xlane.xlu0 %2108
            %2110 = vadd.xlane.f32.xlu0 %v2094
            %v2111 = vpop.xlane.xlu0 %2110
            %2112 = vadd.xlane.f32.xlu0 %v2095
            %v2113 = vpop.xlane.xlu0 %2112
            %2114 = vadd.xlane.f32.xlu0 %v2096
            %v2115 = vpop.xlane.xlu0 %2114
            %2116 = vadd.xlane.f32.xlu0 %v2097
            %v2117 = vpop.xlane.xlu0 %2116
            %v2118 = vmul.f32 %v2103, 0.03125
            %v2119 = vmul.f32 %v2105, 0.03125
            %v2120 = vmul.f32 %v2107, 0.03125
            %v2121 = vmul.f32 %v2109, 0.03125
            %v2122 = vmul.f32 %v2111, 0.03125
            %v2123 = vmul.f32 %v2113, 0.03125
            %v2124 = vmul.f32 %v2115, 0.03125
            %v2125 = vmul.f32 %v2117, 0.03125
            %v2126 = vmul.f32 %v2090, %v2090
            %v2127 = vmul.f32 %v2091, %v2091
            %v2128 = vmul.f32 %v2092, %v2092
            %v2129 = vmul.f32 %v2093, %v2093
            %v2130 = vmul.f32 %v2094, %v2094
            %v2131 = vmul.f32 %v2095, %v2095
            %v2132 = vmul.f32 %v2096, %v2096
            %v2133 = vmul.f32 %v2097, %v2097
            %2134 = vadd.xlane.f32.xlu0 %v2126
            %v2135 = vpop.xlane.xlu0 %2134
            %2136 = vadd.xlane.f32.xlu0 %v2127
            %v2137 = vpop.xlane.xlu0 %2136
            %2138 = vadd.xlane.f32.xlu0 %v2128
            %v2139 = vpop.xlane.xlu0 %2138
            %2140 = vadd.xlane.f32.xlu0 %v2129
            %v2141 = vpop.xlane.xlu0 %2140
            %2142 = vadd.xlane.f32.xlu0 %v2130
            %v2143 = vpop.xlane.xlu0 %2142
            %2144 = vadd.xlane.f32.xlu0 %v2131
            %v2145 = vpop.xlane.xlu0 %2144
            %2146 = vadd.xlane.f32.xlu0 %v2132
            %v2147 = vpop.xlane.xlu0 %2146
            %2148 = vadd.xlane.f32.xlu0 %v2133
            %v2149 = vpop.xlane.xlu0 %2148
            %v2150 = vmul.f32 %v2135, 0.03125
            %v2151 = vmul.f32 %v2137, 0.03125
            %v2152 = vmul.f32 %v2139, 0.03125
            %v2153 = vmul.f32 %v2141, 0.03125
            %v2154 = vmul.f32 %v2143, 0.03125
            %v2155 = vmul.f32 %v2145, 0.03125
            %v2156 = vmul.f32 %v2147, 0.03125
            %v2157 = vmul.f32 %v2149, 0.03125
            %v2158 = vmul.f32 %v2118, %v2118
            %v2159 = vmul.f32 %v2119, %v2119
            %v2160 = vmul.f32 %v2120, %v2120
            %v2161 = vmul.f32 %v2121, %v2121
            %v2162 = vmul.f32 %v2122, %v2122
            %v2163 = vmul.f32 %v2123, %v2123
            %v2164 = vmul.f32 %v2124, %v2124
            %v2165 = vmul.f32 %v2125, %v2125
            %v2166 = vsub.f32 %v2150, %v2158
            %v2167 = vsub.f32 %v2151, %v2159
            %v2168 = vsub.f32 %v2152, %v2160
            %v2169 = vsub.f32 %v2153, %v2161
            %v2170 = vsub.f32 %v2154, %v2162
            %v2171 = vsub.f32 %v2155, %v2163
            %v2172 = vsub.f32 %v2156, %v2164
            %v2173 = vsub.f32 %v2157, %v2165
            %v2174 = vsub.f32 %v2090, %v2118
            %v2175 = vsub.f32 %v2091, %v2119
            %v2176 = vsub.f32 %v2092, %v2120
            %v2177 = vsub.f32 %v2093, %v2121
            %v2178 = vsub.f32 %v2094, %v2122
            %v2179 = vsub.f32 %v2095, %v2123
            %v2180 = vsub.f32 %v2096, %v2124
            %v2181 = vsub.f32 %v2097, %v2125
            %v2182 = vadd.f32 %v2166, 1e-08
            %v2183 = vadd.f32 %v2167, 1e-08
            %v2184 = vadd.f32 %v2168, 1e-08
            %v2185 = vadd.f32 %v2169, 1e-08
            %v2186 = vadd.f32 %v2170, 1e-08
            %v2187 = vadd.f32 %v2171, 1e-08
            %v2188 = vadd.f32 %v2172, 1e-08
            %v2189 = vadd.f32 %v2173, 1e-08
            %v2190 = vrsqrt.pop %v2182
            %v2191 = vrsqrt.pop %v2183
            %v2192 = vrsqrt.pop %v2184
            %v2193 = vrsqrt.pop %v2185
            %v2194 = vrsqrt.pop %v2186
            %v2195 = vrsqrt.pop %v2187
            %v2196 = vrsqrt.pop %v2188
            %v2197 = vrsqrt.pop %v2189
            %v2198 = vmul.f32 %v2174, %v2190
            %v2199 = vmul.f32 %v2175, %v2191
            %v2200 = vmul.f32 %v2176, %v2192
            %v2201 = vmul.f32 %v2177, %v2193
            %v2202 = vmul.f32 %v2178, %v2194
            %v2203 = vmul.f32 %v2179, %v2195
            %v2204 = vmul.f32 %v2180, %v2196
            %v2205 = vmul.f32 %v2181, %v2197
            %v2207 = vlaneseq
            %v2208 = vshrl.u32 %v2207, 7
            %v2209 = vsub.s32 0, %v2208
            %v2210 = vrot.slane %v2099, %v2209
            %v2212 = vmul.f32 %v2198, %v2210
            %v2213 = vmul.f32 %v2199, %v2210
            %v2214 = vmul.f32 %v2200, %v2210
            %v2215 = vmul.f32 %v2201, %v2210
            %v2216 = vmul.f32 %v2202, %v2210
            %v2217 = vmul.f32 %v2203, %v2210
            %v2218 = vmul.f32 %v2204, %v2210
            %v2219 = vmul.f32 %v2205, %v2210
            %v2221 = vlaneseq
            %v2222 = vshrl.u32 %v2221, 7
            %v2223 = vsub.s32 0, %v2222
            %v2224 = vrot.slane %v2101, %v2223
            %v2226 = vadd.f32 %v2212, %v2224
            %v2227 = vadd.f32 %v2213, %v2224
            %v2228 = vadd.f32 %v2214, %v2224
            %v2229 = vadd.f32 %v2215, %v2224
            %v2230 = vadd.f32 %v2216, %v2224
            %v2231 = vadd.f32 %v2217, %v2224
            %v2232 = vadd.f32 %v2218, %v2224
            %v2233 = vadd.f32 %v2219, %v2224
            %v2234 = vmax.f32 %v2226, 0.0
            %v2235 = vmax.f32 %v2227, 0.0
            %v2236 = vmax.f32 %v2228, 0.0
            %v2237 = vmax.f32 %v2229, 0.0
            %v2238 = vmax.f32 %v2230, 0.0
            %v2239 = vmax.f32 %v2231, 0.0
            %v2240 = vmax.f32 %v2232, 0.0
            %v2241 = vmax.f32 %v2233, 0.0
            %2242 = vst [vmem:[#allocation2 + $0x8] sm:$0xff] %v2234
            %2243 = vst [vmem:[#allocation2 + $0x10] sm:$0xff] %v2235
            %2244 = vst [vmem:[#allocation2 + $0x20] sm:$0xff] %v2236
            %2245 = vst [vmem:[#allocation2 + $0x28] sm:$0xff] %v2237
            %2246 = vst [vmem:[#allocation2 + $0x38] sm:$0xff] %v2238
            %2247 = vst [vmem:[#allocation2 + $0x40] sm:$0xff] %v2239
            %2248 = vst [vmem:[#allocation2 + $0x50] sm:$0xff] %v2240
            %2249 = vst [vmem:[#allocation2 + $0x58] sm:$0xff] %v2241
            %s2250 = scalar_lea.vmem [#allocation16], 192
            %v2251 = vld [vmem:[%s2250] sm:$0xf]
            %v2252 = vld [vmem:[%s2250 + $0x4] sm:$0xf]
            %v2253 = vld [vmem:[%s2250 + $0x8] sm:$0xf]
            %v2254 = vld [vmem:[%s2250 + $0xc] sm:$0xf]
            %v2255 = vld [vmem:[%s2250 + $0x10] sm:$0xf]
            %v2256 = vld [vmem:[%s2250 + $0x14] sm:$0xf]
            %v2257 = vld [vmem:[%s2250 + $0x18] sm:$0xf]
            %v2258 = vld [vmem:[%s2250 + $0x1c] sm:$0xf]
            %v2259 = vld [vmem:[%s2250 + $0x20] sm:$0xf]
            %v2260 = vld [vmem:[%s2250 + $0x24] sm:$0xf]
            %v2261 = vld [vmem:[%s2250 + $0x28] sm:$0xf]
            %v2262 = vld [vmem:[%s2250 + $0x2c] sm:$0xf]
            %v2263 = vld [vmem:[%s2250 + $0x30] sm:$0xf]
            %v2264 = vld [vmem:[%s2250 + $0x34] sm:$0xf]
            %v2265 = vld [vmem:[%s2250 + $0x38] sm:$0xf]
            %v2266 = vld [vmem:[%s2250 + $0x3c] sm:$0xf]
            %v2267 = vld [vmem:[%s2250 + $0x40] sm:$0xf]
            %v2268 = vld [vmem:[%s2250 + $0x44] sm:$0xf]
            %v2269 = vld [vmem:[%s2250 + $0x48] sm:$0xf]
            %v2270 = vld [vmem:[%s2250 + $0x4c] sm:$0xf]
            %v2271 = vld [vmem:[%s2250 + $0x50] sm:$0xf]
            %v2272 = vld [vmem:[%s2250 + $0x54] sm:$0xf]
            %v2273 = vld [vmem:[%s2250 + $0x58] sm:$0xf]
            %v2274 = vld [vmem:[%s2250 + $0x5c] sm:$0xf]
            %v2275 = vld [vmem:[%s2250 + $0x60] sm:$0xf]
            %v2276 = vld [vmem:[%s2250 + $0x64] sm:$0xf]
            %v2277 = vld [vmem:[%s2250 + $0x68] sm:$0xf]
            %v2278 = vld [vmem:[%s2250 + $0x6c] sm:$0xf]
            %v2279 = vld [vmem:[%s2250 + $0x70] sm:$0xf]
            %v2280 = vld [vmem:[%s2250 + $0x74] sm:$0xf]
            %v2281 = vld [vmem:[%s2250 + $0x78] sm:$0xf]
            %v2282 = vld [vmem:[%s2250 + $0x7c] sm:$0xf]
            %v2283 = vld [vmem:[%s2250 + $0x80] sm:$0xf]
            %v2284 = vld [vmem:[%s2250 + $0x84] sm:$0xf]
            %v2285 = vld [vmem:[%s2250 + $0x88] sm:$0xf]
            %v2286 = vld [vmem:[%s2250 + $0x8c] sm:$0xf]
            %v2287 = vld [vmem:[%s2250 + $0x90] sm:$0xf]
            %v2288 = vld [vmem:[%s2250 + $0x94] sm:$0xf]
            %v2289 = vld [vmem:[%s2250 + $0x98] sm:$0xf]
            %v2290 = vld [vmem:[%s2250 + $0x9c] sm:$0xf]
            %v2291 = vld [vmem:[%s2250 + $0xa0] sm:$0xf]
            %v2292 = vld [vmem:[%s2250 + $0xa4] sm:$0xf]
            %v2293 = vld [vmem:[%s2250 + $0xa8] sm:$0xf]
            %v2294 = vld [vmem:[%s2250 + $0xac] sm:$0xf]
            %v2295 = vld [vmem:[%s2250 + $0xb0] sm:$0xf]
            %v2296 = vld [vmem:[%s2250 + $0xb4] sm:$0xf]
            %v2297 = vld [vmem:[%s2250 + $0xb8] sm:$0xf]
            %v2298 = vld [vmem:[%s2250 + $0xbc] sm:$0xf]
            %s2299 = scalar_lea.vmem [#allocation18], 1
            %v2300 = vld [vmem:[%s2299] sm:$0x1]
            %v2301 = vld [vmem:[#allocation2] sm:$0xff]
            %v2302 = vld [vmem:[#allocation2 + $0x8] sm:$0xff]
            %v2303 = vld [vmem:[#allocation2 + $0x18] sm:$0xff]
            %v2304 = vld [vmem:[#allocation2 + $0x20] sm:$0xff]
            %v2305 = vld [vmem:[#allocation2 + $0x30] sm:$0xff]
            %v2306 = vld [vmem:[#allocation2 + $0x38] sm:$0xff]
            %v2307 = vld [vmem:[#allocation2 + $0x48] sm:$0xff]
            %v2308 = vld [vmem:[#allocation2 + $0x50] sm:$0xff]
            %v2309 = vld [vmem:[#allocation2 + $0x4] sm:$0xff]
            %v2310 = vld [vmem:[#allocation2 + $0xc] sm:$0xff]
            %v2311 = vld [vmem:[#allocation2 + $0x1c] sm:$0xff]
            %v2312 = vld [vmem:[#allocation2 + $0x24] sm:$0xff]
            %v2313 = vld [vmem:[#allocation2 + $0x34] sm:$0xff]
            %v2314 = vld [vmem:[#allocation2 + $0x3c] sm:$0xff]
            %v2315 = vld [vmem:[#allocation2 + $0x4c] sm:$0xff]
            %v2316 = vld [vmem:[#allocation2 + $0x54] sm:$0xff]
            %v2317 = vld [vmem:[#allocation2 + $0x8] sm:$0xff]
            %v2318 = vld [vmem:[#allocation2 + $0x10] sm:$0xff]
            %v2319 = vld [vmem:[#allocation2 + $0x20] sm:$0xff]
            %v2320 = vld [vmem:[#allocation2 + $0x28] sm:$0xff]
            %v2321 = vld [vmem:[#allocation2 + $0x38] sm:$0xff]
            %v2322 = vld [vmem:[#allocation2 + $0x40] sm:$0xff]
            %v2323 = vld [vmem:[#allocation2 + $0x50] sm:$0xff]
            %v2324 = vld [vmem:[#allocation2 + $0x58] sm:$0xff]
            %v2325 = vpack.c.bf16 %v2302, %v2301
            %v2326 = vpack.c.bf16 %v2310, %v2309
            %v2327 = vpack.c.bf16 %v2318, %v2317
            %v2328 = vpack.c.bf16 %v2304, %v2303
            %v2329 = vpack.c.bf16 %v2312, %v2311
            %v2330 = vpack.c.bf16 %v2320, %v2319
            %v2331 = vpack.c.bf16 %v2306, %v2305
            %v2332 = vpack.c.bf16 %v2314, %v2313
            %v2333 = vpack.c.bf16 %v2322, %v2321
            %v2334 = vpack.c.bf16 %v2308, %v2307
            %v2335 = vpack.c.bf16 %v2316, %v2315
            %v2336 = vpack.c.bf16 %v2324, %v2323
            %v2385 = vunpack.c.l.b16 %v2251
            %v2386 = vunpack.c.l.b16 %v2252
            %v2387 = vunpack.c.l.b16 %v2253
            %v2388 = vunpack.c.l.b16 %v2254
            %v2389 = vunpack.c.l.b16 %v2255
            %v2390 = vunpack.c.l.b16 %v2256
            %v2391 = vunpack.c.l.b16 %v2257
            %v2392 = vunpack.c.l.b16 %v2258
            %v2393 = vunpack.c.l.b16 %v2259
            %v2394 = vunpack.c.l.b16 %v2260
            %v2395 = vunpack.c.l.b16 %v2261
            %v2396 = vunpack.c.l.b16 %v2262
            %v2397 = vunpack.c.l.b16 %v2263
            %v2398 = vunpack.c.l.b16 %v2264
            %v2399 = vunpack.c.l.b16 %v2265
            %v2400 = vunpack.c.l.b16 %v2266
            %v2401 = vunpack.c.l.b16 %v2267
            %v2402 = vunpack.c.l.b16 %v2268
            %v2403 = vunpack.c.l.b16 %v2269
            %v2404 = vunpack.c.l.b16 %v2270
            %v2405 = vunpack.c.l.b16 %v2271
            %v2406 = vunpack.c.l.b16 %v2272
            %v2407 = vunpack.c.l.b16 %v2273
            %v2408 = vunpack.c.l.b16 %v2274
            %v2409 = vunpack.c.l.b16 %v2275
            %v2410 = vunpack.c.l.b16 %v2276
            %v2411 = vunpack.c.l.b16 %v2277
            %v2412 = vunpack.c.l.b16 %v2278
            %v2413 = vunpack.c.l.b16 %v2279
            %v2414 = vunpack.c.l.b16 %v2280
            %v2415 = vunpack.c.l.b16 %v2281
            %v2416 = vunpack.c.l.b16 %v2282
            %v2417 = vunpack.c.l.b16 %v2283
            %v2418 = vunpack.c.l.b16 %v2284
            %v2419 = vunpack.c.l.b16 %v2285
            %v2420 = vunpack.c.l.b16 %v2286
            %v2421 = vunpack.c.l.b16 %v2287
            %v2422 = vunpack.c.l.b16 %v2288
            %v2423 = vunpack.c.l.b16 %v2289
            %v2424 = vunpack.c.l.b16 %v2290
            %v2425 = vunpack.c.l.b16 %v2291
            %v2426 = vunpack.c.l.b16 %v2292
            %v2427 = vunpack.c.l.b16 %v2293
            %v2428 = vunpack.c.l.b16 %v2294
            %v2429 = vunpack.c.l.b16 %v2295
            %v2430 = vunpack.c.l.b16 %v2296
            %v2431 = vunpack.c.l.b16 %v2297
            %v2432 = vunpack.c.l.b16 %v2298
            %v2433 = vpack.c.b16 %v2386, %v2385
            %v2434 = vpack.c.b16 %v2388, %v2387
            %v2435 = vpack.c.b16 %v2390, %v2389
            %v2436 = vpack.c.b16 %v2392, %v2391
            %v2437 = vpack.c.b16 %v2394, %v2393
            %v2438 = vpack.c.b16 %v2396, %v2395
            %v2439 = vpack.c.b16 %v2398, %v2397
            %v2440 = vpack.c.b16 %v2400, %v2399
            %v2441 = vpack.c.b16 %v2402, %v2401
            %v2442 = vpack.c.b16 %v2404, %v2403
            %v2443 = vpack.c.b16 %v2406, %v2405
            %v2444 = vpack.c.b16 %v2408, %v2407
            %v2445 = vpack.c.b16 %v2410, %v2409
            %v2446 = vpack.c.b16 %v2412, %v2411
            %v2447 = vpack.c.b16 %v2414, %v2413
            %v2448 = vpack.c.b16 %v2416, %v2415
            %v2449 = vpack.c.b16 %v2418, %v2417
            %v2450 = vpack.c.b16 %v2420, %v2419
            %v2451 = vpack.c.b16 %v2422, %v2421
            %v2452 = vpack.c.b16 %v2424, %v2423
            %v2453 = vpack.c.b16 %v2426, %v2425
            %v2454 = vpack.c.b16 %v2428, %v2427
            %v2455 = vpack.c.b16 %v2430, %v2429
            %v2456 = vpack.c.b16 %v2432, %v2431
            %2481 = vmatprep.subr.bf16.mxu0 0
            %2482 = vmatpush1.bf16.msra.mxu0 %v2433
            %2483 = vmatprep.subr.bf16.mxu0 0
            %2484 = vmatpush1.bf16.msra.mxu0 %v2434
            %2485 = vmatprep.subr.bf16.mxu0 0
            %2486 = vmatpush1.bf16.msra.mxu0 %v2435
            %2487 = vmatprep.subr.bf16.mxu0 0
            %2488 = vmatpush1.bf16.msra.mxu0 %v2436
            %2489 = vmatprep.subr.bf16.mxu0 0
            %2490 = vmatpush1.bf16.msra.mxu0 %v2437
            %2491 = vmatprep.subr.bf16.mxu0 0
            %2492 = vmatpush1.bf16.msra.mxu0 %v2438
            %2493 = vmatprep.subr.bf16.mxu0 0
            %2494 = vmatpush1.bf16.msra.mxu0 %v2439
            %2495 = vmatprep.subr.bf16.mxu0 0
            %2496 = vmatpush1.bf16.msra.mxu0 %v2440
            %2497 = vmatprep.subr.bf16.mxu0 0
            %2498 = vmatpush1.bf16.msra.mxu0 %v2441
            %2499 = vmatprep.subr.bf16.mxu0 0
            %2500 = vmatpush1.bf16.msra.mxu0 %v2442
            %2501 = vmatprep.subr.bf16.mxu0 0
            %2502 = vmatpush1.bf16.msra.mxu0 %v2443
            %2503 = vmatprep.subr.bf16.mxu0 0
            %2504 = vmatpush1.bf16.msra.mxu0 %v2444
            %2505 = vmatprep.subr.bf16.mxu0 0
            %2506 = vmatpush1.bf16.msra.mxu0 %v2445
            %2507 = vmatprep.subr.bf16.mxu0 0
            %2508 = vmatpush1.bf16.msra.mxu0 %v2446
            %2509 = vmatprep.subr.bf16.mxu0 0
            %2510 = vmatpush1.bf16.msra.mxu0 %v2447
            %2511 = vmatprep.subr.bf16.mxu0 0
            %2512 = vmatpush1.bf16.msra.mxu0 %v2448
            %2513 = vmatprep.mubr.bf16.mxu0 %v2326
            %2514 = vmatmul.mubr.bf16.gmra.mrb[0].mxu0 %v2325
            %v2515 = vpop.f32.mrb[0].mxu0
            %v2516 = vadd.f32 0.0, %v2515
            %v2517 = vpop.f32.mrb[0].mxu0
            %v2518 = vpop.f32.mrb[0].mxu0
            %v2519 = vadd.f32 0.0, %v2518
            %v2520 = vpop.f32.mrb[0].mxu0
            %2521 = vmatprep.mubr.bf16.mxu0 %v2329
            %2522 = vmatmul.mubr.bf16.gmra.mrb[0].mxu0 %v2328
            %v2523 = vpop.f32.mrb[0].mxu0
            %v2524 = vadd.f32 0.0, %v2523
            %v2525 = vpop.f32.mrb[0].mxu0
            %v2526 = vpop.f32.mrb[0].mxu0
            %v2527 = vadd.f32 0.0, %v2526
            %v2528 = vpop.f32.mrb[0].mxu0
            %2529 = vmatprep.mubr.bf16.mxu0 %v2332
            %2530 = vmatmul.mubr.bf16.gmra.mrb[0].mxu0 %v2331
            %v2531 = vpop.f32.mrb[0].mxu0
            %v2532 = vadd.f32 0.0, %v2531
            %v2533 = vpop.f32.mrb[0].mxu0
            %v2534 = vpop.f32.mrb[0].mxu0
            %v2535 = vadd.f32 0.0, %v2534
            %v2536 = vpop.f32.mrb[0].mxu0
            %2537 = vmatprep.mubr.bf16.mxu0 %v2335
            %2538 = vmatmul.mubr.bf16.gmra.mrb[0].mxu0 %v2334
            %v2539 = vpop.f32.mrb[0].mxu0
            %v2540 = vadd.f32 0.0, %v2539
            %v2541 = vpop.f32.mrb[0].mxu0
            %v2542 = vpop.f32.mrb[0].mxu0
            %v2543 = vadd.f32 0.0, %v2542
            %v2544 = vpop.f32.mrb[0].mxu0
            %2545 = vdwg.mxu0
            %2546 = vmatprep.subr.bf16.mxu0 0
            %2547 = vmatpush1.bf16.msra.mxu0 %v2449
            %2548 = vmatprep.subr.bf16.mxu0 0
            %2549 = vmatpush1.bf16.msra.mxu0 %v2450
            %2550 = vmatprep.subr.bf16.mxu0 0
            %2551 = vmatpush1.bf16.msra.mxu0 %v2451
            %2552 = vmatprep.subr.bf16.mxu0 0
            %2553 = vmatpush1.bf16.msra.mxu0 %v2452
            %2554 = vmatprep.subr.bf16.mxu0 0
            %2555 = vmatpush1.bf16.msra.mxu0 %v2453
            %2556 = vmatprep.subr.bf16.mxu0 0
            %2557 = vmatpush1.bf16.msra.mxu0 %v2454
            %2558 = vmatprep.subr.bf16.mxu0 0
            %2559 = vmatpush1.bf16.msra.mxu0 %v2455
            %2560 = vmatprep.subr.bf16.mxu0 0
            %2561 = vmatpush1.bf16.msra.mxu0 %v2456
            %2562 = vmatprep.subr.bf16.mxu0 0
            %2563 = vmatpush1.bf16.msra.mxu0 0
            %2564 = vmatprep.subr.bf16.mxu0 0
            %2565 = vmatpush1.bf16.msra.mxu0 0
            %2566 = vmatprep.subr.bf16.mxu0 0
            %2567 = vmatpush1.bf16.msra.mxu0 0
            %2568 = vmatprep.subr.bf16.mxu0 0
            %2569 = vmatpush1.bf16.msra.mxu0 0
            %2570 = vmatprep.subr.bf16.mxu0 0
            %2571 = vmatpush1.bf16.msra.mxu0 0
            %2572 = vmatprep.subr.bf16.mxu0 0
            %2573 = vmatpush1.bf16.msra.mxu0 0
            %2574 = vmatprep.subr.bf16.mxu0 0
            %2575 = vmatpush1.bf16.msra.mxu0 0
            %2576 = vmatprep.subr.bf16.mxu0 0
            %2577 = vmatpush1.bf16.msra.mxu0 0
            %2578 = vmatprep.mubr.bf16.mxu0 0
            %2579 = vmatmul.mubr.bf16.gmra.mrb[0].mxu0 %v2327
            %v2580 = vpop.f32.mrb[0].mxu0
            %v2581 = vadd.f32 %v2516, %v2580
            %v2582 = vpop.f32.mrb[0].mxu0
            %v2583 = vpop.f32.mrb[0].mxu0
            %v2584 = vadd.f32 %v2519, %v2583
            %v2585 = vpop.f32.mrb[0].mxu0
            %2586 = vmatprep.mubr.bf16.mxu0 0
            %2587 = vmatmul.mubr.bf16.gmra.mrb[0].mxu0 %v2330
            %v2588 = vpop.f32.mrb[0].mxu0
            %v2589 = vadd.f32 %v2524, %v2588
            %v2590 = vpop.f32.mrb[0].mxu0
            %v2591 = vpop.f32.mrb[0].mxu0
            %v2592 = vadd.f32 %v2527, %v2591
            %v2593 = vpop.f32.mrb[0].mxu0
            %2594 = vmatprep.mubr.bf16.mxu0 0
            %2595 = vmatmul.mubr.bf16.gmra.mrb[0].mxu0 %v2333
            %v2596 = vpop.f32.mrb[0].mxu0
            %v2597 = vadd.f32 %v2532, %v2596
            %v2598 = vpop.f32.mrb[0].mxu0
            %v2599 = vpop.f32.mrb[0].mxu0
            %v2600 = vadd.f32 %v2535, %v2599
            %v2601 = vpop.f32.mrb[0].mxu0
            %2602 = vmatprep.mubr.bf16.mxu0 0
            %2603 = vmatmul.mubr.bf16.gmra.mrb[0].mxu0 %v2336
            %v2604 = vpop.f32.mrb[0].mxu0
            %v2605 = vadd.f32 %v2540, %v2604
            %v2606 = vpop.f32.mrb[0].mxu0
            %v2607 = vpop.f32.mrb[0].mxu0
            %v2608 = vadd.f32 %v2543, %v2607
            %v2609 = vpop.f32.mrb[0].mxu0
            %2610 = vdwg.mxu0
            %v2612 = vlaneseq
            %v2613 = vshrl.u32 %v2612, 7
            %v2614 = vsub.s32 0, %v2613
            %v2615 = vrot.slane %v2300, %v2614
            %v2617 = vadd.f32 %v2581, %v2615
            %v2618 = vadd.f32 %v2584, %v2615
            %v2619 = vadd.f32 %v2589, %v2615
            %v2620 = vadd.f32 %v2592, %v2615
            %v2621 = vadd.f32 %v2597, %v2615
            %v2622 = vadd.f32 %v2600, %v2615
            %v2623 = vadd.f32 %v2605, %v2615
            %v2624 = vadd.f32 %v2608, %v2615
            %s2625 = scalar_lea.vmem [#allocation19], 1
            %v2626 = vld [vmem:[%s2625] sm:$0x1]
            %s2627 = scalar_lea.vmem [#allocation21], 1
            %v2628 = vld [vmem:[%s2627] sm:$0x1]
            %2629 = vadd.xlane.f32.xlu0 %v2617
            %v2630 = vpop.xlane.xlu0 %2629
            %2631 = vadd.xlane.f32.xlu0 %v2618
            %v2632 = vpop.xlane.xlu0 %2631
            %2633 = vadd.xlane.f32.xlu0 %v2619
            %v2634 = vpop.xlane.xlu0 %2633
            %2635 = vadd.xlane.f32.xlu0 %v2620
            %v2636 = vpop.xlane.xlu0 %2635
            %2637 = vadd.xlane.f32.xlu0 %v2621
            %v2638 = vpop.xlane.xlu0 %2637
            %2639 = vadd.xlane.f32.xlu0 %v2622
            %v2640 = vpop.xlane.xlu0 %2639
            %2641 = vadd.xlane.f32.xlu0 %v2623
            %v2642 = vpop.xlane.xlu0 %2641
            %2643 = vadd.xlane.f32.xlu0 %v2624
            %v2644 = vpop.xlane.xlu0 %2643
            %v2645 = vmul.f32 %v2630, 0.03125
            %v2646 = vmul.f32 %v2632, 0.03125
            %v2647 = vmul.f32 %v2634, 0.03125
            %v2648 = vmul.f32 %v2636, 0.03125
            %v2649 = vmul.f32 %v2638, 0.03125
            %v2650 = vmul.f32 %v2640, 0.03125
            %v2651 = vmul.f32 %v2642, 0.03125
            %v2652 = vmul.f32 %v2644, 0.03125
            %v2653 = vmul.f32 %v2617, %v2617
            %v2654 = vmul.f32 %v2618, %v2618
            %v2655 = vmul.f32 %v2619, %v2619
            %v2656 = vmul.f32 %v2620, %v2620
            %v2657 = vmul.f32 %v2621, %v2621
            %v2658 = vmul.f32 %v2622, %v2622
            %v2659 = vmul.f32 %v2623, %v2623
            %v2660 = vmul.f32 %v2624, %v2624
            %2661 = vadd.xlane.f32.xlu0 %v2653
            %v2662 = vpop.xlane.xlu0 %2661
            %2663 = vadd.xlane.f32.xlu0 %v2654
            %v2664 = vpop.xlane.xlu0 %2663
            %2665 = vadd.xlane.f32.xlu0 %v2655
            %v2666 = vpop.xlane.xlu0 %2665
            %2667 = vadd.xlane.f32.xlu0 %v2656
            %v2668 = vpop.xlane.xlu0 %2667
            %2669 = vadd.xlane.f32.xlu0 %v2657
            %v2670 = vpop.xlane.xlu0 %2669
            %2671 = vadd.xlane.f32.xlu0 %v2658
            %v2672 = vpop.xlane.xlu0 %2671
            %2673 = vadd.xlane.f32.xlu0 %v2659
            %v2674 = vpop.xlane.xlu0 %2673
            %2675 = vadd.xlane.f32.xlu0 %v2660
            %v2676 = vpop.xlane.xlu0 %2675
            %v2677 = vmul.f32 %v2662, 0.03125
            %v2678 = vmul.f32 %v2664, 0.03125
            %v2679 = vmul.f32 %v2666, 0.03125
            %v2680 = vmul.f32 %v2668, 0.03125
            %v2681 = vmul.f32 %v2670, 0.03125
            %v2682 = vmul.f32 %v2672, 0.03125
            %v2683 = vmul.f32 %v2674, 0.03125
            %v2684 = vmul.f32 %v2676, 0.03125
            %v2685 = vmul.f32 %v2645, %v2645
            %v2686 = vmul.f32 %v2646, %v2646
            %v2687 = vmul.f32 %v2647, %v2647
            %v2688 = vmul.f32 %v2648, %v2648
            %v2689 = vmul.f32 %v2649, %v2649
            %v2690 = vmul.f32 %v2650, %v2650
            %v2691 = vmul.f32 %v2651, %v2651
            %v2692 = vmul.f32 %v2652, %v2652
            %v2693 = vsub.f32 %v2677, %v2685
            %v2694 = vsub.f32 %v2678, %v2686
            %v2695 = vsub.f32 %v2679, %v2687
            %v2696 = vsub.f32 %v2680, %v2688
            %v2697 = vsub.f32 %v2681, %v2689
            %v2698 = vsub.f32 %v2682, %v2690
            %v2699 = vsub.f32 %v2683, %v2691
            %v2700 = vsub.f32 %v2684, %v2692
            %v2701 = vsub.f32 %v2617, %v2645
            %v2702 = vsub.f32 %v2618, %v2646
            %v2703 = vsub.f32 %v2619, %v2647
            %v2704 = vsub.f32 %v2620, %v2648
            %v2705 = vsub.f32 %v2621, %v2649
            %v2706 = vsub.f32 %v2622, %v2650
            %v2707 = vsub.f32 %v2623, %v2651
            %v2708 = vsub.f32 %v2624, %v2652
            %v2709 = vadd.f32 %v2693, 1e-08
            %v2710 = vadd.f32 %v2694, 1e-08
            %v2711 = vadd.f32 %v2695, 1e-08
            %v2712 = vadd.f32 %v2696, 1e-08
            %v2713 = vadd.f32 %v2697, 1e-08
            %v2714 = vadd.f32 %v2698, 1e-08
            %v2715 = vadd.f32 %v2699, 1e-08
            %v2716 = vadd.f32 %v2700, 1e-08
            %v2717 = vrsqrt.pop %v2709
            %v2718 = vrsqrt.pop %v2710
            %v2719 = vrsqrt.pop %v2711
            %v2720 = vrsqrt.pop %v2712
            %v2721 = vrsqrt.pop %v2713
            %v2722 = vrsqrt.pop %v2714
            %v2723 = vrsqrt.pop %v2715
            %v2724 = vrsqrt.pop %v2716
            %v2725 = vmul.f32 %v2701, %v2717
            %v2726 = vmul.f32 %v2702, %v2718
            %v2727 = vmul.f32 %v2703, %v2719
            %v2728 = vmul.f32 %v2704, %v2720
            %v2729 = vmul.f32 %v2705, %v2721
            %v2730 = vmul.f32 %v2706, %v2722
            %v2731 = vmul.f32 %v2707, %v2723
            %v2732 = vmul.f32 %v2708, %v2724
            %v2734 = vlaneseq
            %v2735 = vshrl.u32 %v2734, 7
            %v2736 = vsub.s32 0, %v2735
            %v2737 = vrot.slane %v2626, %v2736
            %v2739 = vmul.f32 %v2725, %v2737
            %v2740 = vmul.f32 %v2726, %v2737
            %v2741 = vmul.f32 %v2727, %v2737
            %v2742 = vmul.f32 %v2728, %v2737
            %v2743 = vmul.f32 %v2729, %v2737
            %v2744 = vmul.f32 %v2730, %v2737
            %v2745 = vmul.f32 %v2731, %v2737
            %v2746 = vmul.f32 %v2732, %v2737
            %v2748 = vlaneseq
            %v2749 = vshrl.u32 %v2748, 7
            %v2750 = vsub.s32 0, %v2749
            %v2751 = vrot.slane %v2628, %v2750
            %v2753 = vadd.f32 %v2739, %v2751
            %v2754 = vadd.f32 %v2740, %v2751
            %v2755 = vadd.f32 %v2741, %v2751
            %v2756 = vadd.f32 %v2742, %v2751
            %v2757 = vadd.f32 %v2743, %v2751
            %v2758 = vadd.f32 %v2744, %v2751
            %v2759 = vadd.f32 %v2745, %v2751
            %v2760 = vadd.f32 %v2746, %v2751
            %v2761 = vmax.f32 %v2753, 0.0
            %v2762 = vmax.f32 %v2754, 0.0
            %v2763 = vmax.f32 %v2755, 0.0
            %v2764 = vmax.f32 %v2756, 0.0
            %v2765 = vmax.f32 %v2757, 0.0
            %v2766 = vmax.f32 %v2758, 0.0
            %v2767 = vmax.f32 %v2759, 0.0
            %v2768 = vmax.f32 %v2760, 0.0
            %s2769 = sld [smem:[#allocation6 + $0x1]]
            %s2770 = sld [smem:[#allocation5 + %s1708]]
            %s2771 = smul.f32 %s2770, %s2769
            %v2772 = vstv %s2771
            %v2773 = vmul.f32 %v2772, %v2761
            %v2774 = vmul.f32 %v2772, %v2762
            %v2775 = vadd.f32 %v1723, %v2773
            %v2776 = vadd.f32 %v1724, %v2774
            %2777 = vst [vmem:[#allocation2 + $0x8] sm:$0xff] %v2775
            %2778 = vst [vmem:[#allocation2 + $0x10] sm:$0xff] %v2776
            %s2779 = sld [smem:[#allocation5 + %s1710]]
            %s2780 = smul.f32 %s2779, %s2769
            %v2781 = vstv %s2780
            %v2782 = vmul.f32 %v2781, %v2763
            %v2783 = vmul.f32 %v2781, %v2764
            %v2784 = vadd.f32 %v1725, %v2782
            %v2785 = vadd.f32 %v1726, %v2783
            %s2786 = scalar_lea.vmem [#allocation2], 24
            %2787 = vst [vmem:[%s2786 + $0x8] sm:$0xff] %v2784
            %2788 = vst [vmem:[%s2786 + $0x10] sm:$0xff] %v2785
            %s2789 = sld [smem:[#allocation5 + %s1713]]
            %s2790 = smul.f32 %s2789, %s2769
            %v2791 = vstv %s2790
            %v2792 = vmul.f32 %v2791, %v2765
            %v2793 = vmul.f32 %v2791, %v2766
            %v2794 = vadd.f32 %v1727, %v2792
            %v2795 = vadd.f32 %v1728, %v2793
            %s2796 = scalar_lea.vmem [#allocation2], 48
            %2797 = vst [vmem:[%s2796 + $0x8] sm:$0xff] %v2794
            %2798 = vst [vmem:[%s2796 + $0x10] sm:$0xff] %v2795
            %s2799 = sld [smem:[#allocation5 + %s1716]]
            %s2800 = smul.f32 %s2799, %s2769
            %v2801 = vstv %s2800
            %v2802 = vmul.f32 %v2801, %v2767
            %v2803 = vmul.f32 %v2801, %v2768
            %v2804 = vadd.f32 %v1729, %v2802
            %v2805 = vadd.f32 %v1730, %v2803
            %s2806 = scalar_lea.vmem [#allocation2], 72
            %2807 = vst [vmem:[%s2806 + $0x8] sm:$0xff] %v2804
            %2808 = vst [vmem:[%s2806 + $0x10] sm:$0xff] %v2805
          $region112: #{tpu_custom_call.1} parent=103 // pred_fallthru
            _
        $region104: #{tpu_custom_call.1} parent=63 // pred_fallthru
          _
        %v2809 = vld [vmem:[#allocation2 + $0x8] sm:$0xff]
        %v2810 = vld [vmem:[#allocation2 + $0x10] sm:$0xff]
        %v2811 = vld [vmem:[#allocation2 + $0x20] sm:$0xff]
        %v2812 = vld [vmem:[#allocation2 + $0x28] sm:$0xff]
        %v2813 = vld [vmem:[#allocation2 + $0x38] sm:$0xff]
        %v2814 = vld [vmem:[#allocation2 + $0x40] sm:$0xff]
        %v2815 = vld [vmem:[#allocation2 + $0x50] sm:$0xff]
        %v2816 = vld [vmem:[#allocation2 + $0x58] sm:$0xff]
        %v2817 = vpack.c.bf16 %v2810, %v2809
        %v2818 = vpack.c.bf16 %v2812, %v2811
        %v2819 = vpack.c.bf16 %v2814, %v2813
        %v2820 = vpack.c.bf16 %v2816, %v2815
        %v2821 = vld [vmem:[%s581] sm:$0xf]
        %v2822 = vld [vmem:[%s581 + $0x4] sm:$0xf]
        %v2823 = vld [vmem:[%s581 + $0x8] sm:$0xf]
        %v2824 = vld [vmem:[%s581 + $0xc] sm:$0xf]
        %v2825 = vld [vmem:[%s581 + $0x10] sm:$0xf]
        %v2826 = vld [vmem:[%s581 + $0x14] sm:$0xf]
        %v2827 = vld [vmem:[%s581 + $0x18] sm:$0xf]
        %v2828 = vld [vmem:[%s581 + $0x1c] sm:$0xf]
        %v2829 = vld [vmem:[%s581 + $0x20] sm:$0xf]
        %v2830 = vld [vmem:[%s581 + $0x24] sm:$0xf]
        %v2831 = vld [vmem:[%s581 + $0x28] sm:$0xf]
        %v2832 = vld [vmem:[%s581 + $0x2c] sm:$0xf]
        %v2833 = vld [vmem:[%s581 + $0x30] sm:$0xf]
        %v2834 = vld [vmem:[%s581 + $0x34] sm:$0xf]
        %v2835 = vld [vmem:[%s581 + $0x38] sm:$0xf]
        %v2836 = vld [vmem:[%s581 + $0x3c] sm:$0xf]
        %v2837 = vld [vmem:[%s584] sm:$0x1]
        %v2839 = vlaneseq
        %v2840 = vshrl.u32 %v2839, 7
        %v2841 = vsub.s32 0, %v2840
        %v2842 = vrot.slane %v2837, %v2841
        %v2860 = vunpack.c.l.b16 %v2821
        %v2861 = vunpack.c.l.b16 %v2822
        %v2862 = vunpack.c.l.b16 %v2823
        %v2863 = vunpack.c.l.b16 %v2824
        %v2864 = vunpack.c.l.b16 %v2825
        %v2865 = vunpack.c.l.b16 %v2826
        %v2866 = vunpack.c.l.b16 %v2827
        %v2867 = vunpack.c.l.b16 %v2828
        %v2868 = vunpack.c.l.b16 %v2829
        %v2869 = vunpack.c.l.b16 %v2830
        %v2870 = vunpack.c.l.b16 %v2831
        %v2871 = vunpack.c.l.b16 %v2832
        %v2872 = vunpack.c.l.b16 %v2833
        %v2873 = vunpack.c.l.b16 %v2834
        %v2874 = vunpack.c.l.b16 %v2835
        %v2875 = vunpack.c.l.b16 %v2836
        %v2876 = vpack.c.b16 %v2861, %v2860
        %v2877 = vpack.c.b16 %v2863, %v2862
        %v2878 = vpack.c.b16 %v2865, %v2864
        %v2879 = vpack.c.b16 %v2867, %v2866
        %v2880 = vpack.c.b16 %v2869, %v2868
        %v2881 = vpack.c.b16 %v2871, %v2870
        %v2882 = vpack.c.b16 %v2873, %v2872
        %v2883 = vpack.c.b16 %v2875, %v2874
        %2892 = vmatprep.subr.bf16.mxu0 0
        %2893 = vmatpush1.bf16.msra.mxu0 %v2876
        %2894 = vmatprep.subr.bf16.mxu0 0
        %2895 = vmatpush1.bf16.msra.mxu0 %v2877
        %2896 = vmatprep.subr.bf16.mxu0 0
        %2897 = vmatpush1.bf16.msra.mxu0 %v2878
        %2898 = vmatprep.subr.bf16.mxu0 0
        %2899 = vmatpush1.bf16.msra.mxu0 %v2879
        %2900 = vmatprep.subr.bf16.mxu0 0
        %2901 = vmatpush1.bf16.msra.mxu0 %v2880
        %2902 = vmatprep.subr.bf16.mxu0 0
        %2903 = vmatpush1.bf16.msra.mxu0 %v2881
        %2904 = vmatprep.subr.bf16.mxu0 0
        %2905 = vmatpush1.bf16.msra.mxu0 %v2882
        %2906 = vmatprep.subr.bf16.mxu0 0
        %2907 = vmatpush1.bf16.msra.mxu0 %v2883
        %2908 = vmatprep.subr.bf16.mxu0 0
        %2909 = vmatpush1.bf16.msra.mxu0 0
        %2910 = vmatprep.subr.bf16.mxu0 0
        %2911 = vmatpush1.bf16.msra.mxu0 0
        %2912 = vmatprep.subr.bf16.mxu0 0
        %2913 = vmatpush1.bf16.msra.mxu0 0
        %2914 = vmatprep.subr.bf16.mxu0 0
        %2915 = vmatpush1.bf16.msra.mxu0 0
        %2916 = vmatprep.subr.bf16.mxu0 0
        %2917 = vmatpush1.bf16.msra.mxu0 0
        %2918 = vmatprep.subr.bf16.mxu0 0
        %2919 = vmatpush1.bf16.msra.mxu0 0
        %2920 = vmatprep.subr.bf16.mxu0 0
        %2921 = vmatpush1.bf16.msra.mxu0 0
        %2922 = vmatprep.subr.bf16.mxu0 0
        %2923 = vmatpush1.bf16.msra.mxu0 0
        %2924 = vmatprep.mubr.bf16.mxu0 0
        %2925 = vmatmul.mubr.bf16.gmra.mrb[0].mxu0 %v2817
        %v2926 = vpop.f32.mrb[0].mxu0
        %v2927 = vadd.f32 %v2842, %v2926
        %v2928 = vpop.f32.mrb[0].mxu0
        %v2929 = vpop.f32.mrb[0].mxu0
        %v2930 = vadd.f32 %v2842, %v2929
        %v2931 = vpop.f32.mrb[0].mxu0
        %2932 = vmatprep.mubr.bf16.mxu0 0
        %2933 = vmatmul.mubr.bf16.gmra.mrb[0].mxu0 %v2818
        %v2934 = vpop.f32.mrb[0].mxu0
        %v2935 = vadd.f32 %v2842, %v2934
        %v2936 = vpop.f32.mrb[0].mxu0
        %v2937 = vpop.f32.mrb[0].mxu0
        %v2938 = vadd.f32 %v2842, %v2937
        %v2939 = vpop.f32.mrb[0].mxu0
        %2940 = vmatprep.mubr.bf16.mxu0 0
        %2941 = vmatmul.mubr.bf16.gmra.mrb[0].mxu0 %v2819
        %v2942 = vpop.f32.mrb[0].mxu0
        %v2943 = vadd.f32 %v2842, %v2942
        %v2944 = vpop.f32.mrb[0].mxu0
        %v2945 = vpop.f32.mrb[0].mxu0
        %v2946 = vadd.f32 %v2842, %v2945
        %v2947 = vpop.f32.mrb[0].mxu0
        %2948 = vmatprep.mubr.bf16.mxu0 0
        %2949 = vmatmul.mubr.bf16.gmra.mrb[0].mxu0 %v2820
        %v2950 = vpop.f32.mrb[0].mxu0
        %v2951 = vadd.f32 %v2842, %v2950
        %v2952 = vpop.f32.mrb[0].mxu0
        %v2953 = vpop.f32.mrb[0].mxu0
        %v2954 = vadd.f32 %v2842, %v2953
        %v2955 = vpop.f32.mrb[0].mxu0
        %2956 = vdwg.mxu0
        %2957 = vst [vmem:[%s576] sm:$0xff] %v2927
        %2958 = vst [vmem:[%s576 + $0x8] sm:$0xff] %v2930
        %2959 = vst [vmem:[%s576 + $0x10] sm:$0xff] %v2935
        %2960 = vst [vmem:[%s576 + $0x18] sm:$0xff] %v2938
        %2961 = vst [vmem:[%s576 + $0x20] sm:$0xff] %v2943
        %2962 = vst [vmem:[%s576 + $0x28] sm:$0xff] %v2946
        %2963 = vst [vmem:[%s576 + $0x30] sm:$0xff] %v2951
        %2964 = vst [vmem:[%s576 + $0x38] sm:$0xff] %v2954
        %s2965 = sand.u32 %s317, 1
        %s2966 = scalar_lea.sflag [#allocation9], %s2965
        %s2967 = sand.u32 %s317, 1
        %s2968 = smul.addr %s2967, 64
        %s2969 = scalar_lea.vmem [#allocation22], %s2968
        // Predicated region
        $region113: #{tpu_custom_call.1} parent=63 // pred_check
          %p2970 = pneg %p327
        $region114: #{tpu_custom_call.1} parent=63 // pred_check_branch
          %2972 = sbr.rel (%p2970) target = $region116
        $region115: #{tpu_custom_call.1} parent=63 // pred_region
          %s2973 = smul.u32 4, %s53
          %s2975 = ssub.s32 1024, 1024
          %2976 = vsyncadd %s2966, %s2975
          %s2977 = smul.addr %s2973, 2
          %s2978 = sadd.s32 %s54, %s2977
          %s2979 = smul.addr %s2978, 128
          %s2980 = scalar_lea.hbm %s14, %s2979
          %s2981 = sshll.u32 %s2969, 4
          %s2982 = int_to_ptr.vmem [resolvable:$true] %s2981
          %2987 = dma.vmem_to_hbm [thread:$0]  %s2982, 1024, %s2980, %s2966, 128, 128, 8
        $region116: #{tpu_custom_call.1} parent=63 // pred_fallthru
          _
      $region64: #{tpu_custom_call.1} parent=5 // pred_fallthru
        _
      %p2988 = scmp.le.s32.totalorder 2, %s44
      // Predicated region
      $region117: #{tpu_custom_call.1} parent=5 // pred_check
        %p2989 = pneg %p2988
      $region118: #{tpu_custom_call.1} parent=5 // pred_check_branch
        %2991 = sbr.rel (%p2989) target = $region120
      $region119: #{tpu_custom_call.1} parent=5 // pred_region
        %s2992 = ssub.s32 %s44, 2
        // Predicated region
        $region121: #{tpu_custom_call.1} parent=119 // pred_check
          %p2993 = pneg %p333
        $region122: #{tpu_custom_call.1} parent=119 // pred_check_branch
          %2995 = sbr.rel (%p2993) target = $region124
        $region123: #{tpu_custom_call.1} parent=119 // pred_region
          %s2996 = sand.u32 %s318, 1
          %s2997 = scalar_lea.sflag [#allocation9], %s2996
          %s2998 = sand.u32 %s318, 1
          %s2999 = smul.addr %s2998, 64
          %s3000 = scalar_lea.vmem [#allocation22], %s2999
          %3001 = dma.done %s2997, 1024
        $region124: #{tpu_custom_call.1} parent=119 // pred_fallthru
          _
      $region120: #{tpu_custom_call.1} parent=5 // pred_fallthru
        _
    $region6: #{tpu_custom_call.1} parent=1 // loop_footer
      %s48 = sadd.s32 1, %s44
    $region7: #{tpu_custom_call.1} parent=1 // loop_footer_branch
      %43 = sbr.rel target = $region3
    $region8: #{tpu_custom_call.1} parent=1 // loop_exit
      _
    %3002 = vsyncpa [#allocation8], 1
    %s3003 = scalar_lea.sflag [#allocation8], 1
    %3004 = vsyncpa %s3003, 1
    %3005 = vsyncpa [#allocation11], 1
    %3006 = vsyncpa [#allocation14], 1
    %3007 = vsyncpa [#allocation17], 1
    %3008 = vsyncpa [#allocation20], 1
    %3009 = vsyncpa [#allocation9], 1
    %s3010 = scalar_lea.sflag [#allocation9], 1
    %3011 = vsyncpa %s3010, 1

</llo_original>
